<compile_context>
chip_gen: v7x
topology: tpu7x:2x2x1
jax: 0.10.0
libtpu: 0.0.40
codegen_flags: <defaults>
</compile_context>

<pallas_src>
import math
from functools import partial

import jax
import jax.numpy as jnp
from jax import lax
from jax.experimental import pallas as pl
from jax.experimental.pallas import tpu as pltpu


# -----------------------------------------------------------------------------
# Fused decoder-stack kernel
# -----------------------------------------------------------------------------
def _layer_norm(y, g, b, eps=1e-5):
    mu = jnp.mean(y, axis=-1, keepdims=True)
    var = jnp.mean((y - mu) ** 2, axis=-1, keepdims=True)
    return (y - mu) * lax.rsqrt(var + eps) * g + b


def _decoder_stack_kernel(nhead, has_final_norm, mm_dtype,
                          tgt_ref, mem_ref, tmask_ref, mmask_ref,
                          wqkv_s, bqkv_s, wo_s, bo_s,
                          wq_c, bq_c, wkv_c, bkv_c, wo_c, bo_c,
                          w1, b1, w2, b2,
                          g1, be1, g2, be2, g3, be3,
                          fg, fb,
                          out_ref, x_ref):
    layer = pl.program_id(1)
    n_layers = pl.num_programs(1)
    bb, T, E = tgt_ref.shape
    S = mem_ref.shape[1]
    hd = E // nhead
    scale = 1.0 / math.sqrt(hd)
    rq = bb * T
    rk = bb * S

    # Initialize the VMEM-resident activation carry for this batch block.
    @pl.when(layer == 0)
    def _():
        x_ref[...] = tgt_ref[...].reshape(rq, E)

    x = x_ref[...]                               # (bb*T, E) f32 carry
    m_flat = mem_ref[...].reshape(rk, E)         # (bb*S, E) f32

    def mm(a, w_ref):
        # MXU matmul in mm_dtype (bf16 or f32) with f32 accumulation.
        return jnp.dot(a.astype(mm_dtype), w_ref[...],
                       preferred_element_type=jnp.float32)

    def attention(qm, q_off, km, k_off, vm, v_off, Tq, Tk, mask, wo_ref):
        """Multi-head attention over a flat (bb*Tq, *) query matrix.

        The output projection is accumulated per head (no concat)."""
        wo = wo_ref[...]                         # hoist weight load
        acc = jnp.zeros((bb * Tq, E), jnp.float32)
        for h in range(nhead):                   # static unroll over heads
            lo = h * hd
            qh = qm[:, q_off + lo:q_off + lo + hd].reshape(bb, Tq, hd).astype(mm_dtype)
            kh = km[:, k_off + lo:k_off + lo + hd].reshape(bb, Tk, hd).astype(mm_dtype)
            vh = vm[:, v_off + lo:v_off + lo + hd].reshape(bb, Tk, hd).astype(mm_dtype)
            s = jnp.einsum('bqd,bkd->bqk', qh, kh,
                           preferred_element_type=jnp.float32) * scale
            s = s + mask                         # (Tq,Tk) broadcasts over batch
            s = s - jnp.max(s, axis=-1, keepdims=True)
            p = jnp.exp(s)
            p = p * pl.reciprocal(jnp.sum(p, axis=-1, keepdims=True), approx=True)
            ctx = jnp.einsum('bqk,bkd->bqd', p.astype(mm_dtype), vh,
                             preferred_element_type=jnp.float32)
            acc = acc + jnp.dot(ctx.reshape(bb * Tq, hd).astype(mm_dtype),
                                wo[lo:lo + hd, :],
                                preferred_element_type=jnp.float32)
        return acc

    # --- self-attention (fused QKV) + residual + norm1 ---
    qkv = mm(x, wqkv_s) + bqkv_s[...]            # (bb*T, 3E)
    sa = attention(qkv, 0, qkv, E, qkv, 2 * E, T, T,
                   tmask_ref[...], wo_s) + bo_s[...]
    x = _layer_norm(x + sa, g1[...], be1[...])

    # --- cross-attention (fused KV) + residual + norm2 ---
    q_c = mm(x, wq_c) + bq_c[...]                # (bb*T, E)
    kv_c = mm(m_flat, wkv_c) + bkv_c[...]        # (bb*S, 2E)
    ca = attention(q_c, 0, kv_c, 0, kv_c, E, T, S,
                   mmask_ref[...], wo_c) + bo_c[...]
    x = _layer_norm(x + ca, g2[...], be2[...])

    # --- feed-forward (linear -> relu -> linear) + residual + norm3 ---
    h1 = jnp.maximum(mm(x, w1) + b1[...], 0.0)
    ff = mm(h1, w2) + b2[...]
    x = _layer_norm(x + ff, g3[...], be3[...])

    x_ref[...] = x                               # carry to next layer

    @pl.when(layer == n_layers - 1)
    def _():
        y = x
        if has_final_norm:
            y = _layer_norm(y, fg[...], fb[...])
        out_ref[...] = y.reshape(bb, T, E)


# -----------------------------------------------------------------------------
# Pallas wrapper: one pallas_call for the whole stack
# -----------------------------------------------------------------------------
_WEIGHT_NAMES = ['wqkv_s', 'bqkv_s', 'wo_s', 'bo_s',
                 'wq_c', 'bq_c', 'wkv_c', 'bkv_c', 'wo_c', 'bo_c',
                 'w1', 'b1', 'w2', 'b2',
                 'ln1_g', 'ln1_b', 'ln2_g', 'ln2_b', 'ln3_g', 'ln3_b']


def decoder_stack_pallas(x, mem, tmask, mmask, pk, nhead, batch_block=None):
    """x: (B,T,E), mem: (B,S,E). Whole decoder stack, grid=(batch_blocks, layers)."""
    B, T, E = x.shape
    S = mem.shape[1]
    L = int(pk['num_layers'])
    mm_dtype = pk['mm_dtype']
    has_final_norm = bool(pk['has_final_norm'])
    assert E % nhead == 0

    if batch_block is None:
        # Keep >=2 "parallel" grid steps when possible so v7x's two TensorCores
        # both get work, while still batching several rows per matmul.
        batch_block = B // 2 if (B >= 2 and B % 2 == 0) else B
    assert B % batch_block == 0
    bb = batch_block
    nb = B // bb

    def stacked_spec(name):
        arr = pk[name]
        r, c = arr.shape[1], arr.shape[2]
        # Leading layer dim is squeezed; last two dims equal the full array dims.
        return pl.BlockSpec((None, r, c), lambda n, l: (l, 0, 0))

    def const_spec(arr):
        return pl.BlockSpec(arr.shape, lambda n, l: (0, 0))

    in_specs = ([pl.BlockSpec((bb, T, E), lambda n, l: (n, 0, 0)),
                 pl.BlockSpec((bb, S, E), lambda n, l: (n, 0, 0)),
                 const_spec(tmask), const_spec(mmask)]
                + [stacked_spec(nm) for nm in _WEIGHT_NAMES]
                + [const_spec(pk['final_g']), const_spec(pk['final_b'])])

    args = ([x, mem, tmask, mmask]
            + [pk[nm] for nm in _WEIGHT_NAMES]
            + [pk['final_g'], pk['final_b']])

    kernel = partial(_decoder_stack_kernel, nhead, has_final_norm, mm_dtype)

    return pl.pallas_call(
        kernel,
        out_shape=jax.ShapeDtypeStruct((B, T, E), jnp.float32),
        grid_spec=pltpu.PrefetchScalarGridSpec(
            num_scalar_prefetch=0,
            grid=(nb, L),
            in_specs=in_specs,
            out_specs=pl.BlockSpec((bb, T, E), lambda n, l: (n, 0, 0)),
            scratch_shapes=[pltpu.VMEM((bb * T, E), jnp.float32)]),
        compiler_params=pltpu.CompilerParams(
            dimension_semantics=("parallel", "arbitrary")),
    )(*args)


# -----------------------------------------------------------------------------
# AgentFormerDecoder forward
# -----------------------------------------------------------------------------
def agentformer_decoder_forward(tgt, memory, packed, nhead,
                                tgt_mask=None, memory_mask=None,
                                tgt_key_padding_mask=None,
                                memory_key_padding_mask=None,
                                num_agent=1, need_weights=False,
                                batch_block=None):
    # TODO(synk): key-padding masks / num_agent agent-aware path not modeled.
    T, B, E = tgt.shape
    S = memory.shape[0]
    # Boundary transposes only (once per stack, not per layer).
    x = jnp.transpose(tgt, (1, 0, 2))       # (B, T, E)
    m = jnp.transpose(memory, (1, 0, 2))    # (B, S, E)
    tmask = (jnp.zeros((T, T), jnp.float32) if tgt_mask is None
             else tgt_mask.astype(jnp.float32))
    mmask = (jnp.zeros((T, S), jnp.float32) if memory_mask is None
             else memory_mask.astype(jnp.float32))

    y = decoder_stack_pallas(x, m, tmask, mmask, packed, nhead, batch_block)
    out = jnp.transpose(y, (1, 0, 2))       # back to (T, B, E)
    L = int(packed['num_layers'])
    return out, {'self_attn_weights': [None] * L,
                 'cross_attn_weights': [None] * L}


# -----------------------------------------------------------------------------
# Parameter init (reference layout) and packing (kernel layout)
# -----------------------------------------------------------------------------
def init_params(key, num_layers, d_model, dim_ff):
    E, F = d_model, dim_ff
    params = {'layers': []}
    keys = jax.random.split(key, num_layers)
    s = 0.1
    for li in range(num_layers):
        k = jax.random.split(keys[li], 12)
        p = {
            'wq_s': jax.random.normal(k[0], (E, E), jnp.float32) * s,
            'wk_s': jax.random.normal(k[1], (E, E), jnp.float32) * s,
            'wv_s': jax.random.normal(k[2], (E, E), jnp.float32) * s,
            'bq_s': jnp.zeros((1, E), jnp.float32),
            'bk_s': jnp.zeros((1, E), jnp.float32),
            'bv_s': jnp.zeros((1, E), jnp.float32),
            'wo_s': jax.random.normal(k[3], (E, E), jnp.float32) * s,
            'bo_s': jnp.zeros((1, E), jnp.float32),
            'wq_c': jax.random.normal(k[4], (E, E), jnp.float32) * s,
            'wk_c': jax.random.normal(k[5], (E, E), jnp.float32) * s,
            'wv_c': jax.random.normal(k[6], (E, E), jnp.float32) * s,
            'bq_c': jnp.zeros((1, E), jnp.float32),
            'bk_c': jnp.zeros((1, E), jnp.float32),
            'bv_c': jnp.zeros((1, E), jnp.float32),
            'wo_c': jax.random.normal(k[7], (E, E), jnp.float32) * s,
            'bo_c': jnp.zeros((1, E), jnp.float32),
            'w1': jax.random.normal(k[8], (E, F), jnp.float32) * s,
            'b1': jax.random.normal(k[9], (1, F), jnp.float32) * s,
            'w2': jax.random.normal(k[10], (F, E), jnp.float32) * s,
            'b2': jax.random.normal(k[11], (1, E), jnp.float32) * s,
            'ln1_g': jnp.ones((1, E), jnp.float32), 'ln1_b': jnp.zeros((1, E), jnp.float32),
            'ln2_g': jnp.ones((1, E), jnp.float32), 'ln2_b': jnp.zeros((1, E), jnp.float32),
            'ln3_g': jnp.ones((1, E), jnp.float32), 'ln3_b': jnp.zeros((1, E), jnp.float32),
        }
        params['layers'].append(p)
    params['norm'] = (jnp.ones((1, E), jnp.float32), jnp.zeros((1, E), jnp.float32))
    return params


def pack_params(params, mm_dtype=jnp.bfloat16):
    """Stack per-layer weights along a leading layer axis, fuse QKV / KV, and
    cast matmul weights to the MXU dtype (biases / LN params stay f32)."""
    layers = params['layers']
    E = layers[0]['wq_s'].shape[0]
    stack = lambda k: jnp.stack([p[k] for p in layers])

    packed = {
        'wqkv_s': jnp.stack([jnp.concatenate([p['wq_s'], p['wk_s'], p['wv_s']], axis=1)
                             for p in layers]).astype(mm_dtype),
        'bqkv_s': jnp.stack([jnp.concatenate([p['bq_s'], p['bk_s'], p['bv_s']], axis=1)
                             for p in layers]),
        'wo_s': stack('wo_s').astype(mm_dtype), 'bo_s': stack('bo_s'),
        'wq_c': stack('wq_c').astype(mm_dtype), 'bq_c': stack('bq_c'),
        'wkv_c': jnp.stack([jnp.concatenate([p['wk_c'], p['wv_c']], axis=1)
                            for p in layers]).astype(mm_dtype),
        'bkv_c': jnp.stack([jnp.concatenate([p['bk_c'], p['bv_c']], axis=1)
                            for p in layers]),
        'wo_c': stack('wo_c').astype(mm_dtype), 'bo_c': stack('bo_c'),
        'w1': stack('w1').astype(mm_dtype), 'b1': stack('b1'),
        'w2': stack('w2').astype(mm_dtype), 'b2': stack('b2'),
        'ln1_g': stack('ln1_g'), 'ln1_b': stack('ln1_b'),
        'ln2_g': stack('ln2_g'), 'ln2_b': stack('ln2_b'),
        'ln3_g': stack('ln3_g'), 'ln3_b': stack('ln3_b'),
        'num_layers': len(layers),
        'mm_dtype': mm_dtype,
    }
    if params.get('norm') is not None:
        packed['final_g'], packed['final_b'] = params['norm']
        packed['has_final_norm'] = True
    else:
        packed['final_g'] = jnp.ones((1, E), jnp.float32)
        packed['final_b'] = jnp.zeros((1, E), jnp.float32)
        packed['has_final_norm'] = False
    return packed


# -----------------------------------------------------------------------------
# Pure-JAX reference (same matmul precision policy as the kernel)
# -----------------------------------------------------------------------------
def ref_forward(tgt, memory, params, nhead, tgt_mask, memory_mask,
                mm_dtype=jnp.float32):
    cast = lambda a: a.astype(mm_dtype)

    def ee(spec, a, b):
        return jnp.einsum(spec, cast(a), cast(b), precision='highest',
                          preferred_element_type=jnp.float32)

    def ln(y, g, b):
        mu = y.mean(-1, keepdims=True)
        var = ((y - mu) ** 2).mean(-1, keepdims=True)
        return (y - mu) / jnp.sqrt(var + 1e-5) * g + b

    def mha(xq, xkv, wq, wk, wv, bq, bk, bv, wo, bo, mask):
        B, Tq, E = xq.shape
        Tk = xkv.shape[1]
        hd = E // nhead
        q = (ee('bte,ef->btf', xq, wq) + bq).reshape(B, Tq, nhead, hd)
        k = (ee('bte,ef->btf', xkv, wk) + bk).reshape(B, Tk, nhead, hd)
        v = (ee('bte,ef->btf', xkv, wv) + bv).reshape(B, Tk, nhead, hd)
        s = ee('bqhd,bkhd->bhqk', q, k) / math.sqrt(hd) + mask
        a = jax.nn.softmax(s, axis=-1)
        ctx = ee('bhqk,bkhd->bqhd', a, v).reshape(B, Tq, E)
        return ee('bte,ef->btf', ctx, wo) + bo

    x = jnp.transpose(tgt, (1, 0, 2))
    m = jnp.transpose(memory, (1, 0, 2))
    T, S = x.shape[1], m.shape[1]
    tmask = jnp.zeros((T, T)) if tgt_mask is None else tgt_mask
    mmask = jnp.zeros((T, S)) if memory_mask is None else memory_mask
    for p in params['layers']:
        x = ln(x + mha(x, x, p['wq_s'], p['wk_s'], p['wv_s'], p['bq_s'], p['bk_s'],
                       p['bv_s'], p['wo_s'], p['bo_s'], tmask), p['ln1_g'], p['ln1_b'])
        x = ln(x + mha(x, m, p['wq_c'], p['wk_c'], p['wv_c'], p['bq_c'], p['bk_c'],
                       p['bv_c'], p['wo_c'], p['bo_c'], mmask), p['ln2_g'], p['ln2_b'])
        h = jnp.maximum(ee('bte,ef->btf', x, p['w1']) + p['b1'], 0.0)
        ff = ee('btf,fe->bte', h, p['w2']) + p['b2']
        x = ln(x + ff, p['ln3_g'], p['ln3_b'])
    if params.get('norm') is not None:
        g, b = params['norm']
        x = ln(x, g, b)
    return jnp.transpose(x, (1, 0, 2))


# -----------------------------------------------------------------------------
if __name__ == "__main__":
    key = jax.random.PRNGKey(0)
    k_tgt, k_mem, k_p = jax.random.split(key, 3)

    T, S, B, E, H, F, L = 8, 10, 2, 32, 4, 64, 2
    tgt = jax.random.normal(k_tgt, (T, B, E), jnp.float32)
    memory = jax.random.normal(k_mem, (S, B, E), jnp.float32)
    params = init_params(k_p, L, E, F)

    # causal additive tgt mask (like generate_square_subsequent_mask)
    tgt_mask = jnp.where(jnp.tril(jnp.ones((T, T), bool)), 0.0, -1e9).astype(jnp.float32)

    # --- f32 MXU path: check against f32 reference ---
    packed32 = pack_params(params, mm_dtype=jnp.float32)
    out32, attn_w = agentformer_decoder_forward(tgt, memory, packed32, H,
                                                tgt_mask=tgt_mask, memory_mask=None,
                                                num_agent=1, need_weights=False)
    out32 = jax.block_until_ready(out32)
    ref32 = ref_forward(tgt, memory, params, H, tgt_mask, None, jnp.float32)
    assert out32.shape == (T, B, E)
    assert attn_w['self_attn_weights'] == [None] * L
    err32 = float(jnp.max(jnp.abs(out32 - ref32)))
    assert jnp.allclose(out32, ref32, atol=1e-2, rtol=1e-2), err32

    # --- bf16 MXU path (v6e / v7x fast path): check against bf16-precision ref ---
    packed16 = pack_params(params, mm_dtype=jnp.bfloat16)
    out16, _ = agentformer_decoder_forward(tgt, memory, packed16, H,
                                           tgt_mask=tgt_mask, memory_mask=None)
    out16 = jax.block_until_ready(out16)
    ref16 = ref_forward(tgt, memory, params, H, tgt_mask, None, jnp.bfloat16)
    err16 = float(jnp.max(jnp.abs(out16 - ref16)))
    assert jnp.allclose(out16, ref16, atol=2e-2, rtol=2e-2), err16

    print("KERNEL_OK")
</pallas_src>

<mosaic_0001>
module attributes {stable_mosaic.version = 11 : i64} {
  func.func @_decoder_stack_kernel(%arg0: i32, %arg1: i32, %arg2: memref<1x8x32xf32, #tpu.memory_space<vmem>>, %arg3: memref<1x10x32xf32, #tpu.memory_space<vmem>>, %arg4: memref<8x8xf32, #tpu.memory_space<vmem>>, %arg5: memref<8x10xf32, #tpu.memory_space<vmem>>, %arg6: memref<1x32x96xf32, #tpu.memory_space<vmem>>, %arg7: memref<1x1x96xf32, #tpu.memory_space<vmem>>, %arg8: memref<1x32x32xf32, #tpu.memory_space<vmem>>, %arg9: memref<1x1x32xf32, #tpu.memory_space<vmem>>, %arg10: memref<1x32x32xf32, #tpu.memory_space<vmem>>, %arg11: memref<1x1x32xf32, #tpu.memory_space<vmem>>, %arg12: memref<1x32x64xf32, #tpu.memory_space<vmem>>, %arg13: memref<1x1x64xf32, #tpu.memory_space<vmem>>, %arg14: memref<1x32x32xf32, #tpu.memory_space<vmem>>, %arg15: memref<1x1x32xf32, #tpu.memory_space<vmem>>, %arg16: memref<1x32x64xf32, #tpu.memory_space<vmem>>, %arg17: memref<1x1x64xf32, #tpu.memory_space<vmem>>, %arg18: memref<1x64x32xf32, #tpu.memory_space<vmem>>, %arg19: memref<1x1x32xf32, #tpu.memory_space<vmem>>, %arg20: memref<1x1x32xf32, #tpu.memory_space<vmem>>, %arg21: memref<1x1x32xf32, #tpu.memory_space<vmem>>, %arg22: memref<1x1x32xf32, #tpu.memory_space<vmem>>, %arg23: memref<1x1x32xf32, #tpu.memory_space<vmem>>, %arg24: memref<1x1x32xf32, #tpu.memory_space<vmem>>, %arg25: memref<1x1x32xf32, #tpu.memory_space<vmem>>, %arg26: memref<1x32xf32, #tpu.memory_space<vmem>>, %arg27: memref<1x32xf32, #tpu.memory_space<vmem>>, %arg28: memref<1x8x32xf32, #tpu.memory_space<vmem>>, %arg29: memref<8x32xf32, #tpu.memory_space<vmem>>) attributes {dimension_semantics = [#tpu.dimension_semantics<parallel>, #tpu.dimension_semantics<arbitrary>], iteration_bounds = array<i64: 2, 2>, scalar_prefetch = 0 : i64, scratch_operands = 1 : i64, tpu.core_type = #tpu.core_type<tc>, window_params = [{transform_indices = @transform_0, window_bounds = array<i64: 1, 8, 32>}, {transform_indices = @transform_1, window_bounds = array<i64: 1, 10, 32>}, {pipeline_mode = #tpu.pipeline_mode<synchronous>, transform_indices = @transform_2, window_bounds = array<i64: 8, 8>}, {pipeline_mode = #tpu.pipeline_mode<synchronous>, transform_indices = @transform_3, window_bounds = array<i64: 8, 10>}, {transform_indices = @transform_4, window_bounds = array<i64: 1, 32, 96>}, {transform_indices = @transform_5, window_bounds = array<i64: 1, 1, 96>}, {transform_indices = @transform_6, window_bounds = array<i64: 1, 32, 32>}, {transform_indices = @transform_7, window_bounds = array<i64: 1, 1, 32>}, {transform_indices = @transform_8, window_bounds = array<i64: 1, 32, 32>}, {transform_indices = @transform_9, window_bounds = array<i64: 1, 1, 32>}, {transform_indices = @transform_10, window_bounds = array<i64: 1, 32, 64>}, {transform_indices = @transform_11, window_bounds = array<i64: 1, 1, 64>}, {transform_indices = @transform_12, window_bounds = array<i64: 1, 32, 32>}, {transform_indices = @transform_13, window_bounds = array<i64: 1, 1, 32>}, {transform_indices = @transform_14, window_bounds = array<i64: 1, 32, 64>}, {transform_indices = @transform_15, window_bounds = array<i64: 1, 1, 64>}, {transform_indices = @transform_16, window_bounds = array<i64: 1, 64, 32>}, {transform_indices = @transform_17, window_bounds = array<i64: 1, 1, 32>}, {transform_indices = @transform_18, window_bounds = array<i64: 1, 1, 32>}, {transform_indices = @transform_19, window_bounds = array<i64: 1, 1, 32>}, {transform_indices = @transform_20, window_bounds = array<i64: 1, 1, 32>}, {transform_indices = @transform_21, window_bounds = array<i64: 1, 1, 32>}, {transform_indices = @transform_22, window_bounds = array<i64: 1, 1, 32>}, {transform_indices = @transform_23, window_bounds = array<i64: 1, 1, 32>}, {pipeline_mode = #tpu.pipeline_mode<synchronous>, transform_indices = @transform_24, window_bounds = array<i64: 1, 32>}, {pipeline_mode = #tpu.pipeline_mode<synchronous>, transform_indices = @transform_25, window_bounds = array<i64: 1, 32>}, {transform_indices = @transform_26, window_bounds = array<i64: 1, 8, 32>}]} {
    %c0_i32 = arith.constant 0 : i32
    %0 = arith.cmpi eq, %arg1, %c0_i32 : i32
    %1 = arith.extui %0 : i1 to i32
    %c0_i32_0 = arith.constant 0 : i32
    %2 = arith.cmpi ne, %1, %c0_i32_0 : i32
    scf.if %2 {
      %c0_142 = arith.constant 0 : index
      %c0_143 = arith.constant 0 : index
      %c0_144 = arith.constant 0 : index
      %352 = vector.load %arg2[%c0_142, %c0_143, %c0_144] : memref<1x8x32xf32, #tpu.memory_space<vmem>>, vector<1x8x32xf32>
      %353 = vector.shape_cast %352 : vector<1x8x32xf32> to vector<8x32xf32>
      %c0_145 = arith.constant 0 : index
      %c0_146 = arith.constant 0 : index
      %354 = vector.load %arg29[%c0_145, %c0_146] : memref<8x32xf32, #tpu.memory_space<vmem>>, vector<8x32xf32>
      tpu.vector_store %arg29[%c0_145, %c0_146], %353 {strides = array<i32>} : memref<8x32xf32, #tpu.memory_space<vmem>>, vector<8x32xf32>,
    } else {
    }
    %c0 = arith.constant 0 : index
    %c0_1 = arith.constant 0 : index
    %3 = vector.load %arg29[%c0, %c0_1] : memref<8x32xf32, #tpu.memory_space<vmem>>, vector<8x32xf32>
    %c0_2 = arith.constant 0 : index
    %c0_3 = arith.constant 0 : index
    %c0_4 = arith.constant 0 : index
    %4 = vector.load %arg3[%c0_2, %c0_3, %c0_4] : memref<1x10x32xf32, #tpu.memory_space<vmem>>, vector<1x10x32xf32>
    %5 = vector.shape_cast %4 : vector<1x10x32xf32> to vector<10x32xf32>
    %c0_5 = arith.constant 0 : index
    %c0_6 = arith.constant 0 : index
    %c0_7 = arith.constant 0 : index
    %6 = vector.load %arg6[%c0_5, %c0_6, %c0_7] : memref<1x32x96xf32, #tpu.memory_space<vmem>>, vector<1x32x96xf32>
    %7 = vector.shape_cast %6 : vector<1x32x96xf32> to vector<32x96xf32>
    %cst = arith.constant dense<0.000000e+00> : vector<8x96xf32>
    %8 = tpu.matmul %3, %7, %cst {dimension_numbers = #tpu.dot_dimension_numbers<[1], [0], [0], [1], [0, 0, 1, 1], [], []>} : vector<8x32xf32>, vector<32x96xf32>, vector<8x96xf32> -> vector<8x96xf32>
    %c0_8 = arith.constant 0 : index
    %c0_9 = arith.constant 0 : index
    %c0_10 = arith.constant 0 : index
    %9 = vector.load %arg7[%c0_8, %c0_9, %c0_10] : memref<1x1x96xf32, #tpu.memory_space<vmem>>, vector<1x1x96xf32>
    %10 = vector.shape_cast %9 : vector<1x1x96xf32> to vector<1x96xf32>
    %11 = vector.broadcast %10 : vector<1x96xf32> to vector<8x96xf32>
    %12 = arith.addf %8, %11 : vector<8x96xf32>
    %c0_11 = arith.constant 0 : index
    %c0_12 = arith.constant 0 : index
    %13 = vector.load %arg4[%c0_11, %c0_12] : memref<8x8xf32, #tpu.memory_space<vmem>>, vector<8x8xf32>
    %c0_13 = arith.constant 0 : index
    %c0_14 = arith.constant 0 : index
    %c0_15 = arith.constant 0 : index
    %14 = vector.load %arg8[%c0_13, %c0_14, %c0_15] : memref<1x32x32xf32, #tpu.memory_space<vmem>>, vector<1x32x32xf32>
    %15 = vector.shape_cast %14 : vector<1x32x32xf32> to vector<32x32xf32>
    %cst_16 = arith.constant 0.000000e+00 : f32
    %16 = vector.broadcast %cst_16 : f32 to vector<8x32xf32>
    %17 = vector.extract_strided_slice %12 {offsets = [0, 0], sizes = [8, 8], strides = [1, 1]} : vector<8x96xf32> to vector<8x8xf32>
    %18 = vector.shape_cast %17 : vector<8x8xf32> to vector<1x8x8xf32>
    %19 = vector.extract_strided_slice %12 {offsets = [0, 32], sizes = [8, 8], strides = [1, 1]} : vector<8x96xf32> to vector<8x8xf32>
    %20 = vector.shape_cast %19 : vector<8x8xf32> to vector<1x8x8xf32>
    %21 = vector.extract_strided_slice %12 {offsets = [0, 64], sizes = [8, 8], strides = [1, 1]} : vector<8x96xf32> to vector<8x8xf32>
    %22 = vector.shape_cast %21 : vector<8x8xf32> to vector<1x8x8xf32>
    "tpu.trace_start"() <{level = 10 : i32, message = "bqd,bkd->bqk"}> : () -> ()
    %cst_17 = arith.constant dense<0.000000e+00> : vector<1x8x8xf32>
    %23 = tpu.matmul %18, %20, %cst_17 {dimension_numbers = #tpu.dot_dimension_numbers<[2], [2], [1], [1], [0, 0, 0, 1, 1, 1], [0], [0]>} : vector<1x8x8xf32>, vector<1x8x8xf32>, vector<1x8x8xf32> -> vector<1x8x8xf32>
    "tpu.trace_stop"() : () -> ()
    %cst_18 = arith.constant 0.353553385 : f32
    %24 = vector.broadcast %cst_18 : f32 to vector<1x8x8xf32>
    %25 = arith.mulf %23, %24 : vector<1x8x8xf32>
    %26 = vector.shape_cast %13 : vector<8x8xf32> to vector<1x8x8xf32>
    %27 = arith.addf %25, %26 : vector<1x8x8xf32>
    %cst_19 = arith.constant dense<0xFF800000> : vector<1x8xf32>
    %28 = vector.multi_reduction <maximumf>, %27, %cst_19 [2] : vector<1x8x8xf32> to vector<1x8xf32>
    %29 = vector.shape_cast %28 : vector<1x8xf32> to vector<1x8x1xf32>
    %30 = vector.broadcast %29 : vector<1x8x1xf32> to vector<1x8x8xf32>
    %31 = arith.subf %27, %30 : vector<1x8x8xf32>
    %32 = math.exp %31 : vector<1x8x8xf32>
    %cst_20 = arith.constant dense<0.000000e+00> : vector<1x8xf32>
    %33 = vector.multi_reduction <add>, %32, %cst_20 [2] : vector<1x8x8xf32> to vector<1x8xf32>
    %34 = vector.shape_cast %33 : vector<1x8xf32> to vector<1x8x1xf32>
    %35 = tpu.reciprocal %34 {approx = true} : vector<1x8x1xf32> -> vector<1x8x1xf32>
    %36 = vector.broadcast %35 : vector<1x8x1xf32> to vector<1x8x8xf32>
    %37 = arith.mulf %32, %36 : vector<1x8x8xf32>
    "tpu.trace_start"() <{level = 10 : i32, message = "bqk,bkd->bqd"}> : () -> ()
    %cst_21 = arith.constant dense<0.000000e+00> : vector<1x8x8xf32>
    %38 = tpu.matmul %37, %22, %cst_21 {dimension_numbers = #tpu.dot_dimension_numbers<[2], [1], [1], [2], [0, 0, 0, 1, 1, 2], [0], [0]>} : vector<1x8x8xf32>, vector<1x8x8xf32>, vector<1x8x8xf32> -> vector<1x8x8xf32>
    "tpu.trace_stop"() : () -> ()
    %39 = vector.shape_cast %38 : vector<1x8x8xf32> to vector<8x8xf32>
    %40 = vector.extract_strided_slice %15 {offsets = [0, 0], sizes = [8, 32], strides = [1, 1]} : vector<32x32xf32> to vector<8x32xf32>
    %cst_22 = arith.constant dense<0.000000e+00> : vector<8x32xf32>
    %41 = tpu.matmul %39, %40, %cst_22 {dimension_numbers = #tpu.dot_dimension_numbers<[1], [0], [0], [1], [0, 0, 1, 1], [], []>} : vector<8x8xf32>, vector<8x32xf32>, vector<8x32xf32> -> vector<8x32xf32>
    %42 = arith.addf %16, %41 : vector<8x32xf32>
    %43 = vector.extract_strided_slice %12 {offsets = [0, 8], sizes = [8, 8], strides = [1, 1]} : vector<8x96xf32> to vector<8x8xf32>
    %44 = vector.shape_cast %43 : vector<8x8xf32> to vector<1x8x8xf32>
    %45 = vector.extract_strided_slice %12 {offsets = [0, 40], sizes = [8, 8], strides = [1, 1]} : vector<8x96xf32> to vector<8x8xf32>
    %46 = vector.shape_cast %45 : vector<8x8xf32> to vector<1x8x8xf32>
    %47 = vector.extract_strided_slice %12 {offsets = [0, 72], sizes = [8, 8], strides = [1, 1]} : vector<8x96xf32> to vector<8x8xf32>
    %48 = vector.shape_cast %47 : vector<8x8xf32> to vector<1x8x8xf32>
    "tpu.trace_start"() <{level = 10 : i32, message = "bqd,bkd->bqk"}> : () -> ()
    %cst_23 = arith.constant dense<0.000000e+00> : vector<1x8x8xf32>
    %49 = tpu.matmul %44, %46, %cst_23 {dimension_numbers = #tpu.dot_dimension_numbers<[2], [2], [1], [1], [0, 0, 0, 1, 1, 1], [0], [0]>} : vector<1x8x8xf32>, vector<1x8x8xf32>, vector<1x8x8xf32> -> vector<1x8x8xf32>
    "tpu.trace_stop"() : () -> ()
    %cst_24 = arith.constant 0.353553385 : f32
    %50 = vector.broadcast %cst_24 : f32 to vector<1x8x8xf32>
    %51 = arith.mulf %49, %50 : vector<1x8x8xf32>
    %52 = vector.shape_cast %13 : vector<8x8xf32> to vector<1x8x8xf32>
    %53 = arith.addf %51, %52 : vector<1x8x8xf32>
    %cst_25 = arith.constant dense<0xFF800000> : vector<1x8xf32>
    %54 = vector.multi_reduction <maximumf>, %53, %cst_25 [2] : vector<1x8x8xf32> to vector<1x8xf32>
    %55 = vector.shape_cast %54 : vector<1x8xf32> to vector<1x8x1xf32>
    %56 = vector.broadcast %55 : vector<1x8x1xf32> to vector<1x8x8xf32>
    %57 = arith.subf %53, %56 : vector<1x8x8xf32>
    %58 = math.exp %57 : vector<1x8x8xf32>
    %cst_26 = arith.constant dense<0.000000e+00> : vector<1x8xf32>
    %59 = vector.multi_reduction <add>, %58, %cst_26 [2] : vector<1x8x8xf32> to vector<1x8xf32>
    %60 = vector.shape_cast %59 : vector<1x8xf32> to vector<1x8x1xf32>
    %61 = tpu.reciprocal %60 {approx = true} : vector<1x8x1xf32> -> vector<1x8x1xf32>
    %62 = vector.broadcast %61 : vector<1x8x1xf32> to vector<1x8x8xf32>
    %63 = arith.mulf %58, %62 : vector<1x8x8xf32>
    "tpu.trace_start"() <{level = 10 : i32, message = "bqk,bkd->bqd"}> : () -> ()
    %cst_27 = arith.constant dense<0.000000e+00> : vector<1x8x8xf32>
    %64 = tpu.matmul %63, %48, %cst_27 {dimension_numbers = #tpu.dot_dimension_numbers<[2], [1], [1], [2], [0, 0, 0, 1, 1, 2], [0], [0]>} : vector<1x8x8xf32>, vector<1x8x8xf32>, vector<1x8x8xf32> -> vector<1x8x8xf32>
    "tpu.trace_stop"() : () -> ()
    %65 = vector.shape_cast %64 : vector<1x8x8xf32> to vector<8x8xf32>
    %66 = vector.extract_strided_slice %15 {offsets = [8, 0], sizes = [8, 32], strides = [1, 1]} : vector<32x32xf32> to vector<8x32xf32>
    %cst_28 = arith.constant dense<0.000000e+00> : vector<8x32xf32>
    %67 = tpu.matmul %65, %66, %cst_28 {dimension_numbers = #tpu.dot_dimension_numbers<[1], [0], [0], [1], [0, 0, 1, 1], [], []>} : vector<8x8xf32>, vector<8x32xf32>, vector<8x32xf32> -> vector<8x32xf32>
    %68 = arith.addf %42, %67 : vector<8x32xf32>
    %69 = vector.extract_strided_slice %12 {offsets = [0, 16], sizes = [8, 8], strides = [1, 1]} : vector<8x96xf32> to vector<8x8xf32>
    %70 = vector.shape_cast %69 : vector<8x8xf32> to vector<1x8x8xf32>
    %71 = vector.extract_strided_slice %12 {offsets = [0, 48], sizes = [8, 8], strides = [1, 1]} : vector<8x96xf32> to vector<8x8xf32>
    %72 = vector.shape_cast %71 : vector<8x8xf32> to vector<1x8x8xf32>
    %73 = vector.extract_strided_slice %12 {offsets = [0, 80], sizes = [8, 8], strides = [1, 1]} : vector<8x96xf32> to vector<8x8xf32>
    %74 = vector.shape_cast %73 : vector<8x8xf32> to vector<1x8x8xf32>
    "tpu.trace_start"() <{level = 10 : i32, message = "bqd,bkd->bqk"}> : () -> ()
    %cst_29 = arith.constant dense<0.000000e+00> : vector<1x8x8xf32>
    %75 = tpu.matmul %70, %72, %cst_29 {dimension_numbers = #tpu.dot_dimension_numbers<[2], [2], [1], [1], [0, 0, 0, 1, 1, 1], [0], [0]>} : vector<1x8x8xf32>, vector<1x8x8xf32>, vector<1x8x8xf32> -> vector<1x8x8xf32>
    "tpu.trace_stop"() : () -> ()
    %cst_30 = arith.constant 0.353553385 : f32
    %76 = vector.broadcast %cst_30 : f32 to vector<1x8x8xf32>
    %77 = arith.mulf %75, %76 : vector<1x8x8xf32>
    %78 = vector.shape_cast %13 : vector<8x8xf32> to vector<1x8x8xf32>
    %79 = arith.addf %77, %78 : vector<1x8x8xf32>
    %cst_31 = arith.constant dense<0xFF800000> : vector<1x8xf32>
    %80 = vector.multi_reduction <maximumf>, %79, %cst_31 [2] : vector<1x8x8xf32> to vector<1x8xf32>
    %81 = vector.shape_cast %80 : vector<1x8xf32> to vector<1x8x1xf32>
    %82 = vector.broadcast %81 : vector<1x8x1xf32> to vector<1x8x8xf32>
    %83 = arith.subf %79, %82 : vector<1x8x8xf32>
    %84 = math.exp %83 : vector<1x8x8xf32>
    %cst_32 = arith.constant dense<0.000000e+00> : vector<1x8xf32>
    %85 = vector.multi_reduction <add>, %84, %cst_32 [2] : vector<1x8x8xf32> to vector<1x8xf32>
    %86 = vector.shape_cast %85 : vector<1x8xf32> to vector<1x8x1xf32>
    %87 = tpu.reciprocal %86 {approx = true} : vector<1x8x1xf32> -> vector<1x8x1xf32>
    %88 = vector.broadcast %87 : vector<1x8x1xf32> to vector<1x8x8xf32>
    %89 = arith.mulf %84, %88 : vector<1x8x8xf32>
    "tpu.trace_start"() <{level = 10 : i32, message = "bqk,bkd->bqd"}> : () -> ()
    %cst_33 = arith.constant dense<0.000000e+00> : vector<1x8x8xf32>
    %90 = tpu.matmul %89, %74, %cst_33 {dimension_numbers = #tpu.dot_dimension_numbers<[2], [1], [1], [2], [0, 0, 0, 1, 1, 2], [0], [0]>} : vector<1x8x8xf32>, vector<1x8x8xf32>, vector<1x8x8xf32> -> vector<1x8x8xf32>
    "tpu.trace_stop"() : () -> ()
    %91 = vector.shape_cast %90 : vector<1x8x8xf32> to vector<8x8xf32>
    %92 = vector.extract_strided_slice %15 {offsets = [16, 0], sizes = [8, 32], strides = [1, 1]} : vector<32x32xf32> to vector<8x32xf32>
    %cst_34 = arith.constant dense<0.000000e+00> : vector<8x32xf32>
    %93 = tpu.matmul %91, %92, %cst_34 {dimension_numbers = #tpu.dot_dimension_numbers<[1], [0], [0], [1], [0, 0, 1, 1], [], []>} : vector<8x8xf32>, vector<8x32xf32>, vector<8x32xf32> -> vector<8x32xf32>
    %94 = arith.addf %68, %93 : vector<8x32xf32>
    %95 = vector.extract_strided_slice %12 {offsets = [0, 24], sizes = [8, 8], strides = [1, 1]} : vector<8x96xf32> to vector<8x8xf32>
    %96 = vector.shape_cast %95 : vector<8x8xf32> to vector<1x8x8xf32>
    %97 = vector.extract_strided_slice %12 {offsets = [0, 56], sizes = [8, 8], strides = [1, 1]} : vector<8x96xf32> to vector<8x8xf32>
    %98 = vector.shape_cast %97 : vector<8x8xf32> to vector<1x8x8xf32>
    %99 = vector.extract_strided_slice %12 {offsets = [0, 88], sizes = [8, 8], strides = [1, 1]} : vector<8x96xf32> to vector<8x8xf32>
    %100 = vector.shape_cast %99 : vector<8x8xf32> to vector<1x8x8xf32>
    "tpu.trace_start"() <{level = 10 : i32, message = "bqd,bkd->bqk"}> : () -> ()
    %cst_35 = arith.constant dense<0.000000e+00> : vector<1x8x8xf32>
    %101 = tpu.matmul %96, %98, %cst_35 {dimension_numbers = #tpu.dot_dimension_numbers<[2], [2], [1], [1], [0, 0, 0, 1, 1, 1], [0], [0]>} : vector<1x8x8xf32>, vector<1x8x8xf32>, vector<1x8x8xf32> -> vector<1x8x8xf32>
    "tpu.trace_stop"() : () -> ()
    %cst_36 = arith.constant 0.353553385 : f32
    %102 = vector.broadcast %cst_36 : f32 to vector<1x8x8xf32>
    %103 = arith.mulf %101, %102 : vector<1x8x8xf32>
    %104 = vector.shape_cast %13 : vector<8x8xf32> to vector<1x8x8xf32>
    %105 = arith.addf %103, %104 : vector<1x8x8xf32>
    %cst_37 = arith.constant dense<0xFF800000> : vector<1x8xf32>
    %106 = vector.multi_reduction <maximumf>, %105, %cst_37 [2] : vector<1x8x8xf32> to vector<1x8xf32>
    %107 = vector.shape_cast %106 : vector<1x8xf32> to vector<1x8x1xf32>
    %108 = vector.broadcast %107 : vector<1x8x1xf32> to vector<1x8x8xf32>
    %109 = arith.subf %105, %108 : vector<1x8x8xf32>
    %110 = math.exp %109 : vector<1x8x8xf32>
    %cst_38 = arith.constant dense<0.000000e+00> : vector<1x8xf32>
    %111 = vector.multi_reduction <add>, %110, %cst_38 [2] : vector<1x8x8xf32> to vector<1x8xf32>
    %112 = vector.shape_cast %111 : vector<1x8xf32> to vector<1x8x1xf32>
    %113 = tpu.reciprocal %112 {approx = true} : vector<1x8x1xf32> -> vector<1x8x1xf32>
    %114 = vector.broadcast %113 : vector<1x8x1xf32> to vector<1x8x8xf32>
    %115 = arith.mulf %110, %114 : vector<1x8x8xf32>
    "tpu.trace_start"() <{level = 10 : i32, message = "bqk,bkd->bqd"}> : () -> ()
    %cst_39 = arith.constant dense<0.000000e+00> : vector<1x8x8xf32>
    %116 = tpu.matmul %115, %100, %cst_39 {dimension_numbers = #tpu.dot_dimension_numbers<[2], [1], [1], [2], [0, 0, 0, 1, 1, 2], [0], [0]>} : vector<1x8x8xf32>, vector<1x8x8xf32>, vector<1x8x8xf32> -> vector<1x8x8xf32>
    "tpu.trace_stop"() : () -> ()
    %117 = vector.shape_cast %116 : vector<1x8x8xf32> to vector<8x8xf32>
    %118 = vector.extract_strided_slice %15 {offsets = [24, 0], sizes = [8, 32], strides = [1, 1]} : vector<32x32xf32> to vector<8x32xf32>
    %cst_40 = arith.constant dense<0.000000e+00> : vector<8x32xf32>
    %119 = tpu.matmul %117, %118, %cst_40 {dimension_numbers = #tpu.dot_dimension_numbers<[1], [0], [0], [1], [0, 0, 1, 1], [], []>} : vector<8x8xf32>, vector<8x32xf32>, vector<8x32xf32> -> vector<8x32xf32>
    %120 = arith.addf %94, %119 : vector<8x32xf32>
    %c0_41 = arith.constant 0 : index
    %c0_42 = arith.constant 0 : index
    %c0_43 = arith.constant 0 : index
    %121 = vector.load %arg9[%c0_41, %c0_42, %c0_43] : memref<1x1x32xf32, #tpu.memory_space<vmem>>, vector<1x1x32xf32>
    %122 = vector.shape_cast %121 : vector<1x1x32xf32> to vector<1x32xf32>
    %123 = vector.broadcast %122 : vector<1x32xf32> to vector<8x32xf32>
    %124 = arith.addf %120, %123 : vector<8x32xf32>
    %125 = arith.addf %3, %124 : vector<8x32xf32>
    %c0_44 = arith.constant 0 : index
    %c0_45 = arith.constant 0 : index
    %c0_46 = arith.constant 0 : index
    %126 = vector.load %arg20[%c0_44, %c0_45, %c0_46] : memref<1x1x32xf32, #tpu.memory_space<vmem>>, vector<1x1x32xf32>
    %127 = vector.shape_cast %126 : vector<1x1x32xf32> to vector<1x32xf32>
    %c0_47 = arith.constant 0 : index
    %c0_48 = arith.constant 0 : index
    %c0_49 = arith.constant 0 : index
    %128 = vector.load %arg21[%c0_47, %c0_48, %c0_49] : memref<1x1x32xf32, #tpu.memory_space<vmem>>, vector<1x1x32xf32>
    %129 = vector.shape_cast %128 : vector<1x1x32xf32> to vector<1x32xf32>
    %cst_50 = arith.constant dense<0.000000e+00> : vector<8xf32>
    %130 = vector.multi_reduction <add>, %125, %cst_50 [1] : vector<8x32xf32> to vector<8xf32>
    %131 = vector.shape_cast %130 : vector<8xf32> to vector<8x1xf32>
    %cst_51 = arith.constant 3.200000e+01 : f32
    %132 = vector.broadcast %cst_51 : f32 to vector<8x1xf32>
    %133 = arith.divf %131, %132 : vector<8x1xf32>
    %134 = vector.broadcast %133 : vector<8x1xf32> to vector<8x32xf32>
    %135 = arith.subf %125, %134 : vector<8x32xf32>
    %136 = arith.mulf %135, %135 : vector<8x32xf32>
    %cst_52 = arith.constant dense<0.000000e+00> : vector<8xf32>
    %137 = vector.multi_reduction <add>, %136, %cst_52 [1] : vector<8x32xf32> to vector<8xf32>
    %138 = vector.shape_cast %137 : vector<8xf32> to vector<8x1xf32>
    %cst_53 = arith.constant 3.200000e+01 : f32
    %139 = vector.broadcast %cst_53 : f32 to vector<8x1xf32>
    %140 = arith.divf %138, %139 : vector<8x1xf32>
    %141 = vector.broadcast %133 : vector<8x1xf32> to vector<8x32xf32>
    %142 = arith.subf %125, %141 : vector<8x32xf32>
    %cst_54 = arith.constant 9.99999974E-6 : f32
    %143 = vector.broadcast %cst_54 : f32 to vector<8x1xf32>
    %144 = arith.addf %140, %143 : vector<8x1xf32>
    %145 = math.rsqrt %144 : vector<8x1xf32>
    %146 = vector.broadcast %145 : vector<8x1xf32> to vector<8x32xf32>
    %147 = arith.mulf %142, %146 : vector<8x32xf32>
    %148 = vector.broadcast %127 : vector<1x32xf32> to vector<8x32xf32>
    %149 = arith.mulf %147, %148 : vector<8x32xf32>
    %150 = vector.broadcast %129 : vector<1x32xf32> to vector<8x32xf32>
    %151 = arith.addf %149, %150 : vector<8x32xf32>
    %c0_55 = arith.constant 0 : index
    %c0_56 = arith.constant 0 : index
    %c0_57 = arith.constant 0 : index
    %152 = vector.load %arg10[%c0_55, %c0_56, %c0_57] : memref<1x32x32xf32, #tpu.memory_space<vmem>>, vector<1x32x32xf32>
    %153 = vector.shape_cast %152 : vector<1x32x32xf32> to vector<32x32xf32>
    %cst_58 = arith.constant dense<0.000000e+00> : vector<8x32xf32>
    %154 = tpu.matmul %151, %153, %cst_58 {dimension_numbers = #tpu.dot_dimension_numbers<[1], [0], [0], [1], [0, 0, 1, 1], [], []>} : vector<8x32xf32>, vector<32x32xf32>, vector<8x32xf32> -> vector<8x32xf32>
    %c0_59 = arith.constant 0 : index
    %c0_60 = arith.constant 0 : index
    %c0_61 = arith.constant 0 : index
    %155 = vector.load %arg11[%c0_59, %c0_60, %c0_61] : memref<1x1x32xf32, #tpu.memory_space<vmem>>, vector<1x1x32xf32>
    %156 = vector.shape_cast %155 : vector<1x1x32xf32> to vector<1x32xf32>
    %157 = vector.broadcast %156 : vector<1x32xf32> to vector<8x32xf32>
    %158 = arith.addf %154, %157 : vector<8x32xf32>
    %c0_62 = arith.constant 0 : index
    %c0_63 = arith.constant 0 : index
    %c0_64 = arith.constant 0 : index
    %159 = vector.load %arg12[%c0_62, %c0_63, %c0_64] : memref<1x32x64xf32, #tpu.memory_space<vmem>>, vector<1x32x64xf32>
    %160 = vector.shape_cast %159 : vector<1x32x64xf32> to vector<32x64xf32>
    %cst_65 = arith.constant dense<0.000000e+00> : vector<10x64xf32>
    %161 = tpu.matmul %5, %160, %cst_65 {dimension_numbers = #tpu.dot_dimension_numbers<[1], [0], [0], [1], [0, 0, 1, 1], [], []>} : vector<10x32xf32>, vector<32x64xf32>, vector<10x64xf32> -> vector<10x64xf32>
    %c0_66 = arith.constant 0 : index
    %c0_67 = arith.constant 0 : index
    %c0_68 = arith.constant 0 : index
    %162 = vector.load %arg13[%c0_66, %c0_67, %c0_68] : memref<1x1x64xf32, #tpu.memory_space<vmem>>, vector<1x1x64xf32>
    %163 = vector.shape_cast %162 : vector<1x1x64xf32> to vector<1x64xf32>
    %164 = vector.broadcast %163 : vector<1x64xf32> to vector<10x64xf32>
    %165 = arith.addf %161, %164 : vector<10x64xf32>
    %c0_69 = arith.constant 0 : index
    %c0_70 = arith.constant 0 : index
    %166 = vector.load %arg5[%c0_69, %c0_70] : memref<8x10xf32, #tpu.memory_space<vmem>>, vector<8x10xf32>
    %c0_71 = arith.constant 0 : index
    %c0_72 = arith.constant 0 : index
    %c0_73 = arith.constant 0 : index
    %167 = vector.load %arg14[%c0_71, %c0_72, %c0_73] : memref<1x32x32xf32, #tpu.memory_space<vmem>>, vector<1x32x32xf32>
    %168 = vector.shape_cast %167 : vector<1x32x32xf32> to vector<32x32xf32>
    %cst_74 = arith.constant 0.000000e+00 : f32
    %169 = vector.broadcast %cst_74 : f32 to vector<8x32xf32>
    %170 = vector.extract_strided_slice %158 {offsets = [0, 0], sizes = [8, 8], strides = [1, 1]} : vector<8x32xf32> to vector<8x8xf32>
    %171 = vector.shape_cast %170 : vector<8x8xf32> to vector<1x8x8xf32>
    %172 = vector.extract_strided_slice %165 {offsets = [0, 0], sizes = [10, 8], strides = [1, 1]} : vector<10x64xf32> to vector<10x8xf32>
    %173 = vector.shape_cast %172 : vector<10x8xf32> to vector<1x10x8xf32>
    %174 = vector.extract_strided_slice %165 {offsets = [0, 32], sizes = [10, 8], strides = [1, 1]} : vector<10x64xf32> to vector<10x8xf32>
    %175 = vector.shape_cast %174 : vector<10x8xf32> to vector<1x10x8xf32>
    "tpu.trace_start"() <{level = 10 : i32, message = "bqd,bkd->bqk"}> : () -> ()
    %cst_75 = arith.constant dense<0.000000e+00> : vector<1x8x10xf32>
    %176 = tpu.matmul %171, %173, %cst_75 {dimension_numbers = #tpu.dot_dimension_numbers<[2], [2], [1], [1], [0, 0, 0, 1, 1, 1], [0], [0]>} : vector<1x8x8xf32>, vector<1x10x8xf32>, vector<1x8x10xf32> -> vector<1x8x10xf32>
    "tpu.trace_stop"() : () -> ()
    %cst_76 = arith.constant 0.353553385 : f32
    %177 = vector.broadcast %cst_76 : f32 to vector<1x8x10xf32>
    %178 = arith.mulf %176, %177 : vector<1x8x10xf32>
    %179 = vector.shape_cast %166 : vector<8x10xf32> to vector<1x8x10xf32>
    %180 = arith.addf %178, %179 : vector<1x8x10xf32>
    %cst_77 = arith.constant dense<0xFF800000> : vector<1x8xf32>
    %181 = vector.multi_reduction <maximumf>, %180, %cst_77 [2] : vector<1x8x10xf32> to vector<1x8xf32>
    %182 = vector.shape_cast %181 : vector<1x8xf32> to vector<1x8x1xf32>
    %183 = vector.broadcast %182 : vector<1x8x1xf32> to vector<1x8x10xf32>
    %184 = arith.subf %180, %183 : vector<1x8x10xf32>
    %185 = math.exp %184 : vector<1x8x10xf32>
    %cst_78 = arith.constant dense<0.000000e+00> : vector<1x8xf32>
    %186 = vector.multi_reduction <add>, %185, %cst_78 [2] : vector<1x8x10xf32> to vector<1x8xf32>
    %187 = vector.shape_cast %186 : vector<1x8xf32> to vector<1x8x1xf32>
    %188 = tpu.reciprocal %187 {approx = true} : vector<1x8x1xf32> -> vector<1x8x1xf32>
    %189 = vector.broadcast %188 : vector<1x8x1xf32> to vector<1x8x10xf32>
    %190 = arith.mulf %185, %189 : vector<1x8x10xf32>
    "tpu.trace_start"() <{level = 10 : i32, message = "bqk,bkd->bqd"}> : () -> ()
    %cst_79 = arith.constant dense<0.000000e+00> : vector<1x8x8xf32>
    %191 = tpu.matmul %190, %175, %cst_79 {dimension_numbers = #tpu.dot_dimension_numbers<[2], [1], [1], [2], [0, 0, 0, 1, 1, 2], [0], [0]>} : vector<1x8x10xf32>, vector<1x10x8xf32>, vector<1x8x8xf32> -> vector<1x8x8xf32>
    "tpu.trace_stop"() : () -> ()
    %192 = vector.shape_cast %191 : vector<1x8x8xf32> to vector<8x8xf32>
    %193 = vector.extract_strided_slice %168 {offsets = [0, 0], sizes = [8, 32], strides = [1, 1]} : vector<32x32xf32> to vector<8x32xf32>
    %cst_80 = arith.constant dense<0.000000e+00> : vector<8x32xf32>
    %194 = tpu.matmul %192, %193, %cst_80 {dimension_numbers = #tpu.dot_dimension_numbers<[1], [0], [0], [1], [0, 0, 1, 1], [], []>} : vector<8x8xf32>, vector<8x32xf32>, vector<8x32xf32> -> vector<8x32xf32>
    %195 = arith.addf %169, %194 : vector<8x32xf32>
    %196 = vector.extract_strided_slice %158 {offsets = [0, 8], sizes = [8, 8], strides = [1, 1]} : vector<8x32xf32> to vector<8x8xf32>
    %197 = vector.shape_cast %196 : vector<8x8xf32> to vector<1x8x8xf32>
    %198 = vector.extract_strided_slice %165 {offsets = [0, 8], sizes = [10, 8], strides = [1, 1]} : vector<10x64xf32> to vector<10x8xf32>
    %199 = vector.shape_cast %198 : vector<10x8xf32> to vector<1x10x8xf32>
    %200 = vector.extract_strided_slice %165 {offsets = [0, 40], sizes = [10, 8], strides = [1, 1]} : vector<10x64xf32> to vector<10x8xf32>
    %201 = vector.shape_cast %200 : vector<10x8xf32> to vector<1x10x8xf32>
    "tpu.trace_start"() <{level = 10 : i32, message = "bqd,bkd->bqk"}> : () -> ()
    %cst_81 = arith.constant dense<0.000000e+00> : vector<1x8x10xf32>
    %202 = tpu.matmul %197, %199, %cst_81 {dimension_numbers = #tpu.dot_dimension_numbers<[2], [2], [1], [1], [0, 0, 0, 1, 1, 1], [0], [0]>} : vector<1x8x8xf32>, vector<1x10x8xf32>, vector<1x8x10xf32> -> vector<1x8x10xf32>
    "tpu.trace_stop"() : () -> ()
    %cst_82 = arith.constant 0.353553385 : f32
    %203 = vector.broadcast %cst_82 : f32 to vector<1x8x10xf32>
    %204 = arith.mulf %202, %203 : vector<1x8x10xf32>
    %205 = vector.shape_cast %166 : vector<8x10xf32> to vector<1x8x10xf32>
    %206 = arith.addf %204, %205 : vector<1x8x10xf32>
    %cst_83 = arith.constant dense<0xFF800000> : vector<1x8xf32>
    %207 = vector.multi_reduction <maximumf>, %206, %cst_83 [2] : vector<1x8x10xf32> to vector<1x8xf32>
    %208 = vector.shape_cast %207 : vector<1x8xf32> to vector<1x8x1xf32>
    %209 = vector.broadcast %208 : vector<1x8x1xf32> to vector<1x8x10xf32>
    %210 = arith.subf %206, %209 : vector<1x8x10xf32>
    %211 = math.exp %210 : vector<1x8x10xf32>
    %cst_84 = arith.constant dense<0.000000e+00> : vector<1x8xf32>
    %212 = vector.multi_reduction <add>, %211, %cst_84 [2] : vector<1x8x10xf32> to vector<1x8xf32>
    %213 = vector.shape_cast %212 : vector<1x8xf32> to vector<1x8x1xf32>
    %214 = tpu.reciprocal %213 {approx = true} : vector<1x8x1xf32> -> vector<1x8x1xf32>
    %215 = vector.broadcast %214 : vector<1x8x1xf32> to vector<1x8x10xf32>
    %216 = arith.mulf %211, %215 : vector<1x8x10xf32>
    "tpu.trace_start"() <{level = 10 : i32, message = "bqk,bkd->bqd"}> : () -> ()
    %cst_85 = arith.constant dense<0.000000e+00> : vector<1x8x8xf32>
    %217 = tpu.matmul %216, %201, %cst_85 {dimension_numbers = #tpu.dot_dimension_numbers<[2], [1], [1], [2], [0, 0, 0, 1, 1, 2], [0], [0]>} : vector<1x8x10xf32>, vector<1x10x8xf32>, vector<1x8x8xf32> -> vector<1x8x8xf32>
    "tpu.trace_stop"() : () -> ()
    %218 = vector.shape_cast %217 : vector<1x8x8xf32> to vector<8x8xf32>
    %219 = vector.extract_strided_slice %168 {offsets = [8, 0], sizes = [8, 32], strides = [1, 1]} : vector<32x32xf32> to vector<8x32xf32>
    %cst_86 = arith.constant dense<0.000000e+00> : vector<8x32xf32>
    %220 = tpu.matmul %218, %219, %cst_86 {dimension_numbers = #tpu.dot_dimension_numbers<[1], [0], [0], [1], [0, 0, 1, 1], [], []>} : vector<8x8xf32>, vector<8x32xf32>, vector<8x32xf32> -> vector<8x32xf32>
    %221 = arith.addf %195, %220 : vector<8x32xf32>
    %222 = vector.extract_strided_slice %158 {offsets = [0, 16], sizes = [8, 8], strides = [1, 1]} : vector<8x32xf32> to vector<8x8xf32>
    %223 = vector.shape_cast %222 : vector<8x8xf32> to vector<1x8x8xf32>
    %224 = vector.extract_strided_slice %165 {offsets = [0, 16], sizes = [10, 8], strides = [1, 1]} : vector<10x64xf32> to vector<10x8xf32>
    %225 = vector.shape_cast %224 : vector<10x8xf32> to vector<1x10x8xf32>
    %226 = vector.extract_strided_slice %165 {offsets = [0, 48], sizes = [10, 8], strides = [1, 1]} : vector<10x64xf32> to vector<10x8xf32>
    %227 = vector.shape_cast %226 : vector<10x8xf32> to vector<1x10x8xf32>
    "tpu.trace_start"() <{level = 10 : i32, message = "bqd,bkd->bqk"}> : () -> ()
    %cst_87 = arith.constant dense<0.000000e+00> : vector<1x8x10xf32>
    %228 = tpu.matmul %223, %225, %cst_87 {dimension_numbers = #tpu.dot_dimension_numbers<[2], [2], [1], [1], [0, 0, 0, 1, 1, 1], [0], [0]>} : vector<1x8x8xf32>, vector<1x10x8xf32>, vector<1x8x10xf32> -> vector<1x8x10xf32>
    "tpu.trace_stop"() : () -> ()
    %cst_88 = arith.constant 0.353553385 : f32
    %229 = vector.broadcast %cst_88 : f32 to vector<1x8x10xf32>
    %230 = arith.mulf %228, %229 : vector<1x8x10xf32>
    %231 = vector.shape_cast %166 : vector<8x10xf32> to vector<1x8x10xf32>
    %232 = arith.addf %230, %231 : vector<1x8x10xf32>
    %cst_89 = arith.constant dense<0xFF800000> : vector<1x8xf32>
    %233 = vector.multi_reduction <maximumf>, %232, %cst_89 [2] : vector<1x8x10xf32> to vector<1x8xf32>
    %234 = vector.shape_cast %233 : vector<1x8xf32> to vector<1x8x1xf32>
    %235 = vector.broadcast %234 : vector<1x8x1xf32> to vector<1x8x10xf32>
    %236 = arith.subf %232, %235 : vector<1x8x10xf32>
    %237 = math.exp %236 : vector<1x8x10xf32>
    %cst_90 = arith.constant dense<0.000000e+00> : vector<1x8xf32>
    %238 = vector.multi_reduction <add>, %237, %cst_90 [2] : vector<1x8x10xf32> to vector<1x8xf32>
    %239 = vector.shape_cast %238 : vector<1x8xf32> to vector<1x8x1xf32>
    %240 = tpu.reciprocal %239 {approx = true} : vector<1x8x1xf32> -> vector<1x8x1xf32>
    %241 = vector.broadcast %240 : vector<1x8x1xf32> to vector<1x8x10xf32>
    %242 = arith.mulf %237, %241 : vector<1x8x10xf32>
    "tpu.trace_start"() <{level = 10 : i32, message = "bqk,bkd->bqd"}> : () -> ()
    %cst_91 = arith.constant dense<0.000000e+00> : vector<1x8x8xf32>
    %243 = tpu.matmul %242, %227, %cst_91 {dimension_numbers = #tpu.dot_dimension_numbers<[2], [1], [1], [2], [0, 0, 0, 1, 1, 2], [0], [0]>} : vector<1x8x10xf32>, vector<1x10x8xf32>, vector<1x8x8xf32> -> vector<1x8x8xf32>
    "tpu.trace_stop"() : () -> ()
    %244 = vector.shape_cast %243 : vector<1x8x8xf32> to vector<8x8xf32>
    %245 = vector.extract_strided_slice %168 {offsets = [16, 0], sizes = [8, 32], strides = [1, 1]} : vector<32x32xf32> to vector<8x32xf32>
    %cst_92 = arith.constant dense<0.000000e+00> : vector<8x32xf32>
    %246 = tpu.matmul %244, %245, %cst_92 {dimension_numbers = #tpu.dot_dimension_numbers<[1], [0], [0], [1], [0, 0, 1, 1], [], []>} : vector<8x8xf32>, vector<8x32xf32>, vector<8x32xf32> -> vector<8x32xf32>
    %247 = arith.addf %221, %246 : vector<8x32xf32>
    %248 = vector.extract_strided_slice %158 {offsets = [0, 24], sizes = [8, 8], strides = [1, 1]} : vector<8x32xf32> to vector<8x8xf32>
    %249 = vector.shape_cast %248 : vector<8x8xf32> to vector<1x8x8xf32>
    %250 = vector.extract_strided_slice %165 {offsets = [0, 24], sizes = [10, 8], strides = [1, 1]} : vector<10x64xf32> to vector<10x8xf32>
    %251 = vector.shape_cast %250 : vector<10x8xf32> to vector<1x10x8xf32>
    %252 = vector.extract_strided_slice %165 {offsets = [0, 56], sizes = [10, 8], strides = [1, 1]} : vector<10x64xf32> to vector<10x8xf32>
    %253 = vector.shape_cast %252 : vector<10x8xf32> to vector<1x10x8xf32>
    "tpu.trace_start"() <{level = 10 : i32, message = "bqd,bkd->bqk"}> : () -> ()
    %cst_93 = arith.constant dense<0.000000e+00> : vector<1x8x10xf32>
    %254 = tpu.matmul %249, %251, %cst_93 {dimension_numbers = #tpu.dot_dimension_numbers<[2], [2], [1], [1], [0, 0, 0, 1, 1, 1], [0], [0]>} : vector<1x8x8xf32>, vector<1x10x8xf32>, vector<1x8x10xf32> -> vector<1x8x10xf32>
    "tpu.trace_stop"() : () -> ()
    %cst_94 = arith.constant 0.353553385 : f32
    %255 = vector.broadcast %cst_94 : f32 to vector<1x8x10xf32>
    %256 = arith.mulf %254, %255 : vector<1x8x10xf32>
    %257 = vector.shape_cast %166 : vector<8x10xf32> to vector<1x8x10xf32>
    %258 = arith.addf %256, %257 : vector<1x8x10xf32>
    %cst_95 = arith.constant dense<0xFF800000> : vector<1x8xf32>
    %259 = vector.multi_reduction <maximumf>, %258, %cst_95 [2] : vector<1x8x10xf32> to vector<1x8xf32>
    %260 = vector.shape_cast %259 : vector<1x8xf32> to vector<1x8x1xf32>
    %261 = vector.broadcast %260 : vector<1x8x1xf32> to vector<1x8x10xf32>
    %262 = arith.subf %258, %261 : vector<1x8x10xf32>
    %263 = math.exp %262 : vector<1x8x10xf32>
    %cst_96 = arith.constant dense<0.000000e+00> : vector<1x8xf32>
    %264 = vector.multi_reduction <add>, %263, %cst_96 [2] : vector<1x8x10xf32> to vector<1x8xf32>
    %265 = vector.shape_cast %264 : vector<1x8xf32> to vector<1x8x1xf32>
    %266 = tpu.reciprocal %265 {approx = true} : vector<1x8x1xf32> -> vector<1x8x1xf32>
    %267 = vector.broadcast %266 : vector<1x8x1xf32> to vector<1x8x10xf32>
    %268 = arith.mulf %263, %267 : vector<1x8x10xf32>
    "tpu.trace_start"() <{level = 10 : i32, message = "bqk,bkd->bqd"}> : () -> ()
    %cst_97 = arith.constant dense<0.000000e+00> : vector<1x8x8xf32>
    %269 = tpu.matmul %268, %253, %cst_97 {dimension_numbers = #tpu.dot_dimension_numbers<[2], [1], [1], [2], [0, 0, 0, 1, 1, 2], [0], [0]>} : vector<1x8x10xf32>, vector<1x10x8xf32>, vector<1x8x8xf32> -> vector<1x8x8xf32>
    "tpu.trace_stop"() : () -> ()
    %270 = vector.shape_cast %269 : vector<1x8x8xf32> to vector<8x8xf32>
    %271 = vector.extract_strided_slice %168 {offsets = [24, 0], sizes = [8, 32], strides = [1, 1]} : vector<32x32xf32> to vector<8x32xf32>
    %cst_98 = arith.constant dense<0.000000e+00> : vector<8x32xf32>
    %272 = tpu.matmul %270, %271, %cst_98 {dimension_numbers = #tpu.dot_dimension_numbers<[1], [0], [0], [1], [0, 0, 1, 1], [], []>} : vector<8x8xf32>, vector<8x32xf32>, vector<8x32xf32> -> vector<8x32xf32>
    %273 = arith.addf %247, %272 : vector<8x32xf32>
    %c0_99 = arith.constant 0 : index
    %c0_100 = arith.constant 0 : index
    %c0_101 = arith.constant 0 : index
    %274 = vector.load %arg15[%c0_99, %c0_100, %c0_101] : memref<1x1x32xf32, #tpu.memory_space<vmem>>, vector<1x1x32xf32>
    %275 = vector.shape_cast %274 : vector<1x1x32xf32> to vector<1x32xf32>
    %276 = vector.broadcast %275 : vector<1x32xf32> to vector<8x32xf32>
    %277 = arith.addf %273, %276 : vector<8x32xf32>
    %278 = arith.addf %151, %277 : vector<8x32xf32>
    %c0_102 = arith.constant 0 : index
    %c0_103 = arith.constant 0 : index
    %c0_104 = arith.constant 0 : index
    %279 = vector.load %arg22[%c0_102, %c0_103, %c0_104] : memref<1x1x32xf32, #tpu.memory_space<vmem>>, vector<1x1x32xf32>
    %280 = vector.shape_cast %279 : vector<1x1x32xf32> to vector<1x32xf32>
    %c0_105 = arith.constant 0 : index
    %c0_106 = arith.constant 0 : index
    %c0_107 = arith.constant 0 : index
    %281 = vector.load %arg23[%c0_105, %c0_106, %c0_107] : memref<1x1x32xf32, #tpu.memory_space<vmem>>, vector<1x1x32xf32>
    %282 = vector.shape_cast %281 : vector<1x1x32xf32> to vector<1x32xf32>
    %cst_108 = arith.constant dense<0.000000e+00> : vector<8xf32>
    %283 = vector.multi_reduction <add>, %278, %cst_108 [1] : vector<8x32xf32> to vector<8xf32>
    %284 = vector.shape_cast %283 : vector<8xf32> to vector<8x1xf32>
    %cst_109 = arith.constant 3.200000e+01 : f32
    %285 = vector.broadcast %cst_109 : f32 to vector<8x1xf32>
    %286 = arith.divf %284, %285 : vector<8x1xf32>
    %287 = vector.broadcast %286 : vector<8x1xf32> to vector<8x32xf32>
    %288 = arith.subf %278, %287 : vector<8x32xf32>
    %289 = arith.mulf %288, %288 : vector<8x32xf32>
    %cst_110 = arith.constant dense<0.000000e+00> : vector<8xf32>
    %290 = vector.multi_reduction <add>, %289, %cst_110 [1] : vector<8x32xf32> to vector<8xf32>
    %291 = vector.shape_cast %290 : vector<8xf32> to vector<8x1xf32>
    %cst_111 = arith.constant 3.200000e+01 : f32
    %292 = vector.broadcast %cst_111 : f32 to vector<8x1xf32>
    %293 = arith.divf %291, %292 : vector<8x1xf32>
    %294 = vector.broadcast %286 : vector<8x1xf32> to vector<8x32xf32>
    %295 = arith.subf %278, %294 : vector<8x32xf32>
    %cst_112 = arith.constant 9.99999974E-6 : f32
    %296 = vector.broadcast %cst_112 : f32 to vector<8x1xf32>
    %297 = arith.addf %293, %296 : vector<8x1xf32>
    %298 = math.rsqrt %297 : vector<8x1xf32>
    %299 = vector.broadcast %298 : vector<8x1xf32> to vector<8x32xf32>
    %300 = arith.mulf %295, %299 : vector<8x32xf32>
    %301 = vector.broadcast %280 : vector<1x32xf32> to vector<8x32xf32>
    %302 = arith.mulf %300, %301 : vector<8x32xf32>
    %303 = vector.broadcast %282 : vector<1x32xf32> to vector<8x32xf32>
    %304 = arith.addf %302, %303 : vector<8x32xf32>
    %c0_113 = arith.constant 0 : index
    %c0_114 = arith.constant 0 : index
    %c0_115 = arith.constant 0 : index
    %305 = vector.load %arg16[%c0_113, %c0_114, %c0_115] : memref<1x32x64xf32, #tpu.memory_space<vmem>>, vector<1x32x64xf32>
    %306 = vector.shape_cast %305 : vector<1x32x64xf32> to vector<32x64xf32>
    %cst_116 = arith.constant dense<0.000000e+00> : vector<8x64xf32>
    %307 = tpu.matmul %304, %306, %cst_116 {dimension_numbers = #tpu.dot_dimension_numbers<[1], [0], [0], [1], [0, 0, 1, 1], [], []>} : vector<8x32xf32>, vector<32x64xf32>, vector<8x64xf32> -> vector<8x64xf32>
    %c0_117 = arith.constant 0 : index
    %c0_118 = arith.constant 0 : index
    %c0_119 = arith.constant 0 : index
    %308 = vector.load %arg17[%c0_117, %c0_118, %c0_119] : memref<1x1x64xf32, #tpu.memory_space<vmem>>, vector<1x1x64xf32>
    %309 = vector.shape_cast %308 : vector<1x1x64xf32> to vector<1x64xf32>
    %310 = vector.broadcast %309 : vector<1x64xf32> to vector<8x64xf32>
    %311 = arith.addf %307, %310 : vector<8x64xf32>
    %cst_120 = arith.constant 0.000000e+00 : f32
    %312 = vector.broadcast %cst_120 : f32 to vector<8x64xf32>
    %313 = arith.maximumf %311, %312 : vector<8x64xf32>
    %c0_121 = arith.constant 0 : index
    %c0_122 = arith.constant 0 : index
    %c0_123 = arith.constant 0 : index
    %314 = vector.load %arg18[%c0_121, %c0_122, %c0_123] : memref<1x64x32xf32, #tpu.memory_space<vmem>>, vector<1x64x32xf32>
    %315 = vector.shape_cast %314 : vector<1x64x32xf32> to vector<64x32xf32>
    %cst_124 = arith.constant dense<0.000000e+00> : vector<8x32xf32>
    %316 = tpu.matmul %313, %315, %cst_124 {dimension_numbers = #tpu.dot_dimension_numbers<[1], [0], [0], [1], [0, 0, 1, 1], [], []>} : vector<8x64xf32>, vector<64x32xf32>, vector<8x32xf32> -> vector<8x32xf32>
    %c0_125 = arith.constant 0 : index
    %c0_126 = arith.constant 0 : index
    %c0_127 = arith.constant 0 : index
    %317 = vector.load %arg19[%c0_125, %c0_126, %c0_127] : memref<1x1x32xf32, #tpu.memory_space<vmem>>, vector<1x1x32xf32>
    %318 = vector.shape_cast %317 : vector<1x1x32xf32> to vector<1x32xf32>
    %319 = vector.broadcast %318 : vector<1x32xf32> to vector<8x32xf32>
    %320 = arith.addf %316, %319 : vector<8x32xf32>
    %321 = arith.addf %304, %320 : vector<8x32xf32>
    %c0_128 = arith.constant 0 : index
    %c0_129 = arith.constant 0 : index
    %c0_130 = arith.constant 0 : index
    %322 = vector.load %arg24[%c0_128, %c0_129, %c0_130] : memref<1x1x32xf32, #tpu.memory_space<vmem>>, vector<1x1x32xf32>
    %323 = vector.shape_cast %322 : vector<1x1x32xf32> to vector<1x32xf32>
    %c0_131 = arith.constant 0 : index
    %c0_132 = arith.constant 0 : index
    %c0_133 = arith.constant 0 : index
    %324 = vector.load %arg25[%c0_131, %c0_132, %c0_133] : memref<1x1x32xf32, #tpu.memory_space<vmem>>, vector<1x1x32xf32>
    %325 = vector.shape_cast %324 : vector<1x1x32xf32> to vector<1x32xf32>
    %cst_134 = arith.constant dense<0.000000e+00> : vector<8xf32>
    %326 = vector.multi_reduction <add>, %321, %cst_134 [1] : vector<8x32xf32> to vector<8xf32>
    %327 = vector.shape_cast %326 : vector<8xf32> to vector<8x1xf32>
    %cst_135 = arith.constant 3.200000e+01 : f32
    %328 = vector.broadcast %cst_135 : f32 to vector<8x1xf32>
    %329 = arith.divf %327, %328 : vector<8x1xf32>
    %330 = vector.broadcast %329 : vector<8x1xf32> to vector<8x32xf32>
    %331 = arith.subf %321, %330 : vector<8x32xf32>
    %332 = arith.mulf %331, %331 : vector<8x32xf32>
    %cst_136 = arith.constant dense<0.000000e+00> : vector<8xf32>
    %333 = vector.multi_reduction <add>, %332, %cst_136 [1] : vector<8x32xf32> to vector<8xf32>
    %334 = vector.shape_cast %333 : vector<8xf32> to vector<8x1xf32>
    %cst_137 = arith.constant 3.200000e+01 : f32
    %335 = vector.broadcast %cst_137 : f32 to vector<8x1xf32>
    %336 = arith.divf %334, %335 : vector<8x1xf32>
    %337 = vector.broadcast %329 : vector<8x1xf32> to vector<8x32xf32>
    %338 = arith.subf %321, %337 : vector<8x32xf32>
    %cst_138 = arith.constant 9.99999974E-6 : f32
    %339 = vector.broadcast %cst_138 : f32 to vector<8x1xf32>
    %340 = arith.addf %336, %339 : vector<8x1xf32>
    %341 = math.rsqrt %340 : vector<8x1xf32>
    %342 = vector.broadcast %341 : vector<8x1xf32> to vector<8x32xf32>
    %343 = arith.mulf %338, %342 : vector<8x32xf32>
    %344 = vector.broadcast %323 : vector<1x32xf32> to vector<8x32xf32>
    %345 = arith.mulf %343, %344 : vector<8x32xf32>
    %346 = vector.broadcast %325 : vector<1x32xf32> to vector<8x32xf32>
    %347 = arith.addf %345, %346 : vector<8x32xf32>
    %c0_139 = arith.constant 0 : index
    %c0_140 = arith.constant 0 : index
    %348 = vector.load %arg29[%c0_139, %c0_140] : memref<8x32xf32, #tpu.memory_space<vmem>>, vector<8x32xf32>
    tpu.vector_store %arg29[%c0_139, %c0_140], %347 {strides = array<i32>} : memref<8x32xf32, #tpu.memory_space<vmem>>, vector<8x32xf32>,
    %c1_i32 = arith.constant 1 : i32
    %349 = arith.cmpi eq, %arg1, %c1_i32 : i32
    %350 = arith.extui %349 : i1 to i32
    %c0_i32_141 = arith.constant 0 : i32
    %351 = arith.cmpi ne, %350, %c0_i32_141 : i32
    scf.if %351 {
      %c0_142 = arith.constant 0 : index
      %c0_143 = arith.constant 0 : index
      %352 = vector.load %arg26[%c0_142, %c0_143] : memref<1x32xf32, #tpu.memory_space<vmem>>, vector<1x32xf32>
      %c0_144 = arith.constant 0 : index
      %c0_145 = arith.constant 0 : index
      %353 = vector.load %arg27[%c0_144, %c0_145] : memref<1x32xf32, #tpu.memory_space<vmem>>, vector<1x32xf32>
      %cst_146 = arith.constant dense<0.000000e+00> : vector<8xf32>
      %354 = vector.multi_reduction <add>, %347, %cst_146 [1] : vector<8x32xf32> to vector<8xf32>
      %355 = vector.shape_cast %354 : vector<8xf32> to vector<8x1xf32>
      %cst_147 = arith.constant 3.200000e+01 : f32
      %356 = vector.broadcast %cst_147 : f32 to vector<8x1xf32>
      %357 = arith.divf %355, %356 : vector<8x1xf32>
      %358 = vector.broadcast %357 : vector<8x1xf32> to vector<8x32xf32>
      %359 = arith.subf %347, %358 : vector<8x32xf32>
      %360 = arith.mulf %359, %359 : vector<8x32xf32>
      %cst_148 = arith.constant dense<0.000000e+00> : vector<8xf32>
      %361 = vector.multi_reduction <add>, %360, %cst_148 [1] : vector<8x32xf32> to vector<8xf32>
      %362 = vector.shape_cast %361 : vector<8xf32> to vector<8x1xf32>
      %cst_149 = arith.constant 3.200000e+01 : f32
      %363 = vector.broadcast %cst_149 : f32 to vector<8x1xf32>
      %364 = arith.divf %362, %363 : vector<8x1xf32>
      %365 = vector.broadcast %357 : vector<8x1xf32> to vector<8x32xf32>
      %366 = arith.subf %347, %365 : vector<8x32xf32>
      %cst_150 = arith.constant 9.99999974E-6 : f32
      %367 = vector.broadcast %cst_150 : f32 to vector<8x1xf32>
      %368 = arith.addf %364, %367 : vector<8x1xf32>
      %369 = math.rsqrt %368 : vector<8x1xf32>
      %370 = vector.broadcast %369 : vector<8x1xf32> to vector<8x32xf32>
      %371 = arith.mulf %366, %370 : vector<8x32xf32>
      %372 = vector.broadcast %352 : vector<1x32xf32> to vector<8x32xf32>
      %373 = arith.mulf %371, %372 : vector<8x32xf32>
      %374 = vector.broadcast %353 : vector<1x32xf32> to vector<8x32xf32>
      %375 = arith.addf %373, %374 : vector<8x32xf32>
      %376 = vector.shape_cast %375 : vector<8x32xf32> to vector<1x8x32xf32>
      %c0_151 = arith.constant 0 : index
      %c0_152 = arith.constant 0 : index
      %c0_153 = arith.constant 0 : index
      %377 = vector.load %arg28[%c0_151, %c0_152, %c0_153] : memref<1x8x32xf32, #tpu.memory_space<vmem>>, vector<1x8x32xf32>
      tpu.vector_store %arg28[%c0_151, %c0_152, %c0_153], %376 {strides = array<i32>} : memref<1x8x32xf32, #tpu.memory_space<vmem>>, vector<1x8x32xf32>,
    } else {
    }
    return
  }
  func.func @transform_0(%arg0: i32, %arg1: i32) -> (i32, i32, i32) {
    %c0_i32 = arith.constant 0 : i32
    %c0_i32_0 = arith.constant 0 : i32
    %c0_i32_1 = arith.constant 0 : i32
    return %arg0, %c0_i32, %c0_i32_0 : i32, i32, i32
  }
  func.func @transform_1(%arg0: i32, %arg1: i32) -> (i32, i32, i32) {
    %c0_i32 = arith.constant 0 : i32
    %c0_i32_0 = arith.constant 0 : i32
    %c0_i32_1 = arith.constant 0 : i32
    return %arg0, %c0_i32, %c0_i32_0 : i32, i32, i32
  }
  func.func @transform_2(%arg0: i32, %arg1: i32) -> (i32, i32) {
    %c0_i32 = arith.constant 0 : i32
    %c0_i32_0 = arith.constant 0 : i32
    %c0_i32_1 = arith.constant 0 : i32
    return %c0_i32, %c0_i32_0 : i32, i32
  }
  func.func @transform_3(%arg0: i32, %arg1: i32) -> (i32, i32) {
    %c0_i32 = arith.constant 0 : i32
    %c0_i32_0 = arith.constant 0 : i32
    %c0_i32_1 = arith.constant 0 : i32
    return %c0_i32, %c0_i32_0 : i32, i32
  }
  func.func @transform_4(%arg0: i32, %arg1: i32) -> (i32, i32, i32) {
    %c0_i32 = arith.constant 0 : i32
    %c0_i32_0 = arith.constant 0 : i32
    %c0_i32_1 = arith.constant 0 : i32
    return %arg1, %c0_i32, %c0_i32_0 : i32, i32, i32
  }
  func.func @transform_5(%arg0: i32, %arg1: i32) -> (i32, i32, i32) {
    %c0_i32 = arith.constant 0 : i32
    %c0_i32_0 = arith.constant 0 : i32
    %c0_i32_1 = arith.constant 0 : i32
    return %arg1, %c0_i32, %c0_i32_0 : i32, i32, i32
  }
  func.func @transform_6(%arg0: i32, %arg1: i32) -> (i32, i32, i32) {
    %c0_i32 = arith.constant 0 : i32
    %c0_i32_0 = arith.constant 0 : i32
    %c0_i32_1 = arith.constant 0 : i32
    return %arg1, %c0_i32, %c0_i32_0 : i32, i32, i32
  }
  func.func @transform_7(%arg0: i32, %arg1: i32) -> (i32, i32, i32) {
    %c0_i32 = arith.constant 0 : i32
    %c0_i32_0 = arith.constant 0 : i32
    %c0_i32_1 = arith.constant 0 : i32
    return %arg1, %c0_i32, %c0_i32_0 : i32, i32, i32
  }
  func.func @transform_8(%arg0: i32, %arg1: i32) -> (i32, i32, i32) {
    %c0_i32 = arith.constant 0 : i32
    %c0_i32_0 = arith.constant 0 : i32
    %c0_i32_1 = arith.constant 0 : i32
    return %arg1, %c0_i32, %c0_i32_0 : i32, i32, i32
  }
  func.func @transform_9(%arg0: i32, %arg1: i32) -> (i32, i32, i32) {
    %c0_i32 = arith.constant 0 : i32
    %c0_i32_0 = arith.constant 0 : i32
    %c0_i32_1 = arith.constant 0 : i32
    return %arg1, %c0_i32, %c0_i32_0 : i32, i32, i32
  }
  func.func @transform_10(%arg0: i32, %arg1: i32) -> (i32, i32, i32) {
    %c0_i32 = arith.constant 0 : i32
    %c0_i32_0 = arith.constant 0 : i32
    %c0_i32_1 = arith.constant 0 : i32
    return %arg1, %c0_i32, %c0_i32_0 : i32, i32, i32
  }
  func.func @transform_11(%arg0: i32, %arg1: i32) -> (i32, i32, i32) {
    %c0_i32 = arith.constant 0 : i32
    %c0_i32_0 = arith.constant 0 : i32
    %c0_i32_1 = arith.constant 0 : i32
    return %arg1, %c0_i32, %c0_i32_0 : i32, i32, i32
  }
  func.func @transform_12(%arg0: i32, %arg1: i32) -> (i32, i32, i32) {
    %c0_i32 = arith.constant 0 : i32
    %c0_i32_0 = arith.constant 0 : i32
    %c0_i32_1 = arith.constant 0 : i32
    return %arg1, %c0_i32, %c0_i32_0 : i32, i32, i32
  }
  func.func @transform_13(%arg0: i32, %arg1: i32) -> (i32, i32, i32) {
    %c0_i32 = arith.constant 0 : i32
    %c0_i32_0 = arith.constant 0 : i32
    %c0_i32_1 = arith.constant 0 : i32
    return %arg1, %c0_i32, %c0_i32_0 : i32, i32, i32
  }
  func.func @transform_14(%arg0: i32, %arg1: i32) -> (i32, i32, i32) {
    %c0_i32 = arith.constant 0 : i32
    %c0_i32_0 = arith.constant 0 : i32
    %c0_i32_1 = arith.constant 0 : i32
    return %arg1, %c0_i32, %c0_i32_0 : i32, i32, i32
  }
  func.func @transform_15(%arg0: i32, %arg1: i32) -> (i32, i32, i32) {
    %c0_i32 = arith.constant 0 : i32
    %c0_i32_0 = arith.constant 0 : i32
    %c0_i32_1 = arith.constant 0 : i32
    return %arg1, %c0_i32, %c0_i32_0 : i32, i32, i32
  }
  func.func @transform_16(%arg0: i32, %arg1: i32) -> (i32, i32, i32) {
    %c0_i32 = arith.constant 0 : i32
    %c0_i32_0 = arith.constant 0 : i32
    %c0_i32_1 = arith.constant 0 : i32
    return %arg1, %c0_i32, %c0_i32_0 : i32, i32, i32
  }
  func.func @transform_17(%arg0: i32, %arg1: i32) -> (i32, i32, i32) {
    %c0_i32 = arith.constant 0 : i32
    %c0_i32_0 = arith.constant 0 : i32
    %c0_i32_1 = arith.constant 0 : i32
    return %arg1, %c0_i32, %c0_i32_0 : i32, i32, i32
  }
  func.func @transform_18(%arg0: i32, %arg1: i32) -> (i32, i32, i32) {
    %c0_i32 = arith.constant 0 : i32
    %c0_i32_0 = arith.constant 0 : i32
    %c0_i32_1 = arith.constant 0 : i32
    return %arg1, %c0_i32, %c0_i32_0 : i32, i32, i32
  }
  func.func @transform_19(%arg0: i32, %arg1: i32) -> (i32, i32, i32) {
    %c0_i32 = arith.constant 0 : i32
    %c0_i32_0 = arith.constant 0 : i32
    %c0_i32_1 = arith.constant 0 : i32
    return %arg1, %c0_i32, %c0_i32_0 : i32, i32, i32
  }
  func.func @transform_20(%arg0: i32, %arg1: i32) -> (i32, i32, i32) {
    %c0_i32 = arith.constant 0 : i32
    %c0_i32_0 = arith.constant 0 : i32
    %c0_i32_1 = arith.constant 0 : i32
    return %arg1, %c0_i32, %c0_i32_0 : i32, i32, i32
  }
  func.func @transform_21(%arg0: i32, %arg1: i32) -> (i32, i32, i32) {
    %c0_i32 = arith.constant 0 : i32
    %c0_i32_0 = arith.constant 0 : i32
    %c0_i32_1 = arith.constant 0 : i32
    return %arg1, %c0_i32, %c0_i32_0 : i32, i32, i32
  }
  func.func @transform_22(%arg0: i32, %arg1: i32) -> (i32, i32, i32) {
    %c0_i32 = arith.constant 0 : i32
    %c0_i32_0 = arith.constant 0 : i32
    %c0_i32_1 = arith.constant 0 : i32
    return %arg1, %c0_i32, %c0_i32_0 : i32, i32, i32
  }
  func.func @transform_23(%arg0: i32, %arg1: i32) -> (i32, i32, i32) {
    %c0_i32 = arith.constant 0 : i32
    %c0_i32_0 = arith.constant 0 : i32
    %c0_i32_1 = arith.constant 0 : i32
    return %arg1, %c0_i32, %c0_i32_0 : i32, i32, i32
  }
  func.func @transform_24(%arg0: i32, %arg1: i32) -> (i32, i32) {
    %c0_i32 = arith.constant 0 : i32
    %c0_i32_0 = arith.constant 0 : i32
    %c0_i32_1 = arith.constant 0 : i32
    return %c0_i32, %c0_i32_0 : i32, i32
  }
  func.func @transform_25(%arg0: i32, %arg1: i32) -> (i32, i32) {
    %c0_i32 = arith.constant 0 : i32
    %c0_i32_0 = arith.constant 0 : i32
    %c0_i32_1 = arith.constant 0 : i32
    return %c0_i32, %c0_i32_0 : i32, i32
  }
  func.func @transform_26(%arg0: i32, %arg1: i32) -> (i32, i32, i32) {
    %c0_i32 = arith.constant 0 : i32
    %c0_i32_0 = arith.constant 0 : i32
    %c0_i32_1 = arith.constant 0 : i32
    return %arg0, %c0_i32, %c0_i32_0 : i32, i32, i32
  }
}

</mosaic_0001>

<llo_original>
// kernel: tpu_custom_call.1
$region0: #{tpu_custom_call.1}
  #allocation0 [shape = 'u32[]', space=smem, size = 0x4, offset = 0x4, fixed_abs, tag = 'smem constant byte address 0x4 - core index']
  #allocation1 [shape = 'u32[144,128]{1,0:T(1,128)}', space=vmem, size = 0x12000, scoped, tag = 'internal scratch']
  #allocation2 [shape = 'f32[8,32]{1,0:T(8,128)}', space=vmem, size = 0x1000, scoped, tag = 'scratch operand']
  %s0 = inlined_call_operand.vmem [shape: f32[2,8,32], index: 0, kind: input, shape index: {}]
  %s1 = inlined_call_operand.vmem [shape: f32[2,10,32], index: 1, kind: input, shape index: {}]
  %s2 = inlined_call_operand.vmem [shape: f32[8,8], index: 2, kind: input, shape index: {}]
  %s3 = inlined_call_operand.vmem [shape: f32[8,10], index: 3, kind: input, shape index: {}]
  %s4 = inlined_call_operand.vmem [shape: f32[2,32,96], index: 4, kind: input, shape index: {}]
  %s5 = inlined_call_operand.vmem [shape: f32[2,1,96], index: 5, kind: input, shape index: {}]
  %s6 = inlined_call_operand.vmem [shape: f32[2,32,32], index: 6, kind: input, shape index: {}]
  %s7 = inlined_call_operand.vmem [shape: f32[2,1,32], index: 7, kind: input, shape index: {}]
  %s8 = inlined_call_operand.vmem [shape: f32[2,32,32], index: 8, kind: input, shape index: {}]
  %s9 = inlined_call_operand.vmem [shape: f32[2,1,32], index: 9, kind: input, shape index: {}]
  %s10 = inlined_call_operand.hbm [shape: f32[2,32,64], index: 10, kind: input, shape index: {}]
  %s11 = inlined_call_operand.vmem [shape: f32[2,1,64], index: 11, kind: input, shape index: {}]
  %s12 = inlined_call_operand.hbm [shape: f32[2,32,32], index: 12, kind: input, shape index: {}]
  %s13 = inlined_call_operand.vmem [shape: f32[2,1,32], index: 13, kind: input, shape index: {}]
  %s14 = inlined_call_operand.hbm [shape: f32[2,32,64], index: 14, kind: input, shape index: {}]
  %s15 = inlined_call_operand.vmem [shape: f32[2,1,64], index: 15, kind: input, shape index: {}]
  %s16 = inlined_call_operand.vmem [shape: f32[2,64,32], index: 16, kind: input, shape index: {}]
  %s17 = inlined_call_operand.vmem [shape: f32[2,1,32], index: 17, kind: input, shape index: {}]
  %s18 = inlined_call_operand.vmem [shape: f32[2,1,32], index: 18, kind: input, shape index: {}]
  %s19 = inlined_call_operand.vmem [shape: f32[2,1,32], index: 19, kind: input, shape index: {}]
  %s20 = inlined_call_operand.vmem [shape: f32[2,1,32], index: 20, kind: input, shape index: {}]
  %s21 = inlined_call_operand.vmem [shape: f32[2,1,32], index: 21, kind: input, shape index: {}]
  %s22 = inlined_call_operand.vmem [shape: f32[2,1,32], index: 22, kind: input, shape index: {}]
  %s23 = inlined_call_operand.vmem [shape: f32[2,1,32], index: 23, kind: input, shape index: {}]
  %s24 = inlined_call_operand.vmem [shape: f32[1,32], index: 24, kind: input, shape index: {}]
  %s25 = inlined_call_operand.vmem [shape: f32[1,32], index: 25, kind: input, shape index: {}]
  %s26 = inlined_call_operand.hbm [shape: f32[2,8,32], index: 26, kind: output, shape index: {}]
  %s27 = sld [smem:[#allocation0]]
  $region157: #{tpu_custom_call.1} parent=0
    _
  %s29 = ssub.s32 1, %s27
  %s30 = scalar_select 0, %s29, %s27
  $region1: #{tpu_custom_call.1} parent=0
    #allocation3 [shape = 'u8[32768]{0}', space=vmem, size = 0x8000, scoped, tag = 'input window, operand 10']
    #allocation4 [shape = 's32[2]{0}', space=sflag, size = 0x8, scoped, tag = 'scoped memory for tpu_custom_call.1']
    #allocation5 [shape = 's32[2]{0}', space=sflag, size = 0x8, scoped, tag = 'scoped memory for tpu_custom_call.1']
    #allocation6 [shape = 'u8[32768]{0}', space=vmem, size = 0x8000, scoped, tag = 'input window, operand 12']
    #allocation7 [shape = 's32[2]{0}', space=sflag, size = 0x8, scoped, tag = 'scoped memory for tpu_custom_call.1']
    #allocation8 [shape = 'u8[32768]{0}', space=vmem, size = 0x8000, scoped, tag = 'input window, operand 14']
    #allocation9 [shape = 'u8[8192]{0}', space=vmem, size = 0x2000, scoped, tag = 'output window, operand 0']
    %31 = vsyncpa [#allocation4], 0
    %s32 = scalar_lea.sflag [#allocation4], 1
    %33 = vsyncpa %s32, 0
    %34 = vsyncpa [#allocation7], 0
    %s35 = scalar_lea.sflag [#allocation7], 1
    %36 = vsyncpa %s35, 0
    %37 = vsyncpa [#allocation5], 0
    %s38 = scalar_lea.sflag [#allocation5], 1
    %39 = vsyncpa %s38, 0
    loop: start=0, step=1, limit=6
    $region2: #{tpu_custom_call.1} parent=1 // loop_pre_header
      _
    $region3: #{tpu_custom_call.1} parent=1 // loop_header
      %s41 = sphi 0, %s45
      %p42 = scmp.ge.s32.totalorder %s41, 6
      %s48 = sphi 0, %s60
      %s49 = sphi 0, %s56
      %s50 = sphi 0, %s48
      %s51 = sphi 0, %s49
      %s52 = sphi 0, %s50
      %s53 = sphi 0, %s51
      %s63 = sphi 0, %s65
      %s66 = sphi 0, %s63
      %s67 = sphi 0, %s66
      %s83 = sphi 0, %s67
      %s89 = sphi 0, %s91
      %s92 = sphi 0, %s89
      %s93 = sphi 0, %s92
      %s109 = sphi 0, %s93
      %s113 = sphi 0, %s113
      %s115 = sphi 0, %s113
      %s116 = sphi 0, %s115
      %s130 = sphi 0, %s116
      %s134 = sphi 0, %s134
      %s136 = sphi 0, %s134
      %s137 = sphi 0, %s136
      %s151 = sphi 0, %s137
      %s157 = sphi 0, %s159
      %s160 = sphi 0, %s157
      %s161 = sphi 0, %s160
      %s177 = sphi 0, %s161
      %s183 = sphi 0, %s185
      %s186 = sphi 0, %s183
      %s187 = sphi 0, %s186
      %s203 = sphi 0, %s187
      %s209 = sphi 0, %s211
      %s212 = sphi 0, %s209
      %s213 = sphi 0, %s212
      %s229 = sphi 0, %s213
      %s235 = sphi 0, %s237
      %s238 = sphi 0, %s235
      %s239 = sphi 0, %s238
      %s255 = sphi 0, %s239
      %s261 = sphi 0, %s263
      %s264 = sphi 0, %s261
      %s265 = sphi 0, %s264
      %s281 = sphi 0, %s265
      %s287 = sphi 0, %s289
      %s290 = sphi 0, %s287
      %s291 = sphi 0, %s290
      %s307 = sphi 0, %s291
      %s313 = sphi 0, %s315
      %s316 = sphi 0, %s313
      %s317 = sphi 0, %s316
      %s333 = sphi 0, %s317
      %s339 = sphi 0, %s341
      %s342 = sphi 0, %s339
      %s343 = sphi 0, %s342
      %s359 = sphi 0, %s343
      %s365 = sphi 0, %s367
      %s368 = sphi 0, %s365
      %s369 = sphi 0, %s368
      %s385 = sphi 0, %s369
      %s391 = sphi 0, %s393
      %s394 = sphi 0, %s391
      %s395 = sphi 0, %s394
      %s411 = sphi 0, %s395
      %s417 = sphi 0, %s419
      %s420 = sphi 0, %s417
      %s421 = sphi 0, %s420
      %s437 = sphi 0, %s421
      %s443 = sphi 0, %s445
      %s446 = sphi 0, %s443
      %s447 = sphi 0, %s446
      %s463 = sphi 0, %s447
      %s469 = sphi 0, %s471
      %s472 = sphi 0, %s469
      %s473 = sphi 0, %s472
      %s489 = sphi 0, %s473
      %s495 = sphi 0, %s497
      %s498 = sphi 0, %s495
      %s499 = sphi 0, %s498
      %s515 = sphi 0, %s499
      %s521 = sphi 0, %s523
      %s524 = sphi 0, %s521
      %s525 = sphi 0, %s524
      %s541 = sphi 0, %s525
      %s547 = sphi 0, %s549
      %s550 = sphi 0, %s547
      %s551 = sphi 0, %s550
      %s567 = sphi 0, %s551
      %s573 = sphi 0, %s575
      %s576 = sphi 0, %s573
      %s577 = sphi 0, %s576
      %s593 = sphi 0, %s577
      %s599 = sphi 0, %s601
      %s602 = sphi 0, %s599
      %s603 = sphi 0, %s602
      %s619 = sphi 0, %s603
      %s625 = sphi 0, %s627
      %s628 = sphi 0, %s625
      %s629 = sphi 0, %s628
      %s645 = sphi 0, %s629
      %s651 = sphi 0, %s653
      %s654 = sphi 0, %s651
      %s655 = sphi 0, %s654
      %s671 = sphi 0, %s655
      %s675 = sphi 0, %s675
      %s677 = sphi 0, %s675
      %s678 = sphi 0, %s677
      %s692 = sphi 0, %s678
      %s696 = sphi 0, %s696
      %s698 = sphi 0, %s696
      %s699 = sphi 0, %s698
      %s713 = sphi 0, %s699
      %s719 = sphi 0, %s721
      %s722 = sphi 0, %s719
      %s723 = sphi 0, %s722
      %s739 = sphi 0, %s723
    $region4: #{tpu_custom_call.1} parent=1 // loop_header_branch
      %44 = sbr.rel (%p42) target = $region8
    $region5: #{tpu_custom_call.1} parent=1 // loop_body
      %s46 = ssub.s32 %s41, 1
      %s47 = ssub.s32 %s41, 2
      %s54 = sadd.s32 1, %s49
      %p55 = scmp.ge.s32.totalorder %s54, 2
      %s56 = scalar_select %p55, 0, %s54
      %s57 = sadd.s32 1, %s48
      %s58 = scalar_select %p55, %s57, %s48
      %p59 = scmp.ge.s32.totalorder %s58, 2
      %s60 = scalar_select %p59, 0, %s58
      %s61 = ssub.s32 %s48, %s60
      %p62 = scmp.eq.s32.totalorder %s61, 0
      %s64 = sadd.s32 %s63, 1
      %s65 = scalar_select %p62, %s63, %s64
      %p68 = pneg %p62
      %p69 = scmp.eq.s32.totalorder %s41, 3
      %p70 = por %p68, %p69
      %p71 = scmp.ne.s32.totalorder %s63, %s66
      %p72 = scmp.eq.s32.totalorder %s41, 0
      %p73 = por %p71, %p72
      %p74 = scmp.ne.s32.totalorder %s63, %s66
      %p75 = scmp.eq.s32.totalorder %s46, 3
      %p76 = por %p74, %p75
      %p77 = scmp.ne.s32.totalorder %s66, %s67
      %p78 = scmp.eq.s32.totalorder %s46, 0
      %p79 = por %p77, %p78
      %p80 = scmp.ne.s32.totalorder %s66, %s67
      %p81 = scmp.eq.s32.totalorder %s47, 3
      %p82 = por %p80, %p81
      %p84 = scmp.ne.s32.totalorder %s67, %s83
      %p85 = scmp.eq.s32.totalorder %s47, 0
      %p86 = por %p84, %p85
      %s87 = ssub.s32 %s48, %s60
      %p88 = scmp.eq.s32.totalorder %s87, 0
      %s90 = sadd.s32 %s89, 1
      %s91 = scalar_select %p88, %s89, %s90
      %p94 = pneg %p88
      %p95 = scmp.eq.s32.totalorder %s41, 3
      %p96 = por %p94, %p95
      %p97 = scmp.ne.s32.totalorder %s89, %s92
      %p98 = scmp.eq.s32.totalorder %s41, 0
      %p99 = por %p97, %p98
      %p100 = scmp.ne.s32.totalorder %s89, %s92
      %p101 = scmp.eq.s32.totalorder %s46, 3
      %p102 = por %p100, %p101
      %p103 = scmp.ne.s32.totalorder %s92, %s93
      %p104 = scmp.eq.s32.totalorder %s46, 0
      %p105 = por %p103, %p104
      %p106 = scmp.ne.s32.totalorder %s92, %s93
      %p107 = scmp.eq.s32.totalorder %s47, 3
      %p108 = por %p106, %p107
      %p110 = scmp.ne.s32.totalorder %s93, %s109
      %p111 = scmp.eq.s32.totalorder %s47, 0
      %p112 = por %p110, %p111
      %s114 = sadd.s32 %s113, 1
      %p117 = scmp.eq.s32.totalorder %s41, 3
      %p118 = scmp.ne.s32.totalorder %s113, %s115
      %p119 = scmp.eq.s32.totalorder %s41, 0
      %p120 = por %p118, %p119
      %p121 = scmp.ne.s32.totalorder %s113, %s115
      %p122 = scmp.eq.s32.totalorder %s46, 3
      %p123 = por %p121, %p122
      %p124 = scmp.ne.s32.totalorder %s115, %s116
      %p125 = scmp.eq.s32.totalorder %s46, 0
      %p126 = por %p124, %p125
      %p127 = scmp.ne.s32.totalorder %s115, %s116
      %p128 = scmp.eq.s32.totalorder %s47, 3
      %p129 = por %p127, %p128
      %p131 = scmp.ne.s32.totalorder %s116, %s130
      %p132 = scmp.eq.s32.totalorder %s47, 0
      %p133 = por %p131, %p132
      %s135 = sadd.s32 %s134, 1
      %p138 = scmp.eq.s32.totalorder %s41, 3
      %p139 = scmp.ne.s32.totalorder %s134, %s136
      %p140 = scmp.eq.s32.totalorder %s41, 0
      %p141 = por %p139, %p140
      %p142 = scmp.ne.s32.totalorder %s134, %s136
      %p143 = scmp.eq.s32.totalorder %s46, 3
      %p144 = por %p142, %p143
      %p145 = scmp.ne.s32.totalorder %s136, %s137
      %p146 = scmp.eq.s32.totalorder %s46, 0
      %p147 = por %p145, %p146
      %p148 = scmp.ne.s32.totalorder %s136, %s137
      %p149 = scmp.eq.s32.totalorder %s47, 3
      %p150 = por %p148, %p149
      %p152 = scmp.ne.s32.totalorder %s137, %s151
      %p153 = scmp.eq.s32.totalorder %s47, 0
      %p154 = por %p152, %p153
      %s155 = ssub.s32 %s49, %s56
      %p156 = scmp.eq.s32.totalorder %s155, 0
      %s158 = sadd.s32 %s157, 1
      %s159 = scalar_select %p156, %s157, %s158
      %p162 = pneg %p156
      %p163 = scmp.eq.s32.totalorder %s41, 3
      %p164 = por %p162, %p163
      %p165 = scmp.ne.s32.totalorder %s157, %s160
      %p166 = scmp.eq.s32.totalorder %s41, 0
      %p167 = por %p165, %p166
      %p168 = scmp.ne.s32.totalorder %s157, %s160
      %p169 = scmp.eq.s32.totalorder %s46, 3
      %p170 = por %p168, %p169
      %p171 = scmp.ne.s32.totalorder %s160, %s161
      %p172 = scmp.eq.s32.totalorder %s46, 0
      %p173 = por %p171, %p172
      %p174 = scmp.ne.s32.totalorder %s160, %s161
      %p175 = scmp.eq.s32.totalorder %s47, 3
      %p176 = por %p174, %p175
      %p178 = scmp.ne.s32.totalorder %s161, %s177
      %p179 = scmp.eq.s32.totalorder %s47, 0
      %p180 = por %p178, %p179
      %s181 = ssub.s32 %s49, %s56
      %p182 = scmp.eq.s32.totalorder %s181, 0
      %s184 = sadd.s32 %s183, 1
      %s185 = scalar_select %p182, %s183, %s184
      %p188 = pneg %p182
      %p189 = scmp.eq.s32.totalorder %s41, 3
      %p190 = por %p188, %p189
      %p191 = scmp.ne.s32.totalorder %s183, %s186
      %p192 = scmp.eq.s32.totalorder %s41, 0
      %p193 = por %p191, %p192
      %p194 = scmp.ne.s32.totalorder %s183, %s186
      %p195 = scmp.eq.s32.totalorder %s46, 3
      %p196 = por %p194, %p195
      %p197 = scmp.ne.s32.totalorder %s186, %s187
      %p198 = scmp.eq.s32.totalorder %s46, 0
      %p199 = por %p197, %p198
      %p200 = scmp.ne.s32.totalorder %s186, %s187
      %p201 = scmp.eq.s32.totalorder %s47, 3
      %p202 = por %p200, %p201
      %p204 = scmp.ne.s32.totalorder %s187, %s203
      %p205 = scmp.eq.s32.totalorder %s47, 0
      %p206 = por %p204, %p205
      %s207 = ssub.s32 %s49, %s56
      %p208 = scmp.eq.s32.totalorder %s207, 0
      %s210 = sadd.s32 %s209, 1
      %s211 = scalar_select %p208, %s209, %s210
      %p214 = pneg %p208
      %p215 = scmp.eq.s32.totalorder %s41, 3
      %p216 = por %p214, %p215
      %p217 = scmp.ne.s32.totalorder %s209, %s212
      %p218 = scmp.eq.s32.totalorder %s41, 0
      %p219 = por %p217, %p218
      %p220 = scmp.ne.s32.totalorder %s209, %s212
      %p221 = scmp.eq.s32.totalorder %s46, 3
      %p222 = por %p220, %p221
      %p223 = scmp.ne.s32.totalorder %s212, %s213
      %p224 = scmp.eq.s32.totalorder %s46, 0
      %p225 = por %p223, %p224
      %p226 = scmp.ne.s32.totalorder %s212, %s213
      %p227 = scmp.eq.s32.totalorder %s47, 3
      %p228 = por %p226, %p227
      %p230 = scmp.ne.s32.totalorder %s213, %s229
      %p231 = scmp.eq.s32.totalorder %s47, 0
      %p232 = por %p230, %p231
      %s233 = ssub.s32 %s49, %s56
      %p234 = scmp.eq.s32.totalorder %s233, 0
      %s236 = sadd.s32 %s235, 1
      %s237 = scalar_select %p234, %s235, %s236
      %p240 = pneg %p234
      %p241 = scmp.eq.s32.totalorder %s41, 3
      %p242 = por %p240, %p241
      %p243 = scmp.ne.s32.totalorder %s235, %s238
      %p244 = scmp.eq.s32.totalorder %s41, 0
      %p245 = por %p243, %p244
      %p246 = scmp.ne.s32.totalorder %s235, %s238
      %p247 = scmp.eq.s32.totalorder %s46, 3
      %p248 = por %p246, %p247
      %p249 = scmp.ne.s32.totalorder %s238, %s239
      %p250 = scmp.eq.s32.totalorder %s46, 0
      %p251 = por %p249, %p250
      %p252 = scmp.ne.s32.totalorder %s238, %s239
      %p253 = scmp.eq.s32.totalorder %s47, 3
      %p254 = por %p252, %p253
      %p256 = scmp.ne.s32.totalorder %s239, %s255
      %p257 = scmp.eq.s32.totalorder %s47, 0
      %p258 = por %p256, %p257
      %s259 = ssub.s32 %s49, %s56
      %p260 = scmp.eq.s32.totalorder %s259, 0
      %s262 = sadd.s32 %s261, 1
      %s263 = scalar_select %p260, %s261, %s262
      %p266 = pneg %p260
      %p267 = scmp.eq.s32.totalorder %s41, 3
      %p268 = por %p266, %p267
      %p269 = scmp.ne.s32.totalorder %s261, %s264
      %p270 = scmp.eq.s32.totalorder %s41, 0
      %p271 = por %p269, %p270
      %p272 = scmp.ne.s32.totalorder %s261, %s264
      %p273 = scmp.eq.s32.totalorder %s46, 3
      %p274 = por %p272, %p273
      %p275 = scmp.ne.s32.totalorder %s264, %s265
      %p276 = scmp.eq.s32.totalorder %s46, 0
      %p277 = por %p275, %p276
      %p278 = scmp.ne.s32.totalorder %s264, %s265
      %p279 = scmp.eq.s32.totalorder %s47, 3
      %p280 = por %p278, %p279
      %p282 = scmp.ne.s32.totalorder %s265, %s281
      %p283 = scmp.eq.s32.totalorder %s47, 0
      %p284 = por %p282, %p283
      %s285 = ssub.s32 %s49, %s56
      %p286 = scmp.eq.s32.totalorder %s285, 0
      %s288 = sadd.s32 %s287, 1
      %s289 = scalar_select %p286, %s287, %s288
      %p292 = pneg %p286
      %p293 = scmp.eq.s32.totalorder %s41, 3
      %p294 = por %p292, %p293
      %p295 = scmp.ne.s32.totalorder %s287, %s290
      %p296 = scmp.eq.s32.totalorder %s41, 0
      %p297 = por %p295, %p296
      %p298 = scmp.ne.s32.totalorder %s287, %s290
      %p299 = scmp.eq.s32.totalorder %s46, 3
      %p300 = por %p298, %p299
      %p301 = scmp.ne.s32.totalorder %s290, %s291
      %p302 = scmp.eq.s32.totalorder %s46, 0
      %p303 = por %p301, %p302
      %p304 = scmp.ne.s32.totalorder %s290, %s291
      %p305 = scmp.eq.s32.totalorder %s47, 3
      %p306 = por %p304, %p305
      %p308 = scmp.ne.s32.totalorder %s291, %s307
      %p309 = scmp.eq.s32.totalorder %s47, 0
      %p310 = por %p308, %p309
      %s311 = ssub.s32 %s49, %s56
      %p312 = scmp.eq.s32.totalorder %s311, 0
      %s314 = sadd.s32 %s313, 1
      %s315 = scalar_select %p312, %s313, %s314
      %p318 = pneg %p312
      %p319 = scmp.eq.s32.totalorder %s41, 3
      %p320 = por %p318, %p319
      %p321 = scmp.ne.s32.totalorder %s313, %s316
      %p322 = scmp.eq.s32.totalorder %s41, 0
      %p323 = por %p321, %p322
      %p324 = scmp.ne.s32.totalorder %s313, %s316
      %p325 = scmp.eq.s32.totalorder %s46, 3
      %p326 = por %p324, %p325
      %p327 = scmp.ne.s32.totalorder %s316, %s317
      %p328 = scmp.eq.s32.totalorder %s46, 0
      %p329 = por %p327, %p328
      %p330 = scmp.ne.s32.totalorder %s316, %s317
      %p331 = scmp.eq.s32.totalorder %s47, 3
      %p332 = por %p330, %p331
      %p334 = scmp.ne.s32.totalorder %s317, %s333
      %p335 = scmp.eq.s32.totalorder %s47, 0
      %p336 = por %p334, %p335
      %s337 = ssub.s32 %s49, %s56
      %p338 = scmp.eq.s32.totalorder %s337, 0
      %s340 = sadd.s32 %s339, 1
      %s341 = scalar_select %p338, %s339, %s340
      %p344 = pneg %p338
      %p345 = scmp.eq.s32.totalorder %s41, 3
      %p346 = por %p344, %p345
      %p347 = scmp.ne.s32.totalorder %s339, %s342
      %p348 = scmp.eq.s32.totalorder %s41, 0
      %p349 = por %p347, %p348
      %p350 = scmp.ne.s32.totalorder %s339, %s342
      %p351 = scmp.eq.s32.totalorder %s46, 3
      %p352 = por %p350, %p351
      %p353 = scmp.ne.s32.totalorder %s342, %s343
      %p354 = scmp.eq.s32.totalorder %s46, 0
      %p355 = por %p353, %p354
      %p356 = scmp.ne.s32.totalorder %s342, %s343
      %p357 = scmp.eq.s32.totalorder %s47, 3
      %p358 = por %p356, %p357
      %p360 = scmp.ne.s32.totalorder %s343, %s359
      %p361 = scmp.eq.s32.totalorder %s47, 0
      %p362 = por %p360, %p361
      %s363 = ssub.s32 %s49, %s56
      %p364 = scmp.eq.s32.totalorder %s363, 0
      %s366 = sadd.s32 %s365, 1
      %s367 = scalar_select %p364, %s365, %s366
      %p370 = pneg %p364
      %p371 = scmp.eq.s32.totalorder %s41, 3
      %p372 = por %p370, %p371
      %p373 = scmp.ne.s32.totalorder %s365, %s368
      %p374 = scmp.eq.s32.totalorder %s41, 0
      %p375 = por %p373, %p374
      %p376 = scmp.ne.s32.totalorder %s365, %s368
      %p377 = scmp.eq.s32.totalorder %s46, 3
      %p378 = por %p376, %p377
      %p379 = scmp.ne.s32.totalorder %s368, %s369
      %p380 = scmp.eq.s32.totalorder %s46, 0
      %p381 = por %p379, %p380
      %p382 = scmp.ne.s32.totalorder %s368, %s369
      %p383 = scmp.eq.s32.totalorder %s47, 3
      %p384 = por %p382, %p383
      %p386 = scmp.ne.s32.totalorder %s369, %s385
      %p387 = scmp.eq.s32.totalorder %s47, 0
      %p388 = por %p386, %p387
      %s389 = ssub.s32 %s49, %s56
      %p390 = scmp.eq.s32.totalorder %s389, 0
      %s392 = sadd.s32 %s391, 1
      %s393 = scalar_select %p390, %s391, %s392
      %p396 = pneg %p390
      %p397 = scmp.eq.s32.totalorder %s41, 3
      %p398 = por %p396, %p397
      %p399 = scmp.ne.s32.totalorder %s391, %s394
      %p400 = scmp.eq.s32.totalorder %s41, 0
      %p401 = por %p399, %p400
      %p402 = scmp.ne.s32.totalorder %s391, %s394
      %p403 = scmp.eq.s32.totalorder %s46, 3
      %p404 = por %p402, %p403
      %p405 = scmp.ne.s32.totalorder %s394, %s395
      %p406 = scmp.eq.s32.totalorder %s46, 0
      %p407 = por %p405, %p406
      %p408 = scmp.ne.s32.totalorder %s394, %s395
      %p409 = scmp.eq.s32.totalorder %s47, 3
      %p410 = por %p408, %p409
      %p412 = scmp.ne.s32.totalorder %s395, %s411
      %p413 = scmp.eq.s32.totalorder %s47, 0
      %p414 = por %p412, %p413
      %s415 = ssub.s32 %s49, %s56
      %p416 = scmp.eq.s32.totalorder %s415, 0
      %s418 = sadd.s32 %s417, 1
      %s419 = scalar_select %p416, %s417, %s418
      %p422 = pneg %p416
      %p423 = scmp.eq.s32.totalorder %s41, 3
      %p424 = por %p422, %p423
      %p425 = scmp.ne.s32.totalorder %s417, %s420
      %p426 = scmp.eq.s32.totalorder %s41, 0
      %p427 = por %p425, %p426
      %p428 = scmp.ne.s32.totalorder %s417, %s420
      %p429 = scmp.eq.s32.totalorder %s46, 3
      %p430 = por %p428, %p429
      %p431 = scmp.ne.s32.totalorder %s420, %s421
      %p432 = scmp.eq.s32.totalorder %s46, 0
      %p433 = por %p431, %p432
      %p434 = scmp.ne.s32.totalorder %s420, %s421
      %p435 = scmp.eq.s32.totalorder %s47, 3
      %p436 = por %p434, %p435
      %p438 = scmp.ne.s32.totalorder %s421, %s437
      %p439 = scmp.eq.s32.totalorder %s47, 0
      %p440 = por %p438, %p439
      %s441 = ssub.s32 %s49, %s56
      %p442 = scmp.eq.s32.totalorder %s441, 0
      %s444 = sadd.s32 %s443, 1
      %s445 = scalar_select %p442, %s443, %s444
      %p448 = pneg %p442
      %p449 = scmp.eq.s32.totalorder %s41, 3
      %p450 = por %p448, %p449
      %p451 = scmp.ne.s32.totalorder %s443, %s446
      %p452 = scmp.eq.s32.totalorder %s41, 0
      %p453 = por %p451, %p452
      %p454 = scmp.ne.s32.totalorder %s443, %s446
      %p455 = scmp.eq.s32.totalorder %s46, 3
      %p456 = por %p454, %p455
      %p457 = scmp.ne.s32.totalorder %s446, %s447
      %p458 = scmp.eq.s32.totalorder %s46, 0
      %p459 = por %p457, %p458
      %p460 = scmp.ne.s32.totalorder %s446, %s447
      %p461 = scmp.eq.s32.totalorder %s47, 3
      %p462 = por %p460, %p461
      %p464 = scmp.ne.s32.totalorder %s447, %s463
      %p465 = scmp.eq.s32.totalorder %s47, 0
      %p466 = por %p464, %p465
      %s467 = ssub.s32 %s49, %s56
      %p468 = scmp.eq.s32.totalorder %s467, 0
      %s470 = sadd.s32 %s469, 1
      %s471 = scalar_select %p468, %s469, %s470
      %p474 = pneg %p468
      %p475 = scmp.eq.s32.totalorder %s41, 3
      %p476 = por %p474, %p475
      %p477 = scmp.ne.s32.totalorder %s469, %s472
      %p478 = scmp.eq.s32.totalorder %s41, 0
      %p479 = por %p477, %p478
      %p480 = scmp.ne.s32.totalorder %s469, %s472
      %p481 = scmp.eq.s32.totalorder %s46, 3
      %p482 = por %p480, %p481
      %p483 = scmp.ne.s32.totalorder %s472, %s473
      %p484 = scmp.eq.s32.totalorder %s46, 0
      %p485 = por %p483, %p484
      %p486 = scmp.ne.s32.totalorder %s472, %s473
      %p487 = scmp.eq.s32.totalorder %s47, 3
      %p488 = por %p486, %p487
      %p490 = scmp.ne.s32.totalorder %s473, %s489
      %p491 = scmp.eq.s32.totalorder %s47, 0
      %p492 = por %p490, %p491
      %s493 = ssub.s32 %s49, %s56
      %p494 = scmp.eq.s32.totalorder %s493, 0
      %s496 = sadd.s32 %s495, 1
      %s497 = scalar_select %p494, %s495, %s496
      %p500 = pneg %p494
      %p501 = scmp.eq.s32.totalorder %s41, 3
      %p502 = por %p500, %p501
      %p503 = scmp.ne.s32.totalorder %s495, %s498
      %p504 = scmp.eq.s32.totalorder %s41, 0
      %p505 = por %p503, %p504
      %p506 = scmp.ne.s32.totalorder %s495, %s498
      %p507 = scmp.eq.s32.totalorder %s46, 3
      %p508 = por %p506, %p507
      %p509 = scmp.ne.s32.totalorder %s498, %s499
      %p510 = scmp.eq.s32.totalorder %s46, 0
      %p511 = por %p509, %p510
      %p512 = scmp.ne.s32.totalorder %s498, %s499
      %p513 = scmp.eq.s32.totalorder %s47, 3
      %p514 = por %p512, %p513
      %p516 = scmp.ne.s32.totalorder %s499, %s515
      %p517 = scmp.eq.s32.totalorder %s47, 0
      %p518 = por %p516, %p517
      %s519 = ssub.s32 %s49, %s56
      %p520 = scmp.eq.s32.totalorder %s519, 0
      %s522 = sadd.s32 %s521, 1
      %s523 = scalar_select %p520, %s521, %s522
      %p526 = pneg %p520
      %p527 = scmp.eq.s32.totalorder %s41, 3
      %p528 = por %p526, %p527
      %p529 = scmp.ne.s32.totalorder %s521, %s524
      %p530 = scmp.eq.s32.totalorder %s41, 0
      %p531 = por %p529, %p530
      %p532 = scmp.ne.s32.totalorder %s521, %s524
      %p533 = scmp.eq.s32.totalorder %s46, 3
      %p534 = por %p532, %p533
      %p535 = scmp.ne.s32.totalorder %s524, %s525
      %p536 = scmp.eq.s32.totalorder %s46, 0
      %p537 = por %p535, %p536
      %p538 = scmp.ne.s32.totalorder %s524, %s525
      %p539 = scmp.eq.s32.totalorder %s47, 3
      %p540 = por %p538, %p539
      %p542 = scmp.ne.s32.totalorder %s525, %s541
      %p543 = scmp.eq.s32.totalorder %s47, 0
      %p544 = por %p542, %p543
      %s545 = ssub.s32 %s49, %s56
      %p546 = scmp.eq.s32.totalorder %s545, 0
      %s548 = sadd.s32 %s547, 1
      %s549 = scalar_select %p546, %s547, %s548
      %p552 = pneg %p546
      %p553 = scmp.eq.s32.totalorder %s41, 3
      %p554 = por %p552, %p553
      %p555 = scmp.ne.s32.totalorder %s547, %s550
      %p556 = scmp.eq.s32.totalorder %s41, 0
      %p557 = por %p555, %p556
      %p558 = scmp.ne.s32.totalorder %s547, %s550
      %p559 = scmp.eq.s32.totalorder %s46, 3
      %p560 = por %p558, %p559
      %p561 = scmp.ne.s32.totalorder %s550, %s551
      %p562 = scmp.eq.s32.totalorder %s46, 0
      %p563 = por %p561, %p562
      %p564 = scmp.ne.s32.totalorder %s550, %s551
      %p565 = scmp.eq.s32.totalorder %s47, 3
      %p566 = por %p564, %p565
      %p568 = scmp.ne.s32.totalorder %s551, %s567
      %p569 = scmp.eq.s32.totalorder %s47, 0
      %p570 = por %p568, %p569
      %s571 = ssub.s32 %s49, %s56
      %p572 = scmp.eq.s32.totalorder %s571, 0
      %s574 = sadd.s32 %s573, 1
      %s575 = scalar_select %p572, %s573, %s574
      %p578 = pneg %p572
      %p579 = scmp.eq.s32.totalorder %s41, 3
      %p580 = por %p578, %p579
      %p581 = scmp.ne.s32.totalorder %s573, %s576
      %p582 = scmp.eq.s32.totalorder %s41, 0
      %p583 = por %p581, %p582
      %p584 = scmp.ne.s32.totalorder %s573, %s576
      %p585 = scmp.eq.s32.totalorder %s46, 3
      %p586 = por %p584, %p585
      %p587 = scmp.ne.s32.totalorder %s576, %s577
      %p588 = scmp.eq.s32.totalorder %s46, 0
      %p589 = por %p587, %p588
      %p590 = scmp.ne.s32.totalorder %s576, %s577
      %p591 = scmp.eq.s32.totalorder %s47, 3
      %p592 = por %p590, %p591
      %p594 = scmp.ne.s32.totalorder %s577, %s593
      %p595 = scmp.eq.s32.totalorder %s47, 0
      %p596 = por %p594, %p595
      %s597 = ssub.s32 %s49, %s56
      %p598 = scmp.eq.s32.totalorder %s597, 0
      %s600 = sadd.s32 %s599, 1
      %s601 = scalar_select %p598, %s599, %s600
      %p604 = pneg %p598
      %p605 = scmp.eq.s32.totalorder %s41, 3
      %p606 = por %p604, %p605
      %p607 = scmp.ne.s32.totalorder %s599, %s602
      %p608 = scmp.eq.s32.totalorder %s41, 0
      %p609 = por %p607, %p608
      %p610 = scmp.ne.s32.totalorder %s599, %s602
      %p611 = scmp.eq.s32.totalorder %s46, 3
      %p612 = por %p610, %p611
      %p613 = scmp.ne.s32.totalorder %s602, %s603
      %p614 = scmp.eq.s32.totalorder %s46, 0
      %p615 = por %p613, %p614
      %p616 = scmp.ne.s32.totalorder %s602, %s603
      %p617 = scmp.eq.s32.totalorder %s47, 3
      %p618 = por %p616, %p617
      %p620 = scmp.ne.s32.totalorder %s603, %s619
      %p621 = scmp.eq.s32.totalorder %s47, 0
      %p622 = por %p620, %p621
      %s623 = ssub.s32 %s49, %s56
      %p624 = scmp.eq.s32.totalorder %s623, 0
      %s626 = sadd.s32 %s625, 1
      %s627 = scalar_select %p624, %s625, %s626
      %p630 = pneg %p624
      %p631 = scmp.eq.s32.totalorder %s41, 3
      %p632 = por %p630, %p631
      %p633 = scmp.ne.s32.totalorder %s625, %s628
      %p634 = scmp.eq.s32.totalorder %s41, 0
      %p635 = por %p633, %p634
      %p636 = scmp.ne.s32.totalorder %s625, %s628
      %p637 = scmp.eq.s32.totalorder %s46, 3
      %p638 = por %p636, %p637
      %p639 = scmp.ne.s32.totalorder %s628, %s629
      %p640 = scmp.eq.s32.totalorder %s46, 0
      %p641 = por %p639, %p640
      %p642 = scmp.ne.s32.totalorder %s628, %s629
      %p643 = scmp.eq.s32.totalorder %s47, 3
      %p644 = por %p642, %p643
      %p646 = scmp.ne.s32.totalorder %s629, %s645
      %p647 = scmp.eq.s32.totalorder %s47, 0
      %p648 = por %p646, %p647
      %s649 = ssub.s32 %s49, %s56
      %p650 = scmp.eq.s32.totalorder %s649, 0
      %s652 = sadd.s32 %s651, 1
      %s653 = scalar_select %p650, %s651, %s652
      %p656 = pneg %p650
      %p657 = scmp.eq.s32.totalorder %s41, 3
      %p658 = por %p656, %p657
      %p659 = scmp.ne.s32.totalorder %s651, %s654
      %p660 = scmp.eq.s32.totalorder %s41, 0
      %p661 = por %p659, %p660
      %p662 = scmp.ne.s32.totalorder %s651, %s654
      %p663 = scmp.eq.s32.totalorder %s46, 3
      %p664 = por %p662, %p663
      %p665 = scmp.ne.s32.totalorder %s654, %s655
      %p666 = scmp.eq.s32.totalorder %s46, 0
      %p667 = por %p665, %p666
      %p668 = scmp.ne.s32.totalorder %s654, %s655
      %p669 = scmp.eq.s32.totalorder %s47, 3
      %p670 = por %p668, %p669
      %p672 = scmp.ne.s32.totalorder %s655, %s671
      %p673 = scmp.eq.s32.totalorder %s47, 0
      %p674 = por %p672, %p673
      %s676 = sadd.s32 %s675, 1
      %p679 = scmp.eq.s32.totalorder %s41, 3
      %p680 = scmp.ne.s32.totalorder %s675, %s677
      %p681 = scmp.eq.s32.totalorder %s41, 0
      %p682 = por %p680, %p681
      %p683 = scmp.ne.s32.totalorder %s675, %s677
      %p684 = scmp.eq.s32.totalorder %s46, 3
      %p685 = por %p683, %p684
      %p686 = scmp.ne.s32.totalorder %s677, %s678
      %p687 = scmp.eq.s32.totalorder %s46, 0
      %p688 = por %p686, %p687
      %p689 = scmp.ne.s32.totalorder %s677, %s678
      %p690 = scmp.eq.s32.totalorder %s47, 3
      %p691 = por %p689, %p690
      %p693 = scmp.ne.s32.totalorder %s678, %s692
      %p694 = scmp.eq.s32.totalorder %s47, 0
      %p695 = por %p693, %p694
      %s697 = sadd.s32 %s696, 1
      %p700 = scmp.eq.s32.totalorder %s41, 3
      %p701 = scmp.ne.s32.totalorder %s696, %s698
      %p702 = scmp.eq.s32.totalorder %s41, 0
      %p703 = por %p701, %p702
      %p704 = scmp.ne.s32.totalorder %s696, %s698
      %p705 = scmp.eq.s32.totalorder %s46, 3
      %p706 = por %p704, %p705
      %p707 = scmp.ne.s32.totalorder %s698, %s699
      %p708 = scmp.eq.s32.totalorder %s46, 0
      %p709 = por %p707, %p708
      %p710 = scmp.ne.s32.totalorder %s698, %s699
      %p711 = scmp.eq.s32.totalorder %s47, 3
      %p712 = por %p710, %p711
      %p714 = scmp.ne.s32.totalorder %s699, %s713
      %p715 = scmp.eq.s32.totalorder %s47, 0
      %p716 = por %p714, %p715
      %s717 = ssub.s32 %s48, %s60
      %p718 = scmp.eq.s32.totalorder %s717, 0
      %s720 = sadd.s32 %s719, 1
      %s721 = scalar_select %p718, %s719, %s720
      %p724 = pneg %p718
      %p725 = scmp.eq.s32.totalorder %s41, 3
      %p726 = por %p724, %p725
      %p727 = scmp.ne.s32.totalorder %s719, %s722
      %p728 = scmp.eq.s32.totalorder %s41, 0
      %p729 = por %p727, %p728
      %p730 = scmp.ne.s32.totalorder %s719, %s722
      %p731 = scmp.eq.s32.totalorder %s46, 3
      %p732 = por %p730, %p731
      %p733 = scmp.ne.s32.totalorder %s722, %s723
      %p734 = scmp.eq.s32.totalorder %s46, 0
      %p735 = por %p733, %p734
      %p736 = scmp.ne.s32.totalorder %s722, %s723
      %p737 = scmp.eq.s32.totalorder %s47, 3
      %p738 = por %p736, %p737
      %p740 = scmp.ne.s32.totalorder %s723, %s739
      %p741 = scmp.eq.s32.totalorder %s47, 0
      %p742 = por %p740, %p741
      %p743 = scmp.le.s32.totalorder 1, %s41
      %p744 = scmp.lt.s32.totalorder %s41, 5
      %p745 = pnand %p743, %p744
      %p746 = pneg %p745
      // Predicated region
      $region9: #{tpu_custom_call.1} parent=5 // pred_check
        _
      $region10: #{tpu_custom_call.1} parent=5 // pred_check_branch
        %748 = sbr.rel (%p745) target = $region12
      $region11: #{tpu_custom_call.1} parent=5 // pred_region
        %s749 = ssub.s32 %s41, 1
        // Predicated region
        $region13: #{tpu_custom_call.1} parent=11 // pred_check
          %p750 = pneg %p126
        $region14: #{tpu_custom_call.1} parent=11 // pred_check_branch
          %752 = sbr.rel (%p750) target = $region16
        $region15: #{tpu_custom_call.1} parent=11 // pred_region
          _
        $region16: #{tpu_custom_call.1} parent=11 // pred_fallthru
          _
        // Predicated region
        $region17: #{tpu_custom_call.1} parent=11 // pred_check
          %p753 = pneg %p147
        $region18: #{tpu_custom_call.1} parent=11 // pred_check_branch
          %755 = sbr.rel (%p753) target = $region20
        $region19: #{tpu_custom_call.1} parent=11 // pred_region
          _
        $region20: #{tpu_custom_call.1} parent=11 // pred_fallthru
          _
        // Predicated region
        $region21: #{tpu_custom_call.1} parent=11 // pred_check
          %p756 = pneg %p688
        $region22: #{tpu_custom_call.1} parent=11 // pred_check_branch
          %758 = sbr.rel (%p756) target = $region24
        $region23: #{tpu_custom_call.1} parent=11 // pred_region
          _
        $region24: #{tpu_custom_call.1} parent=11 // pred_fallthru
          _
        // Predicated region
        $region25: #{tpu_custom_call.1} parent=11 // pred_check
          %p759 = pneg %p709
        $region26: #{tpu_custom_call.1} parent=11 // pred_check_branch
          %761 = sbr.rel (%p759) target = $region28
        $region27: #{tpu_custom_call.1} parent=11 // pred_region
          _
        $region28: #{tpu_custom_call.1} parent=11 // pred_fallthru
          _
      $region12: #{tpu_custom_call.1} parent=5 // pred_fallthru
        _
      %p762 = scmp.lt.s32.totalorder %s41, 4
      // Predicated region
      $region29: #{tpu_custom_call.1} parent=5 // pred_check
        %p763 = pneg %p762
      $region30: #{tpu_custom_call.1} parent=5 // pred_check_branch
        %765 = sbr.rel (%p763) target = $region32
      $region31: #{tpu_custom_call.1} parent=5 // pred_region
        // Predicated region
        $region33: #{tpu_custom_call.1} parent=31 // pred_check
          %p766 = pneg %p73
        $region34: #{tpu_custom_call.1} parent=31 // pred_check_branch
          %768 = sbr.rel (%p766) target = $region36
        $region35: #{tpu_custom_call.1} parent=31 // pred_region
          %p769 = scmp.lt.s32.totalorder %s48, 1
          %s770 = scalar_select %p769, %s48, 1
          %s771 = smul.addr %s770, 8
          %s772 = scalar_lea.vmem %s0, %s771
        $region36: #{tpu_custom_call.1} parent=31 // pred_fallthru
          _
        // Predicated region
        $region37: #{tpu_custom_call.1} parent=31 // pred_check
          %p773 = pneg %p99
        $region38: #{tpu_custom_call.1} parent=31 // pred_check_branch
          %775 = sbr.rel (%p773) target = $region40
        $region39: #{tpu_custom_call.1} parent=31 // pred_region
          %p776 = scmp.lt.s32.totalorder %s48, 1
          %s777 = scalar_select %p776, %s48, 1
          %s778 = smul.addr %s777, 2
          %s779 = smul.addr %s778, 8
          %s780 = scalar_lea.vmem %s1, %s779
        $region40: #{tpu_custom_call.1} parent=31 // pred_fallthru
          _
        // Predicated region
        $region41: #{tpu_custom_call.1} parent=31 // pred_check
          %p781 = pneg %p167
        $region42: #{tpu_custom_call.1} parent=31 // pred_check_branch
          %783 = sbr.rel (%p781) target = $region44
        $region43: #{tpu_custom_call.1} parent=31 // pred_region
          %p784 = scmp.lt.s32.totalorder %s49, 1
          %s785 = scalar_select %p784, %s49, 1
          %s786 = smul.addr %s785, 4
          %s787 = smul.addr %s786, 8
          %s788 = scalar_lea.vmem %s4, %s787
        $region44: #{tpu_custom_call.1} parent=31 // pred_fallthru
          _
        // Predicated region
        $region45: #{tpu_custom_call.1} parent=31 // pred_check
          %p789 = pneg %p193
        $region46: #{tpu_custom_call.1} parent=31 // pred_check_branch
          %791 = sbr.rel (%p789) target = $region48
        $region47: #{tpu_custom_call.1} parent=31 // pred_region
          %p792 = scmp.lt.s32.totalorder %s49, 1
          %s793 = scalar_select %p792, %s49, 1
          %s794 = scalar_lea.vmem %s5, %s793
        $region48: #{tpu_custom_call.1} parent=31 // pred_fallthru
          _
        // Predicated region
        $region49: #{tpu_custom_call.1} parent=31 // pred_check
          %p795 = pneg %p219
        $region50: #{tpu_custom_call.1} parent=31 // pred_check_branch
          %797 = sbr.rel (%p795) target = $region52
        $region51: #{tpu_custom_call.1} parent=31 // pred_region
          %p798 = scmp.lt.s32.totalorder %s49, 1
          %s799 = scalar_select %p798, %s49, 1
          %s800 = smul.addr %s799, 4
          %s801 = smul.addr %s800, 8
          %s802 = scalar_lea.vmem %s6, %s801
        $region52: #{tpu_custom_call.1} parent=31 // pred_fallthru
          _
        // Predicated region
        $region53: #{tpu_custom_call.1} parent=31 // pred_check
          %p803 = pneg %p245
        $region54: #{tpu_custom_call.1} parent=31 // pred_check_branch
          %805 = sbr.rel (%p803) target = $region56
        $region55: #{tpu_custom_call.1} parent=31 // pred_region
          %p806 = scmp.lt.s32.totalorder %s49, 1
          %s807 = scalar_select %p806, %s49, 1
          %s808 = scalar_lea.vmem %s7, %s807
        $region56: #{tpu_custom_call.1} parent=31 // pred_fallthru
          _
        // Predicated region
        $region57: #{tpu_custom_call.1} parent=31 // pred_check
          %p809 = pneg %p271
        $region58: #{tpu_custom_call.1} parent=31 // pred_check_branch
          %811 = sbr.rel (%p809) target = $region60
        $region59: #{tpu_custom_call.1} parent=31 // pred_region
          %p812 = scmp.lt.s32.totalorder %s49, 1
          %s813 = scalar_select %p812, %s49, 1
          %s814 = smul.addr %s813, 4
          %s815 = smul.addr %s814, 8
          %s816 = scalar_lea.vmem %s8, %s815
        $region60: #{tpu_custom_call.1} parent=31 // pred_fallthru
          _
        // Predicated region
        $region61: #{tpu_custom_call.1} parent=31 // pred_check
          %p817 = pneg %p297
        $region62: #{tpu_custom_call.1} parent=31 // pred_check_branch
          %819 = sbr.rel (%p817) target = $region64
        $region63: #{tpu_custom_call.1} parent=31 // pred_region
          %p820 = scmp.lt.s32.totalorder %s49, 1
          %s821 = scalar_select %p820, %s49, 1
          %s822 = scalar_lea.vmem %s9, %s821
        $region64: #{tpu_custom_call.1} parent=31 // pred_fallthru
          _
        // Predicated region
        $region65: #{tpu_custom_call.1} parent=31 // pred_check
          %p823 = pneg %p323
        $region66: #{tpu_custom_call.1} parent=31 // pred_check_branch
          %825 = sbr.rel (%p823) target = $region68
        $region67: #{tpu_custom_call.1} parent=31 // pred_region
          %s826 = sand.u32 %s313, 1
          %s827 = scalar_lea.sflag [#allocation4], %s826
          %s828 = sand.u32 %s313, 1
          %s829 = smul.addr %s828, 32
          %s830 = scalar_lea.vmem [#allocation3], %s829
          %s832 = ssub.s32 512, 512
          %833 = vsyncadd %s827, %s832
          %s834 = smul.addr %s49, 4
          %s835 = smul.addr %s834, 128
          %s836 = scalar_lea.hbm %s10, %s835
          %s837 = sshll.u32 %s830, 4
          %s838 = int_to_ptr.vmem [resolvable:$true] %s837
          %843 = dma.hbm_to_vmem [thread:$0]  %s836, 512, %s838, %s827, 128, 128, 8
        $region68: #{tpu_custom_call.1} parent=31 // pred_fallthru
          _
        // Predicated region
        $region69: #{tpu_custom_call.1} parent=31 // pred_check
          %p844 = pneg %p349
        $region70: #{tpu_custom_call.1} parent=31 // pred_check_branch
          %846 = sbr.rel (%p844) target = $region72
        $region71: #{tpu_custom_call.1} parent=31 // pred_region
          %p847 = scmp.lt.s32.totalorder %s49, 1
          %s848 = scalar_select %p847, %s49, 1
          %s849 = scalar_lea.vmem %s11, %s848
        $region72: #{tpu_custom_call.1} parent=31 // pred_fallthru
          _
        // Predicated region
        $region73: #{tpu_custom_call.1} parent=31 // pred_check
          %p850 = pneg %p375
        $region74: #{tpu_custom_call.1} parent=31 // pred_check_branch
          %852 = sbr.rel (%p850) target = $region76
        $region75: #{tpu_custom_call.1} parent=31 // pred_region
          %s853 = sand.u32 %s41, 1
          %s854 = scalar_lea.sflag [#allocation7], %s853
          %s855 = sand.u32 %s365, 1
          %s856 = smul.addr %s855, 32
          %s857 = scalar_lea.vmem [#allocation6], %s856
          %s859 = ssub.s32 512, 512
          %860 = vsyncadd %s854, %s859
          %s861 = smul.addr %s49, 4
          %s862 = smul.addr %s861, 128
          %s863 = scalar_lea.hbm %s12, %s862
          %s864 = sshll.u32 %s857, 4
          %s865 = int_to_ptr.vmem [resolvable:$true] %s864
          %870 = dma.hbm_to_vmem [thread:$0]  %s863, 512, %s865, %s854, 128, 128, 8
        $region76: #{tpu_custom_call.1} parent=31 // pred_fallthru
          _
        // Predicated region
        $region77: #{tpu_custom_call.1} parent=31 // pred_check
          %p871 = pneg %p401
        $region78: #{tpu_custom_call.1} parent=31 // pred_check_branch
          %873 = sbr.rel (%p871) target = $region80
        $region79: #{tpu_custom_call.1} parent=31 // pred_region
          %p874 = scmp.lt.s32.totalorder %s49, 1
          %s875 = scalar_select %p874, %s49, 1
          %s876 = scalar_lea.vmem %s13, %s875
        $region80: #{tpu_custom_call.1} parent=31 // pred_fallthru
          _
        // Predicated region
        $region81: #{tpu_custom_call.1} parent=31 // pred_check
          %p877 = pneg %p427
        $region82: #{tpu_custom_call.1} parent=31 // pred_check_branch
          %879 = sbr.rel (%p877) target = $region84
        $region83: #{tpu_custom_call.1} parent=31 // pred_region
          %s880 = sand.u32 %s41, 1
          %s881 = scalar_lea.sflag [#allocation7], %s880
          %s882 = sand.u32 %s417, 1
          %s883 = smul.addr %s882, 32
          %s884 = scalar_lea.vmem [#allocation8], %s883
          %s886 = ssub.s32 512, 512
          %887 = vsyncadd %s881, %s886
          %s888 = smul.addr %s49, 4
          %s889 = smul.addr %s888, 128
          %s890 = scalar_lea.hbm %s14, %s889
          %s891 = sshll.u32 %s884, 4
          %s892 = int_to_ptr.vmem [resolvable:$true] %s891
          %897 = dma.hbm_to_vmem [thread:$0]  %s890, 512, %s892, %s881, 128, 128, 8
        $region84: #{tpu_custom_call.1} parent=31 // pred_fallthru
          _
        // Predicated region
        $region85: #{tpu_custom_call.1} parent=31 // pred_check
          %p898 = pneg %p453
        $region86: #{tpu_custom_call.1} parent=31 // pred_check_branch
          %900 = sbr.rel (%p898) target = $region88
        $region87: #{tpu_custom_call.1} parent=31 // pred_region
          %p901 = scmp.lt.s32.totalorder %s49, 1
          %s902 = scalar_select %p901, %s49, 1
          %s903 = scalar_lea.vmem %s15, %s902
        $region88: #{tpu_custom_call.1} parent=31 // pred_fallthru
          _
        // Predicated region
        $region89: #{tpu_custom_call.1} parent=31 // pred_check
          %p904 = pneg %p479
        $region90: #{tpu_custom_call.1} parent=31 // pred_check_branch
          %906 = sbr.rel (%p904) target = $region92
        $region91: #{tpu_custom_call.1} parent=31 // pred_region
          %p907 = scmp.lt.s32.totalorder %s49, 1
          %s908 = scalar_select %p907, %s49, 1
          %s909 = smul.addr %s908, 8
          %s910 = smul.addr %s909, 8
          %s911 = scalar_lea.vmem %s16, %s910
        $region92: #{tpu_custom_call.1} parent=31 // pred_fallthru
          _
        // Predicated region
        $region93: #{tpu_custom_call.1} parent=31 // pred_check
          %p912 = pneg %p505
        $region94: #{tpu_custom_call.1} parent=31 // pred_check_branch
          %914 = sbr.rel (%p912) target = $region96
        $region95: #{tpu_custom_call.1} parent=31 // pred_region
          %p915 = scmp.lt.s32.totalorder %s49, 1
          %s916 = scalar_select %p915, %s49, 1
          %s917 = scalar_lea.vmem %s17, %s916
        $region96: #{tpu_custom_call.1} parent=31 // pred_fallthru
          _
        // Predicated region
        $region97: #{tpu_custom_call.1} parent=31 // pred_check
          %p918 = pneg %p531
        $region98: #{tpu_custom_call.1} parent=31 // pred_check_branch
          %920 = sbr.rel (%p918) target = $region100
        $region99: #{tpu_custom_call.1} parent=31 // pred_region
          %p921 = scmp.lt.s32.totalorder %s49, 1
          %s922 = scalar_select %p921, %s49, 1
          %s923 = scalar_lea.vmem %s18, %s922
        $region100: #{tpu_custom_call.1} parent=31 // pred_fallthru
          _
        // Predicated region
        $region101: #{tpu_custom_call.1} parent=31 // pred_check
          %p924 = pneg %p557
        $region102: #{tpu_custom_call.1} parent=31 // pred_check_branch
          %926 = sbr.rel (%p924) target = $region104
        $region103: #{tpu_custom_call.1} parent=31 // pred_region
          %p927 = scmp.lt.s32.totalorder %s49, 1
          %s928 = scalar_select %p927, %s49, 1
          %s929 = scalar_lea.vmem %s19, %s928
        $region104: #{tpu_custom_call.1} parent=31 // pred_fallthru
          _
        // Predicated region
        $region105: #{tpu_custom_call.1} parent=31 // pred_check
          %p930 = pneg %p583
        $region106: #{tpu_custom_call.1} parent=31 // pred_check_branch
          %932 = sbr.rel (%p930) target = $region108
        $region107: #{tpu_custom_call.1} parent=31 // pred_region
          %p933 = scmp.lt.s32.totalorder %s49, 1
          %s934 = scalar_select %p933, %s49, 1
          %s935 = scalar_lea.vmem %s20, %s934
        $region108: #{tpu_custom_call.1} parent=31 // pred_fallthru
          _
        // Predicated region
        $region109: #{tpu_custom_call.1} parent=31 // pred_check
          %p936 = pneg %p609
        $region110: #{tpu_custom_call.1} parent=31 // pred_check_branch
          %938 = sbr.rel (%p936) target = $region112
        $region111: #{tpu_custom_call.1} parent=31 // pred_region
          %p939 = scmp.lt.s32.totalorder %s49, 1
          %s940 = scalar_select %p939, %s49, 1
          %s941 = scalar_lea.vmem %s21, %s940
        $region112: #{tpu_custom_call.1} parent=31 // pred_fallthru
          _
        // Predicated region
        $region113: #{tpu_custom_call.1} parent=31 // pred_check
          %p942 = pneg %p635
        $region114: #{tpu_custom_call.1} parent=31 // pred_check_branch
          %944 = sbr.rel (%p942) target = $region116
        $region115: #{tpu_custom_call.1} parent=31 // pred_region
          %p945 = scmp.lt.s32.totalorder %s49, 1
          %s946 = scalar_select %p945, %s49, 1
          %s947 = scalar_lea.vmem %s22, %s946
        $region116: #{tpu_custom_call.1} parent=31 // pred_fallthru
          _
        // Predicated region
        $region117: #{tpu_custom_call.1} parent=31 // pred_check
          %p948 = pneg %p661
        $region118: #{tpu_custom_call.1} parent=31 // pred_check_branch
          %950 = sbr.rel (%p948) target = $region120
        $region119: #{tpu_custom_call.1} parent=31 // pred_region
          %p951 = scmp.lt.s32.totalorder %s49, 1
          %s952 = scalar_select %p951, %s49, 1
          %s953 = scalar_lea.vmem %s23, %s952
        $region120: #{tpu_custom_call.1} parent=31 // pred_fallthru
          _
      $region32: #{tpu_custom_call.1} parent=5 // pred_fallthru
        _
      %p954 = scmp.le.s32.totalorder 1, %s41
      %p955 = scmp.lt.s32.totalorder %s41, 5
      %p956 = pnand %p954, %p955
      %p957 = pneg %p956
      // Predicated region
      $region121: #{tpu_custom_call.1} parent=5 // pred_check
        _
      $region122: #{tpu_custom_call.1} parent=5 // pred_check_branch
        %959 = sbr.rel (%p956) target = $region124
      $region123: #{tpu_custom_call.1} parent=5 // pred_region
        %s960 = ssub.s32 %s41, 1
        %s961 = sand.u32 %s316, 1
        %s962 = scalar_lea.sflag [#allocation4], %s961
        %s963 = sand.u32 %s316, 1
        %s964 = smul.addr %s963, 32
        %s965 = scalar_lea.vmem [#allocation3], %s964
        // Predicated region
        $region125: #{tpu_custom_call.1} parent=123 // pred_check
          %p966 = pneg %p329
        $region126: #{tpu_custom_call.1} parent=123 // pred_check_branch
          %968 = sbr.rel (%p966) target = $region128
        $region127: #{tpu_custom_call.1} parent=123 // pred_region
          %969 = dma.done %s962, 512
        $region128: #{tpu_custom_call.1} parent=123 // pred_fallthru
          _
        %s970 = sand.u32 %s46, 1
        %s971 = scalar_lea.sflag [#allocation7], %s970
        %s972 = sand.u32 %s368, 1
        %s973 = smul.addr %s972, 32
        %s974 = scalar_lea.vmem [#allocation6], %s973
        // Predicated region
        $region129: #{tpu_custom_call.1} parent=123 // pred_check
          %p975 = pneg %p381
        $region130: #{tpu_custom_call.1} parent=123 // pred_check_branch
          %977 = sbr.rel (%p975) target = $region132
        $region131: #{tpu_custom_call.1} parent=123 // pred_region
          %978 = dma.done %s971, 512
        $region132: #{tpu_custom_call.1} parent=123 // pred_fallthru
          _
        %s979 = sand.u32 %s46, 1
        %s980 = scalar_lea.sflag [#allocation7], %s979
        %s981 = sand.u32 %s420, 1
        %s982 = smul.addr %s981, 32
        %s983 = scalar_lea.vmem [#allocation8], %s982
        // Predicated region
        $region133: #{tpu_custom_call.1} parent=123 // pred_check
          %p984 = pneg %p433
        $region134: #{tpu_custom_call.1} parent=123 // pred_check_branch
          %986 = sbr.rel (%p984) target = $region136
        $region135: #{tpu_custom_call.1} parent=123 // pred_region
          %987 = dma.done %s980, 512
        $region136: #{tpu_custom_call.1} parent=123 // pred_fallthru
          _
        %p988 = scmp.lt.s32.totalorder %s50, 1
        %s989 = scalar_select %p988, %s50, 1
        %s990 = smul.addr %s989, 8
        %s991 = scalar_lea.vmem %s0, %s990
        %p992 = pneg %p79
        %p993 = pneg %p76
        %p994 = scmp.lt.s32.totalorder %s50, 1
        %s995 = scalar_select %p994, %s50, 1
        %s996 = smul.addr %s995, 2
        %s997 = smul.addr %s996, 8
        %s998 = scalar_lea.vmem %s1, %s997
        %p999 = pneg %p105
        %p1000 = pneg %p102
        %p1001 = pneg %p126
        %p1002 = pneg %p123
        %p1003 = pneg %p147
        %p1004 = pneg %p144
        %p1005 = scmp.lt.s32.totalorder %s51, 1
        %s1006 = scalar_select %p1005, %s51, 1
        %s1007 = smul.addr %s1006, 4
        %s1008 = smul.addr %s1007, 8
        %s1009 = scalar_lea.vmem %s4, %s1008
        %p1010 = pneg %p173
        %p1011 = pneg %p170
        %p1012 = scmp.lt.s32.totalorder %s51, 1
        %s1013 = scalar_select %p1012, %s51, 1
        %s1014 = scalar_lea.vmem %s5, %s1013
        %p1015 = pneg %p199
        %p1016 = pneg %p196
        %p1017 = scmp.lt.s32.totalorder %s51, 1
        %s1018 = scalar_select %p1017, %s51, 1
        %s1019 = smul.addr %s1018, 4
        %s1020 = smul.addr %s1019, 8
        %s1021 = scalar_lea.vmem %s6, %s1020
        %p1022 = pneg %p225
        %p1023 = pneg %p222
        %p1024 = scmp.lt.s32.totalorder %s51, 1
        %s1025 = scalar_select %p1024, %s51, 1
        %s1026 = scalar_lea.vmem %s7, %s1025
        %p1027 = pneg %p251
        %p1028 = pneg %p248
        %p1029 = scmp.lt.s32.totalorder %s51, 1
        %s1030 = scalar_select %p1029, %s51, 1
        %s1031 = smul.addr %s1030, 4
        %s1032 = smul.addr %s1031, 8
        %s1033 = scalar_lea.vmem %s8, %s1032
        %p1034 = pneg %p277
        %p1035 = pneg %p274
        %p1036 = scmp.lt.s32.totalorder %s51, 1
        %s1037 = scalar_select %p1036, %s51, 1
        %s1038 = scalar_lea.vmem %s9, %s1037
        %p1039 = pneg %p303
        %p1040 = pneg %p300
        %s1041 = sand.u32 %s316, 1
        %s1042 = scalar_lea.sflag [#allocation4], %s1041
        %s1043 = sand.u32 %s316, 1
        %s1044 = smul.addr %s1043, 32
        %s1045 = scalar_lea.vmem [#allocation3], %s1044
        %p1046 = pneg %p329
        %p1047 = pneg %p326
        %p1048 = scmp.lt.s32.totalorder %s51, 1
        %s1049 = scalar_select %p1048, %s51, 1
        %s1050 = scalar_lea.vmem %s11, %s1049
        %p1051 = pneg %p355
        %p1052 = pneg %p352
        %s1053 = sand.u32 %s46, 1
        %s1054 = scalar_lea.sflag [#allocation7], %s1053
        %s1055 = sand.u32 %s368, 1
        %s1056 = smul.addr %s1055, 32
        %s1057 = scalar_lea.vmem [#allocation6], %s1056
        %p1058 = pneg %p381
        %p1059 = pneg %p378
        %p1060 = scmp.lt.s32.totalorder %s51, 1
        %s1061 = scalar_select %p1060, %s51, 1
        %s1062 = scalar_lea.vmem %s13, %s1061
        %p1063 = pneg %p407
        %p1064 = pneg %p404
        %s1065 = sand.u32 %s46, 1
        %s1066 = scalar_lea.sflag [#allocation7], %s1065
        %s1067 = sand.u32 %s420, 1
        %s1068 = smul.addr %s1067, 32
        %s1069 = scalar_lea.vmem [#allocation8], %s1068
        %p1070 = pneg %p433
        %p1071 = pneg %p430
        %p1072 = scmp.lt.s32.totalorder %s51, 1
        %s1073 = scalar_select %p1072, %s51, 1
        %s1074 = scalar_lea.vmem %s15, %s1073
        %p1075 = pneg %p459
        %p1076 = pneg %p456
        %p1077 = scmp.lt.s32.totalorder %s51, 1
        %s1078 = scalar_select %p1077, %s51, 1
        %s1079 = smul.addr %s1078, 8
        %s1080 = smul.addr %s1079, 8
        %s1081 = scalar_lea.vmem %s16, %s1080
        %p1082 = pneg %p485
        %p1083 = pneg %p482
        %p1084 = scmp.lt.s32.totalorder %s51, 1
        %s1085 = scalar_select %p1084, %s51, 1
        %s1086 = scalar_lea.vmem %s17, %s1085
        %p1087 = pneg %p511
        %p1088 = pneg %p508
        %p1089 = scmp.lt.s32.totalorder %s51, 1
        %s1090 = scalar_select %p1089, %s51, 1
        %s1091 = scalar_lea.vmem %s18, %s1090
        %p1092 = pneg %p537
        %p1093 = pneg %p534
        %p1094 = scmp.lt.s32.totalorder %s51, 1
        %s1095 = scalar_select %p1094, %s51, 1
        %s1096 = scalar_lea.vmem %s19, %s1095
        %p1097 = pneg %p563
        %p1098 = pneg %p560
        %p1099 = scmp.lt.s32.totalorder %s51, 1
        %s1100 = scalar_select %p1099, %s51, 1
        %s1101 = scalar_lea.vmem %s20, %s1100
        %p1102 = pneg %p589
        %p1103 = pneg %p586
        %p1104 = scmp.lt.s32.totalorder %s51, 1
        %s1105 = scalar_select %p1104, %s51, 1
        %s1106 = scalar_lea.vmem %s21, %s1105
        %p1107 = pneg %p615
        %p1108 = pneg %p612
        %p1109 = scmp.lt.s32.totalorder %s51, 1
        %s1110 = scalar_select %p1109, %s51, 1
        %s1111 = scalar_lea.vmem %s22, %s1110
        %p1112 = pneg %p641
        %p1113 = pneg %p638
        %p1114 = scmp.lt.s32.totalorder %s51, 1
        %s1115 = scalar_select %p1114, %s51, 1
        %s1116 = scalar_lea.vmem %s23, %s1115
        %p1117 = pneg %p667
        %p1118 = pneg %p664
        %p1119 = pneg %p688
        %p1120 = pneg %p685
        %p1121 = pneg %p709
        %p1122 = pneg %p706
        %p1123 = pneg %p735
        %p1124 = pneg %p732
        %s1125 = sand.u32 %s722, 1
        %s1126 = scalar_lea.sflag [#allocation5], %s1125
        %s1127 = sand.u32 %s722, 1
        %s1128 = smul.addr %s1127, 8
        %s1129 = scalar_lea.vmem [#allocation9], %s1128
        %p1130 = scmp.lt.s32.totalorder %s50, 1
        %s1131 = scalar_select %p1130, %s50, 1
        %s1132 = smul.addr %s1131, 8
        %s1133 = scalar_lea.vmem %s0, %s1132
        %p1134 = scmp.lt.s32.totalorder %s50, 1
        %s1135 = scalar_select %p1134, %s50, 1
        %s1136 = smul.addr %s1135, 2
        %s1137 = smul.addr %s1136, 8
        %s1138 = scalar_lea.vmem %s1, %s1137
        %p1139 = scmp.lt.s32.totalorder %s51, 1
        %s1140 = scalar_select %p1139, %s51, 1
        %s1141 = smul.addr %s1140, 4
        %s1142 = smul.addr %s1141, 8
        %s1143 = scalar_lea.vmem %s4, %s1142
        %p1144 = scmp.lt.s32.totalorder %s51, 1
        %s1145 = scalar_select %p1144, %s51, 1
        %s1146 = scalar_lea.vmem %s5, %s1145
        %p1147 = scmp.lt.s32.totalorder %s51, 1
        %s1148 = scalar_select %p1147, %s51, 1
        %s1149 = smul.addr %s1148, 4
        %s1150 = smul.addr %s1149, 8
        %s1151 = scalar_lea.vmem %s6, %s1150
        %p1152 = scmp.lt.s32.totalorder %s51, 1
        %s1153 = scalar_select %p1152, %s51, 1
        %s1154 = scalar_lea.vmem %s7, %s1153
        %p1155 = scmp.lt.s32.totalorder %s51, 1
        %s1156 = scalar_select %p1155, %s51, 1
        %s1157 = smul.addr %s1156, 4
        %s1158 = smul.addr %s1157, 8
        %s1159 = scalar_lea.vmem %s8, %s1158
        %p1160 = scmp.lt.s32.totalorder %s51, 1
        %s1161 = scalar_select %p1160, %s51, 1
        %s1162 = scalar_lea.vmem %s9, %s1161
        %p1163 = scmp.lt.s32.totalorder %s51, 1
        %s1164 = scalar_select %p1163, %s51, 1
        %s1165 = scalar_lea.vmem %s11, %s1164
        %p1166 = scmp.lt.s32.totalorder %s51, 1
        %s1167 = scalar_select %p1166, %s51, 1
        %s1168 = scalar_lea.vmem %s13, %s1167
        %p1169 = scmp.lt.s32.totalorder %s51, 1
        %s1170 = scalar_select %p1169, %s51, 1
        %s1171 = scalar_lea.vmem %s15, %s1170
        %p1172 = scmp.lt.s32.totalorder %s51, 1
        %s1173 = scalar_select %p1172, %s51, 1
        %s1174 = smul.addr %s1173, 8
        %s1175 = smul.addr %s1174, 8
        %s1176 = scalar_lea.vmem %s16, %s1175
        %p1177 = scmp.lt.s32.totalorder %s51, 1
        %s1178 = scalar_select %p1177, %s51, 1
        %s1179 = scalar_lea.vmem %s17, %s1178
        %p1180 = scmp.lt.s32.totalorder %s51, 1
        %s1181 = scalar_select %p1180, %s51, 1
        %s1182 = scalar_lea.vmem %s18, %s1181
        %p1183 = scmp.lt.s32.totalorder %s51, 1
        %s1184 = scalar_select %p1183, %s51, 1
        %s1185 = scalar_lea.vmem %s19, %s1184
        %p1186 = scmp.lt.s32.totalorder %s51, 1
        %s1187 = scalar_select %p1186, %s51, 1
        %s1188 = scalar_lea.vmem %s20, %s1187
        %p1189 = scmp.lt.s32.totalorder %s51, 1
        %s1190 = scalar_select %p1189, %s51, 1
        %s1191 = scalar_lea.vmem %s21, %s1190
        %p1192 = scmp.lt.s32.totalorder %s51, 1
        %s1193 = scalar_select %p1192, %s51, 1
        %s1194 = scalar_lea.vmem %s22, %s1193
        %p1195 = scmp.lt.s32.totalorder %s51, 1
        %s1196 = scalar_select %p1195, %s51, 1
        %s1197 = scalar_lea.vmem %s23, %s1196
        %p1198 = scmp.eq.s32.totalorder %s51, 0
        // Predicated region
        $region137: #{tpu_custom_call.1} parent=123 // pred_check
          %p1199 = pneg %p1198
        $region138: #{tpu_custom_call.1} parent=123 // pred_check_branch
          %1201 = sbr.rel (%p1199) target = $region140
        $region139: #{tpu_custom_call.1} parent=123 // pred_region
          %v1202 = vld [vmem:[%s1133] sm:$0xff]
          %vm1203 = vcmask 261120
          %1204 = vst.msk [vmem:[#allocation2] sm:$0xff] %vm1203, %v1202
        $region140: #{tpu_custom_call.1} parent=123 // pred_fallthru
          _
        %v1205 = vld [vmem:[#allocation2] sm:$0xff]
        %v1206 = vld [vmem:[%s1138] sm:$0xff]
        %v1207 = vld [vmem:[%s1138 + $0x8] sm:$0x3]
        %v1208 = vld [vmem:[%s1143] sm:$0xff]
        %v1209 = vld [vmem:[%s1143 + $0x8] sm:$0xff]
        %v1210 = vld [vmem:[%s1143 + $0x10] sm:$0xff]
        %v1211 = vld [vmem:[%s1143 + $0x18] sm:$0xff]
        %v1212 = vld [vmem:[%s1146] sm:$0x1]
        %v1214 = vlaneseq
        %v1215 = vshrl.u32 %v1214, 7
        %v1216 = vsub.s32 0, %v1215
        %v1217 = vrot.slane %v1212, %v1216
        %vm1219 = vcmask 261120
        %v1221 = vsel %vm1219, %v1205, 0
        %1223 = vmatprep.subr.mxu0 0.0
        %1224 = vmatpush1.msra.mxu0 %v1208
        %1225 = vmatprep.subr.mxu0 0.0
        %1226 = vmatpush1.msra.mxu0 %v1209
        %1227 = vmatprep.subr.mxu0 0.0
        %1228 = vmatpush1.msra.mxu0 %v1210
        %1229 = vmatprep.subr.mxu0 0.0
        %1230 = vmatpush1.msra.mxu0 %v1211
        %1231 = vmatprep.subr.mxu0 0.0
        %1232 = vmatpush1.msra.mxu0 0.0
        %1233 = vmatprep.subr.mxu0 0.0
        %1234 = vmatpush1.msra.mxu0 0.0
        %1235 = vmatprep.subr.mxu0 0.0
        %1236 = vmatpush1.msra.mxu0 0.0
        %1237 = vmatprep.subr.mxu0 0.0
        %1238 = vmatpush1.msra.mxu0 0.0
        %1239 = vmatprep.subr.mxu0 0.0
        %1240 = vmatpush1.msra.mxu0 0.0
        %1241 = vmatprep.subr.mxu0 0.0
        %1242 = vmatpush1.msra.mxu0 0.0
        %1243 = vmatprep.subr.mxu0 0.0
        %1244 = vmatpush1.msra.mxu0 0.0
        %1245 = vmatprep.subr.mxu0 0.0
        %1246 = vmatpush1.msra.mxu0 0.0
        %1247 = vmatprep.subr.mxu0 0.0
        %1248 = vmatpush1.msra.mxu0 0.0
        %1249 = vmatprep.subr.mxu0 0.0
        %1250 = vmatpush1.msra.mxu0 0.0
        %1251 = vmatprep.subr.mxu0 0.0
        %1252 = vmatpush1.msra.mxu0 0.0
        %1253 = vmatprep.subr.mxu0 0.0
        %1254 = vmatpush1.msra.mxu0 0.0
        %1255 = vmatprep.subr.mxu0 0.0
        %1256 = vmatpush1.msra.mxu0 0.0
        %1257 = vmatprep.subr.mxu0 0.0
        %1258 = vmatpush1.msra.mxu0 0.0
        %1259 = vmatprep.subr.mxu0 0.0
        %1260 = vmatpush1.msra.mxu0 0.0
        %1261 = vmatprep.subr.mxu0 0.0
        %1262 = vmatpush1.msra.mxu0 0.0
        %1263 = vmatprep.subr.mxu0 0.0
        %1264 = vmatpush1.msra.mxu0 0.0
        %1265 = vmatprep.subr.mxu0 0.0
        %1266 = vmatpush1.msra.mxu0 0.0
        %1267 = vmatprep.subr.mxu0 0.0
        %1268 = vmatpush1.msra.mxu0 0.0
        %1269 = vmatprep.subr.mxu0 0.0
        %1270 = vmatpush1.msra.mxu0 0.0
        %1271 = vmatprep.subr.mxu0 0.0
        %1272 = vmatpush1.msra.mxu0 0.0
        %1273 = vmatprep.subr.mxu0 0.0
        %1274 = vmatpush1.msra.mxu0 0.0
        %1275 = vmatprep.subr.mxu0 0.0
        %1276 = vmatpush1.msra.mxu0 0.0
        %1277 = vmatprep.subr.mxu0 0.0
        %1278 = vmatpush1.msra.mxu0 0.0
        %1279 = vmatprep.subr.mxu0 0.0
        %1280 = vmatpush1.msra.mxu0 0.0
        %1281 = vmatprep.subr.mxu0 0.0
        %1282 = vmatpush1.msra.mxu0 0.0
        %1283 = vmatprep.subr.mxu0 0.0
        %1284 = vmatpush1.msra.mxu0 0.0
        %1285 = vmatprep.subr.mxu0 0.0
        %1286 = vmatpush1.msra.mxu0 0.0
        %1287 = vmatprep.mubr.f32.mxu0 0.0
        %1288 = vmatmul.mubr.f32.gmra.mrb[0].mxu0 %v1221
        %v1289 = vpop.f32.mrb[0].mxu0
        %v1290 = vadd.f32 %v1217, %v1289
        %v1291 = vpop.f32.mrb[0].mxu0
        %1292 = vdwg.mxu0
        %v1293 = vld [vmem:[%s2] sm:$0xff]
        %v1294 = vld [vmem:[%s1151] sm:$0xff]
        %v1295 = vld [vmem:[%s1151 + $0x8] sm:$0xff]
        %v1296 = vld [vmem:[%s1151 + $0x10] sm:$0xff]
        %v1297 = vld [vmem:[%s1151 + $0x18] sm:$0xff]
        %1299 = vrot.lane.b32.xlu0 %v1290, 96
        %v1300 = vpop.permute.xlu0 %1299
        %vm1301 = vcmask 64512
        %v1302 = vsel %vm1301, %v1290, 0
        %v1304 = vsel %vm1301, %v1300, 0
        %1306 = vmatprep.subr.mxu0 0.0
        %1307 = vmatpush1.xpose.msra.mxu0 %v1304
        %1308 = vmatprep.subr.mxu0 0.0
        %1309 = vmatpush1.xpose.msra.mxu0 0.0
        %1310 = vmatprep.subr.mxu0 0.0
        %1311 = vmatpush1.xpose.msra.mxu0 0.0
        %1312 = vmatprep.subr.mxu0 0.0
        %1313 = vmatpush1.xpose.msra.mxu0 0.0
        %1314 = vmatprep.subr.mxu0 0.0
        %1315 = vmatpush1.xpose.msra.mxu0 0.0
        %1316 = vmatprep.subr.mxu0 0.0
        %1317 = vmatpush1.xpose.msra.mxu0 0.0
        %1318 = vmatprep.subr.mxu0 0.0
        %1319 = vmatpush1.xpose.msra.mxu0 0.0
        %1320 = vmatprep.subr.mxu0 0.0
        %1321 = vmatpush1.xpose.msra.mxu0 0.0
        %1322 = vmatprep.subr.mxu0 0.0
        %1323 = vmatpush1.xpose.msra.mxu0 0.0
        %1324 = vmatprep.subr.mxu0 0.0
        %1325 = vmatpush1.xpose.msra.mxu0 0.0
        %1326 = vmatprep.subr.mxu0 0.0
        %1327 = vmatpush1.xpose.msra.mxu0 0.0
        %1328 = vmatprep.subr.mxu0 0.0
        %1329 = vmatpush1.xpose.msra.mxu0 0.0
        %1330 = vmatprep.subr.mxu0 0.0
        %1331 = vmatpush1.xpose.msra.mxu0 0.0
        %1332 = vmatprep.subr.mxu0 0.0
        %1333 = vmatpush1.xpose.msra.mxu0 0.0
        %1334 = vmatprep.subr.mxu0 0.0
        %1335 = vmatpush1.xpose.msra.mxu0 0.0
        %1336 = vmatprep.subr.mxu0 0.0
        %1337 = vmatpush1.xpose.msra.mxu0 0.0
        %1338 = vmatprep.subr.mxu0 0.0
        %1339 = vmatpush1.xpose.msra.mxu0 0.0
        %1340 = vmatprep.subr.mxu0 0.0
        %1341 = vmatpush1.xpose.msra.mxu0 0.0
        %1342 = vmatprep.subr.mxu0 0.0
        %1343 = vmatpush1.xpose.msra.mxu0 0.0
        %1344 = vmatprep.subr.mxu0 0.0
        %1345 = vmatpush1.xpose.msra.mxu0 0.0
        %1346 = vmatprep.subr.mxu0 0.0
        %1347 = vmatpush1.xpose.msra.mxu0 0.0
        %1348 = vmatprep.subr.mxu0 0.0
        %1349 = vmatpush1.xpose.msra.mxu0 0.0
        %1350 = vmatprep.subr.mxu0 0.0
        %1351 = vmatpush1.xpose.msra.mxu0 0.0
        %1352 = vmatprep.subr.mxu0 0.0
        %1353 = vmatpush1.xpose.msra.mxu0 0.0
        %1354 = vmatprep.subr.mxu0 0.0
        %1355 = vmatpush1.xpose.msra.mxu0 0.0
        %1356 = vmatprep.subr.mxu0 0.0
        %1357 = vmatpush1.xpose.msra.mxu0 0.0
        %1358 = vmatprep.subr.mxu0 0.0
        %1359 = vmatpush1.xpose.msra.mxu0 0.0
        %1360 = vmatprep.subr.mxu0 0.0
        %1361 = vmatpush1.xpose.msra.mxu0 0.0
        %1362 = vmatprep.subr.mxu0 0.0
        %1363 = vmatpush1.xpose.msra.mxu0 0.0
        %1364 = vmatprep.subr.mxu0 0.0
        %1365 = vmatpush1.xpose.msra.mxu0 0.0
        %1366 = vmatprep.subr.mxu0 0.0
        %1367 = vmatpush1.xpose.msra.mxu0 0.0
        %1368 = vmatprep.subr.mxu0 0.0
        %1369 = vmatpush1.xpose.msra.mxu0 0.0
        %1370 = vmatprep.mubr.f32.mxu0 0.0
        %1371 = vmatmul.mubr.f32.gmra.mrb[0].mxu0 %v1302
        %v1372 = vpop.f32.mrb[0].mxu0
        %v1373 = vadd.f32 0.0, %v1372
        %v1374 = vpop.f32.mrb[0].mxu0
        %1375 = vdwg.mxu0
        %v1376 = vmul.f32 %v1373, 0.35355338
        %v1377 = vadd.f32 %v1376, %v1293
        %v1378 = vsel %vm1301, %v1377, -inf
        %1379 = vmax.xlane.f32.xlu0 %v1378
        %v1380 = vpop.xlane.xlu0 %1379
        %v1381 = vsub.f32 %v1377, %v1380
        %v1382 = vmul.f32 %v1381, 1.442695
        %v1383 = vpow.pop %v1382
        %v1384 = vsel %vm1301, %v1383, 0.0
        %1385 = vadd.xlane.f32.xlu0 %v1384
        %v1386 = vpop.xlane.xlu0 %1385
        %v1387 = vrcp.pop %v1386
        %v1388 = vmul.f32 %v1383, %v1387
        %1389 = vrot.lane.b32.xlu0 %v1290, 64
        %v1390 = vpop.permute.xlu0 %1389
        %v1393 = vsel %vm1301, %v1388, 0
        %1395 = vmatprep.subr.mxu0 0.0
        %1396 = vmatpush1.msra.mxu0 %v1390
        %1397 = vmatprep.subr.mxu0 0.0
        %1398 = vmatpush1.msra.mxu0 0.0
        %1399 = vmatprep.subr.mxu0 0.0
        %1400 = vmatpush1.msra.mxu0 0.0
        %1401 = vmatprep.subr.mxu0 0.0
        %1402 = vmatpush1.msra.mxu0 0.0
        %1403 = vmatprep.subr.mxu0 0.0
        %1404 = vmatpush1.msra.mxu0 0.0
        %1405 = vmatprep.subr.mxu0 0.0
        %1406 = vmatpush1.msra.mxu0 0.0
        %1407 = vmatprep.subr.mxu0 0.0
        %1408 = vmatpush1.msra.mxu0 0.0
        %1409 = vmatprep.subr.mxu0 0.0
        %1410 = vmatpush1.msra.mxu0 0.0
        %1411 = vmatprep.subr.mxu0 0.0
        %1412 = vmatpush1.msra.mxu0 0.0
        %1413 = vmatprep.subr.mxu0 0.0
        %1414 = vmatpush1.msra.mxu0 0.0
        %1415 = vmatprep.subr.mxu0 0.0
        %1416 = vmatpush1.msra.mxu0 0.0
        %1417 = vmatprep.subr.mxu0 0.0
        %1418 = vmatpush1.msra.mxu0 0.0
        %1419 = vmatprep.subr.mxu0 0.0
        %1420 = vmatpush1.msra.mxu0 0.0
        %1421 = vmatprep.subr.mxu0 0.0
        %1422 = vmatpush1.msra.mxu0 0.0
        %1423 = vmatprep.subr.mxu0 0.0
        %1424 = vmatpush1.msra.mxu0 0.0
        %1425 = vmatprep.subr.mxu0 0.0
        %1426 = vmatpush1.msra.mxu0 0.0
        %1427 = vmatprep.subr.mxu0 0.0
        %1428 = vmatpush1.msra.mxu0 0.0
        %1429 = vmatprep.subr.mxu0 0.0
        %1430 = vmatpush1.msra.mxu0 0.0
        %1431 = vmatprep.subr.mxu0 0.0
        %1432 = vmatpush1.msra.mxu0 0.0
        %1433 = vmatprep.subr.mxu0 0.0
        %1434 = vmatpush1.msra.mxu0 0.0
        %1435 = vmatprep.subr.mxu0 0.0
        %1436 = vmatpush1.msra.mxu0 0.0
        %1437 = vmatprep.subr.mxu0 0.0
        %1438 = vmatpush1.msra.mxu0 0.0
        %1439 = vmatprep.subr.mxu0 0.0
        %1440 = vmatpush1.msra.mxu0 0.0
        %1441 = vmatprep.subr.mxu0 0.0
        %1442 = vmatpush1.msra.mxu0 0.0
        %1443 = vmatprep.subr.mxu0 0.0
        %1444 = vmatpush1.msra.mxu0 0.0
        %1445 = vmatprep.subr.mxu0 0.0
        %1446 = vmatpush1.msra.mxu0 0.0
        %1447 = vmatprep.subr.mxu0 0.0
        %1448 = vmatpush1.msra.mxu0 0.0
        %1449 = vmatprep.subr.mxu0 0.0
        %1450 = vmatpush1.msra.mxu0 0.0
        %1451 = vmatprep.subr.mxu0 0.0
        %1452 = vmatpush1.msra.mxu0 0.0
        %1453 = vmatprep.subr.mxu0 0.0
        %1454 = vmatpush1.msra.mxu0 0.0
        %1455 = vmatprep.subr.mxu0 0.0
        %1456 = vmatpush1.msra.mxu0 0.0
        %1457 = vmatprep.subr.mxu0 0.0
        %1458 = vmatpush1.msra.mxu0 0.0
        %1459 = vmatprep.mubr.f32.mxu0 0.0
        %1460 = vmatmul.mubr.f32.gmra.mrb[0].mxu0 %v1393
        %v1461 = vpop.f32.mrb[0].mxu0
        %v1462 = vadd.f32 0.0, %v1461
        %v1463 = vpop.f32.mrb[0].mxu0
        %1464 = vdwg.mxu0
        %1465 = vrot.lane.b32.xlu0 %v1290, 120
        %v1466 = vpop.permute.xlu0 %1465
        %1467 = vrot.lane.b32.xlu0 %v1290, 88
        %v1468 = vpop.permute.xlu0 %1467
        %v1469 = vsel %vm1301, %v1466, 0
        %v1471 = vsel %vm1301, %v1468, 0
        %1473 = vmatprep.subr.mxu0 0.0
        %1474 = vmatpush1.xpose.msra.mxu0 %v1471
        %1475 = vmatprep.subr.mxu0 0.0
        %1476 = vmatpush1.xpose.msra.mxu0 0.0
        %1477 = vmatprep.subr.mxu0 0.0
        %1478 = vmatpush1.xpose.msra.mxu0 0.0
        %1479 = vmatprep.subr.mxu0 0.0
        %1480 = vmatpush1.xpose.msra.mxu0 0.0
        %1481 = vmatprep.subr.mxu0 0.0
        %1482 = vmatpush1.xpose.msra.mxu0 0.0
        %1483 = vmatprep.subr.mxu0 0.0
        %1484 = vmatpush1.xpose.msra.mxu0 0.0
        %1485 = vmatprep.subr.mxu0 0.0
        %1486 = vmatpush1.xpose.msra.mxu0 0.0
        %1487 = vmatprep.subr.mxu0 0.0
        %1488 = vmatpush1.xpose.msra.mxu0 0.0
        %1489 = vmatprep.subr.mxu0 0.0
        %1490 = vmatpush1.xpose.msra.mxu0 0.0
        %1491 = vmatprep.subr.mxu0 0.0
        %1492 = vmatpush1.xpose.msra.mxu0 0.0
        %1493 = vmatprep.subr.mxu0 0.0
        %1494 = vmatpush1.xpose.msra.mxu0 0.0
        %1495 = vmatprep.subr.mxu0 0.0
        %1496 = vmatpush1.xpose.msra.mxu0 0.0
        %1497 = vmatprep.subr.mxu0 0.0
        %1498 = vmatpush1.xpose.msra.mxu0 0.0
        %1499 = vmatprep.subr.mxu0 0.0
        %1500 = vmatpush1.xpose.msra.mxu0 0.0
        %1501 = vmatprep.subr.mxu0 0.0
        %1502 = vmatpush1.xpose.msra.mxu0 0.0
        %1503 = vmatprep.subr.mxu0 0.0
        %1504 = vmatpush1.xpose.msra.mxu0 0.0
        %1505 = vmatprep.subr.mxu0 0.0
        %1506 = vmatpush1.xpose.msra.mxu0 0.0
        %1507 = vmatprep.subr.mxu0 0.0
        %1508 = vmatpush1.xpose.msra.mxu0 0.0
        %1509 = vmatprep.subr.mxu0 0.0
        %1510 = vmatpush1.xpose.msra.mxu0 0.0
        %1511 = vmatprep.subr.mxu0 0.0
        %1512 = vmatpush1.xpose.msra.mxu0 0.0
        %1513 = vmatprep.subr.mxu0 0.0
        %1514 = vmatpush1.xpose.msra.mxu0 0.0
        %1515 = vmatprep.subr.mxu0 0.0
        %1516 = vmatpush1.xpose.msra.mxu0 0.0
        %1517 = vmatprep.subr.mxu0 0.0
        %1518 = vmatpush1.xpose.msra.mxu0 0.0
        %1519 = vmatprep.subr.mxu0 0.0
        %1520 = vmatpush1.xpose.msra.mxu0 0.0
        %1521 = vmatprep.subr.mxu0 0.0
        %1522 = vmatpush1.xpose.msra.mxu0 0.0
        %1523 = vmatprep.subr.mxu0 0.0
        %1524 = vmatpush1.xpose.msra.mxu0 0.0
        %1525 = vmatprep.subr.mxu0 0.0
        %1526 = vmatpush1.xpose.msra.mxu0 0.0
        %1527 = vmatprep.subr.mxu0 0.0
        %1528 = vmatpush1.xpose.msra.mxu0 0.0
        %1529 = vmatprep.subr.mxu0 0.0
        %1530 = vmatpush1.xpose.msra.mxu0 0.0
        %1531 = vmatprep.subr.mxu0 0.0
        %1532 = vmatpush1.xpose.msra.mxu0 0.0
        %1533 = vmatprep.subr.mxu0 0.0
        %1534 = vmatpush1.xpose.msra.mxu0 0.0
        %1535 = vmatprep.subr.mxu0 0.0
        %1536 = vmatpush1.xpose.msra.mxu0 0.0
        %1537 = vmatprep.mubr.f32.mxu0 0.0
        %1538 = vmatmul.mubr.f32.gmra.mrb[0].mxu0 %v1469
        %v1539 = vpop.f32.mrb[0].mxu0
        %v1540 = vadd.f32 0.0, %v1539
        %v1541 = vpop.f32.mrb[0].mxu0
        %1542 = vdwg.mxu0
        %v1543 = vmul.f32 %v1540, 0.35355338
        %v1544 = vadd.f32 %v1543, %v1293
        %v1545 = vsel %vm1301, %v1544, -inf
        %1546 = vmax.xlane.f32.xlu0 %v1545
        %v1547 = vpop.xlane.xlu0 %1546
        %v1548 = vsub.f32 %v1544, %v1547
        %v1549 = vmul.f32 %v1548, 1.442695
        %v1550 = vpow.pop %v1549
        %v1551 = vsel %vm1301, %v1550, 0.0
        %1552 = vadd.xlane.f32.xlu0 %v1551
        %v1553 = vpop.xlane.xlu0 %1552
        %v1554 = vrcp.pop %v1553
        %v1555 = vmul.f32 %v1550, %v1554
        %1556 = vrot.lane.b32.xlu0 %v1290, 56
        %v1557 = vpop.permute.xlu0 %1556
        %v1560 = vsel %vm1301, %v1555, 0
        %1562 = vmatprep.subr.mxu0 0.0
        %1563 = vmatpush1.msra.mxu0 %v1557
        %1564 = vmatprep.subr.mxu0 0.0
        %1565 = vmatpush1.msra.mxu0 0.0
        %1566 = vmatprep.subr.mxu0 0.0
        %1567 = vmatpush1.msra.mxu0 0.0
        %1568 = vmatprep.subr.mxu0 0.0
        %1569 = vmatpush1.msra.mxu0 0.0
        %1570 = vmatprep.subr.mxu0 0.0
        %1571 = vmatpush1.msra.mxu0 0.0
        %1572 = vmatprep.subr.mxu0 0.0
        %1573 = vmatpush1.msra.mxu0 0.0
        %1574 = vmatprep.subr.mxu0 0.0
        %1575 = vmatpush1.msra.mxu0 0.0
        %1576 = vmatprep.subr.mxu0 0.0
        %1577 = vmatpush1.msra.mxu0 0.0
        %1578 = vmatprep.subr.mxu0 0.0
        %1579 = vmatpush1.msra.mxu0 0.0
        %1580 = vmatprep.subr.mxu0 0.0
        %1581 = vmatpush1.msra.mxu0 0.0
        %1582 = vmatprep.subr.mxu0 0.0
        %1583 = vmatpush1.msra.mxu0 0.0
        %1584 = vmatprep.subr.mxu0 0.0
        %1585 = vmatpush1.msra.mxu0 0.0
        %1586 = vmatprep.subr.mxu0 0.0
        %1587 = vmatpush1.msra.mxu0 0.0
        %1588 = vmatprep.subr.mxu0 0.0
        %1589 = vmatpush1.msra.mxu0 0.0
        %1590 = vmatprep.subr.mxu0 0.0
        %1591 = vmatpush1.msra.mxu0 0.0
        %1592 = vmatprep.subr.mxu0 0.0
        %1593 = vmatpush1.msra.mxu0 0.0
        %1594 = vmatprep.subr.mxu0 0.0
        %1595 = vmatpush1.msra.mxu0 0.0
        %1596 = vmatprep.subr.mxu0 0.0
        %1597 = vmatpush1.msra.mxu0 0.0
        %1598 = vmatprep.subr.mxu0 0.0
        %1599 = vmatpush1.msra.mxu0 0.0
        %1600 = vmatprep.subr.mxu0 0.0
        %1601 = vmatpush1.msra.mxu0 0.0
        %1602 = vmatprep.subr.mxu0 0.0
        %1603 = vmatpush1.msra.mxu0 0.0
        %1604 = vmatprep.subr.mxu0 0.0
        %1605 = vmatpush1.msra.mxu0 0.0
        %1606 = vmatprep.subr.mxu0 0.0
        %1607 = vmatpush1.msra.mxu0 0.0
        %1608 = vmatprep.subr.mxu0 0.0
        %1609 = vmatpush1.msra.mxu0 0.0
        %1610 = vmatprep.subr.mxu0 0.0
        %1611 = vmatpush1.msra.mxu0 0.0
        %1612 = vmatprep.subr.mxu0 0.0
        %1613 = vmatpush1.msra.mxu0 0.0
        %1614 = vmatprep.subr.mxu0 0.0
        %1615 = vmatpush1.msra.mxu0 0.0
        %1616 = vmatprep.subr.mxu0 0.0
        %1617 = vmatpush1.msra.mxu0 0.0
        %1618 = vmatprep.subr.mxu0 0.0
        %1619 = vmatpush1.msra.mxu0 0.0
        %1620 = vmatprep.subr.mxu0 0.0
        %1621 = vmatpush1.msra.mxu0 0.0
        %1622 = vmatprep.subr.mxu0 0.0
        %1623 = vmatpush1.msra.mxu0 0.0
        %1624 = vmatprep.subr.mxu0 0.0
        %1625 = vmatpush1.msra.mxu0 0.0
        %1626 = vmatprep.mubr.f32.mxu0 0.0
        %1627 = vmatmul.mubr.f32.gmra.mrb[0].mxu0 %v1560
        %v1628 = vpop.f32.mrb[0].mxu0
        %v1629 = vadd.f32 0.0, %v1628
        %v1630 = vpop.f32.mrb[0].mxu0
        %1631 = vdwg.mxu0
        %v1633 = vsel %vm1301, %v1629, 0
        %1635 = vmatprep.subr.mxu0 0.0
        %1636 = vmatpush1.msra.mxu0 %v1295
        %1637 = vmatprep.subr.mxu0 0.0
        %1638 = vmatpush1.msra.mxu0 0.0
        %1639 = vmatprep.subr.mxu0 0.0
        %1640 = vmatpush1.msra.mxu0 0.0
        %1641 = vmatprep.subr.mxu0 0.0
        %1642 = vmatpush1.msra.mxu0 0.0
        %1643 = vmatprep.subr.mxu0 0.0
        %1644 = vmatpush1.msra.mxu0 0.0
        %1645 = vmatprep.subr.mxu0 0.0
        %1646 = vmatpush1.msra.mxu0 0.0
        %1647 = vmatprep.subr.mxu0 0.0
        %1648 = vmatpush1.msra.mxu0 0.0
        %1649 = vmatprep.subr.mxu0 0.0
        %1650 = vmatpush1.msra.mxu0 0.0
        %1651 = vmatprep.subr.mxu0 0.0
        %1652 = vmatpush1.msra.mxu0 0.0
        %1653 = vmatprep.subr.mxu0 0.0
        %1654 = vmatpush1.msra.mxu0 0.0
        %1655 = vmatprep.subr.mxu0 0.0
        %1656 = vmatpush1.msra.mxu0 0.0
        %1657 = vmatprep.subr.mxu0 0.0
        %1658 = vmatpush1.msra.mxu0 0.0
        %1659 = vmatprep.subr.mxu0 0.0
        %1660 = vmatpush1.msra.mxu0 0.0
        %1661 = vmatprep.subr.mxu0 0.0
        %1662 = vmatpush1.msra.mxu0 0.0
        %1663 = vmatprep.subr.mxu0 0.0
        %1664 = vmatpush1.msra.mxu0 0.0
        %1665 = vmatprep.subr.mxu0 0.0
        %1666 = vmatpush1.msra.mxu0 0.0
        %1667 = vmatprep.subr.mxu0 0.0
        %1668 = vmatpush1.msra.mxu0 0.0
        %1669 = vmatprep.subr.mxu0 0.0
        %1670 = vmatpush1.msra.mxu0 0.0
        %1671 = vmatprep.subr.mxu0 0.0
        %1672 = vmatpush1.msra.mxu0 0.0
        %1673 = vmatprep.subr.mxu0 0.0
        %1674 = vmatpush1.msra.mxu0 0.0
        %1675 = vmatprep.subr.mxu0 0.0
        %1676 = vmatpush1.msra.mxu0 0.0
        %1677 = vmatprep.subr.mxu0 0.0
        %1678 = vmatpush1.msra.mxu0 0.0
        %1679 = vmatprep.subr.mxu0 0.0
        %1680 = vmatpush1.msra.mxu0 0.0
        %1681 = vmatprep.subr.mxu0 0.0
        %1682 = vmatpush1.msra.mxu0 0.0
        %1683 = vmatprep.subr.mxu0 0.0
        %1684 = vmatpush1.msra.mxu0 0.0
        %1685 = vmatprep.subr.mxu0 0.0
        %1686 = vmatpush1.msra.mxu0 0.0
        %1687 = vmatprep.subr.mxu0 0.0
        %1688 = vmatpush1.msra.mxu0 0.0
        %1689 = vmatprep.subr.mxu0 0.0
        %1690 = vmatpush1.msra.mxu0 0.0
        %1691 = vmatprep.subr.mxu0 0.0
        %1692 = vmatpush1.msra.mxu0 0.0
        %1693 = vmatprep.subr.mxu0 0.0
        %1694 = vmatpush1.msra.mxu0 0.0
        %1695 = vmatprep.subr.mxu0 0.0
        %1696 = vmatpush1.msra.mxu0 0.0
        %1697 = vmatprep.subr.mxu0 0.0
        %1698 = vmatpush1.msra.mxu0 0.0
        %1699 = vmatprep.mubr.f32.mxu0 0.0
        %1700 = vmatmul.mubr.f32.gmra.mrb[0].mxu0 %v1633
        %v1701 = vpop.f32.mrb[0].mxu0
        %v1702 = vadd.f32 0.0, %v1701
        %v1703 = vpop.f32.mrb[0].mxu0
        %1704 = vdwg.mxu0
        %v1706 = vsel %vm1301, %v1462, 0
        %1708 = vmatprep.subr.mxu0 0.0
        %1709 = vmatpush1.msra.mxu0 %v1294
        %1710 = vmatprep.subr.mxu0 0.0
        %1711 = vmatpush1.msra.mxu0 0.0
        %1712 = vmatprep.subr.mxu0 0.0
        %1713 = vmatpush1.msra.mxu0 0.0
        %1714 = vmatprep.subr.mxu0 0.0
        %1715 = vmatpush1.msra.mxu0 0.0
        %1716 = vmatprep.subr.mxu0 0.0
        %1717 = vmatpush1.msra.mxu0 0.0
        %1718 = vmatprep.subr.mxu0 0.0
        %1719 = vmatpush1.msra.mxu0 0.0
        %1720 = vmatprep.subr.mxu0 0.0
        %1721 = vmatpush1.msra.mxu0 0.0
        %1722 = vmatprep.subr.mxu0 0.0
        %1723 = vmatpush1.msra.mxu0 0.0
        %1724 = vmatprep.subr.mxu0 0.0
        %1725 = vmatpush1.msra.mxu0 0.0
        %1726 = vmatprep.subr.mxu0 0.0
        %1727 = vmatpush1.msra.mxu0 0.0
        %1728 = vmatprep.subr.mxu0 0.0
        %1729 = vmatpush1.msra.mxu0 0.0
        %1730 = vmatprep.subr.mxu0 0.0
        %1731 = vmatpush1.msra.mxu0 0.0
        %1732 = vmatprep.subr.mxu0 0.0
        %1733 = vmatpush1.msra.mxu0 0.0
        %1734 = vmatprep.subr.mxu0 0.0
        %1735 = vmatpush1.msra.mxu0 0.0
        %1736 = vmatprep.subr.mxu0 0.0
        %1737 = vmatpush1.msra.mxu0 0.0
        %1738 = vmatprep.subr.mxu0 0.0
        %1739 = vmatpush1.msra.mxu0 0.0
        %1740 = vmatprep.subr.mxu0 0.0
        %1741 = vmatpush1.msra.mxu0 0.0
        %1742 = vmatprep.subr.mxu0 0.0
        %1743 = vmatpush1.msra.mxu0 0.0
        %1744 = vmatprep.subr.mxu0 0.0
        %1745 = vmatpush1.msra.mxu0 0.0
        %1746 = vmatprep.subr.mxu0 0.0
        %1747 = vmatpush1.msra.mxu0 0.0
        %1748 = vmatprep.subr.mxu0 0.0
        %1749 = vmatpush1.msra.mxu0 0.0
        %1750 = vmatprep.subr.mxu0 0.0
        %1751 = vmatpush1.msra.mxu0 0.0
        %1752 = vmatprep.subr.mxu0 0.0
        %1753 = vmatpush1.msra.mxu0 0.0
        %1754 = vmatprep.subr.mxu0 0.0
        %1755 = vmatpush1.msra.mxu0 0.0
        %1756 = vmatprep.subr.mxu0 0.0
        %1757 = vmatpush1.msra.mxu0 0.0
        %1758 = vmatprep.subr.mxu0 0.0
        %1759 = vmatpush1.msra.mxu0 0.0
        %1760 = vmatprep.subr.mxu0 0.0
        %1761 = vmatpush1.msra.mxu0 0.0
        %1762 = vmatprep.subr.mxu0 0.0
        %1763 = vmatpush1.msra.mxu0 0.0
        %1764 = vmatprep.subr.mxu0 0.0
        %1765 = vmatpush1.msra.mxu0 0.0
        %1766 = vmatprep.subr.mxu0 0.0
        %1767 = vmatpush1.msra.mxu0 0.0
        %1768 = vmatprep.subr.mxu0 0.0
        %1769 = vmatpush1.msra.mxu0 0.0
        %1770 = vmatprep.subr.mxu0 0.0
        %1771 = vmatpush1.msra.mxu0 0.0
        %1772 = vmatprep.mubr.f32.mxu0 0.0
        %1773 = vmatmul.mubr.f32.gmra.mrb[0].mxu0 %v1706
        %v1774 = vpop.f32.mrb[0].mxu0
        %v1775 = vadd.f32 %v1702, %v1774
        %v1776 = vpop.f32.mrb[0].mxu0
        %1777 = vdwg.mxu0
        %1778 = vrot.lane.b32.xlu0 %v1290, 112
        %v1779 = vpop.permute.xlu0 %1778
        %1780 = vrot.lane.b32.xlu0 %v1290, 80
        %v1781 = vpop.permute.xlu0 %1780
        %v1782 = vsel %vm1301, %v1779, 0
        %v1784 = vsel %vm1301, %v1781, 0
        %1786 = vmatprep.subr.mxu0 0.0
        %1787 = vmatpush1.xpose.msra.mxu0 %v1784
        %1788 = vmatprep.subr.mxu0 0.0
        %1789 = vmatpush1.xpose.msra.mxu0 0.0
        %1790 = vmatprep.subr.mxu0 0.0
        %1791 = vmatpush1.xpose.msra.mxu0 0.0
        %1792 = vmatprep.subr.mxu0 0.0
        %1793 = vmatpush1.xpose.msra.mxu0 0.0
        %1794 = vmatprep.subr.mxu0 0.0
        %1795 = vmatpush1.xpose.msra.mxu0 0.0
        %1796 = vmatprep.subr.mxu0 0.0
        %1797 = vmatpush1.xpose.msra.mxu0 0.0
        %1798 = vmatprep.subr.mxu0 0.0
        %1799 = vmatpush1.xpose.msra.mxu0 0.0
        %1800 = vmatprep.subr.mxu0 0.0
        %1801 = vmatpush1.xpose.msra.mxu0 0.0
        %1802 = vmatprep.subr.mxu0 0.0
        %1803 = vmatpush1.xpose.msra.mxu0 0.0
        %1804 = vmatprep.subr.mxu0 0.0
        %1805 = vmatpush1.xpose.msra.mxu0 0.0
        %1806 = vmatprep.subr.mxu0 0.0
        %1807 = vmatpush1.xpose.msra.mxu0 0.0
        %1808 = vmatprep.subr.mxu0 0.0
        %1809 = vmatpush1.xpose.msra.mxu0 0.0
        %1810 = vmatprep.subr.mxu0 0.0
        %1811 = vmatpush1.xpose.msra.mxu0 0.0
        %1812 = vmatprep.subr.mxu0 0.0
        %1813 = vmatpush1.xpose.msra.mxu0 0.0
        %1814 = vmatprep.subr.mxu0 0.0
        %1815 = vmatpush1.xpose.msra.mxu0 0.0
        %1816 = vmatprep.subr.mxu0 0.0
        %1817 = vmatpush1.xpose.msra.mxu0 0.0
        %1818 = vmatprep.subr.mxu0 0.0
        %1819 = vmatpush1.xpose.msra.mxu0 0.0
        %1820 = vmatprep.subr.mxu0 0.0
        %1821 = vmatpush1.xpose.msra.mxu0 0.0
        %1822 = vmatprep.subr.mxu0 0.0
        %1823 = vmatpush1.xpose.msra.mxu0 0.0
        %1824 = vmatprep.subr.mxu0 0.0
        %1825 = vmatpush1.xpose.msra.mxu0 0.0
        %1826 = vmatprep.subr.mxu0 0.0
        %1827 = vmatpush1.xpose.msra.mxu0 0.0
        %1828 = vmatprep.subr.mxu0 0.0
        %1829 = vmatpush1.xpose.msra.mxu0 0.0
        %1830 = vmatprep.subr.mxu0 0.0
        %1831 = vmatpush1.xpose.msra.mxu0 0.0
        %1832 = vmatprep.subr.mxu0 0.0
        %1833 = vmatpush1.xpose.msra.mxu0 0.0
        %1834 = vmatprep.subr.mxu0 0.0
        %1835 = vmatpush1.xpose.msra.mxu0 0.0
        %1836 = vmatprep.subr.mxu0 0.0
        %1837 = vmatpush1.xpose.msra.mxu0 0.0
        %1838 = vmatprep.subr.mxu0 0.0
        %1839 = vmatpush1.xpose.msra.mxu0 0.0
        %1840 = vmatprep.subr.mxu0 0.0
        %1841 = vmatpush1.xpose.msra.mxu0 0.0
        %1842 = vmatprep.subr.mxu0 0.0
        %1843 = vmatpush1.xpose.msra.mxu0 0.0
        %1844 = vmatprep.subr.mxu0 0.0
        %1845 = vmatpush1.xpose.msra.mxu0 0.0
        %1846 = vmatprep.subr.mxu0 0.0
        %1847 = vmatpush1.xpose.msra.mxu0 0.0
        %1848 = vmatprep.subr.mxu0 0.0
        %1849 = vmatpush1.xpose.msra.mxu0 0.0
        %1850 = vmatprep.mubr.f32.mxu0 0.0
        %1851 = vmatmul.mubr.f32.gmra.mrb[0].mxu0 %v1782
        %v1852 = vpop.f32.mrb[0].mxu0
        %v1853 = vadd.f32 0.0, %v1852
        %v1854 = vpop.f32.mrb[0].mxu0
        %1855 = vdwg.mxu0
        %v1856 = vmul.f32 %v1853, 0.35355338
        %v1857 = vadd.f32 %v1856, %v1293
        %v1858 = vsel %vm1301, %v1857, -inf
        %1859 = vmax.xlane.f32.xlu0 %v1858
        %v1860 = vpop.xlane.xlu0 %1859
        %v1861 = vsub.f32 %v1857, %v1860
        %v1862 = vmul.f32 %v1861, 1.442695
        %v1863 = vpow.pop %v1862
        %v1864 = vsel %vm1301, %v1863, 0.0
        %1865 = vadd.xlane.f32.xlu0 %v1864
        %v1866 = vpop.xlane.xlu0 %1865
        %v1867 = vrcp.pop %v1866
        %v1868 = vmul.f32 %v1863, %v1867
        %1869 = vrot.lane.b32.xlu0 %v1290, 48
        %v1870 = vpop.permute.xlu0 %1869
        %v1873 = vsel %vm1301, %v1868, 0
        %1875 = vmatprep.subr.mxu0 0.0
        %1876 = vmatpush1.msra.mxu0 %v1870
        %1877 = vmatprep.subr.mxu0 0.0
        %1878 = vmatpush1.msra.mxu0 0.0
        %1879 = vmatprep.subr.mxu0 0.0
        %1880 = vmatpush1.msra.mxu0 0.0
        %1881 = vmatprep.subr.mxu0 0.0
        %1882 = vmatpush1.msra.mxu0 0.0
        %1883 = vmatprep.subr.mxu0 0.0
        %1884 = vmatpush1.msra.mxu0 0.0
        %1885 = vmatprep.subr.mxu0 0.0
        %1886 = vmatpush1.msra.mxu0 0.0
        %1887 = vmatprep.subr.mxu0 0.0
        %1888 = vmatpush1.msra.mxu0 0.0
        %1889 = vmatprep.subr.mxu0 0.0
        %1890 = vmatpush1.msra.mxu0 0.0
        %1891 = vmatprep.subr.mxu0 0.0
        %1892 = vmatpush1.msra.mxu0 0.0
        %1893 = vmatprep.subr.mxu0 0.0
        %1894 = vmatpush1.msra.mxu0 0.0
        %1895 = vmatprep.subr.mxu0 0.0
        %1896 = vmatpush1.msra.mxu0 0.0
        %1897 = vmatprep.subr.mxu0 0.0
        %1898 = vmatpush1.msra.mxu0 0.0
        %1899 = vmatprep.subr.mxu0 0.0
        %1900 = vmatpush1.msra.mxu0 0.0
        %1901 = vmatprep.subr.mxu0 0.0
        %1902 = vmatpush1.msra.mxu0 0.0
        %1903 = vmatprep.subr.mxu0 0.0
        %1904 = vmatpush1.msra.mxu0 0.0
        %1905 = vmatprep.subr.mxu0 0.0
        %1906 = vmatpush1.msra.mxu0 0.0
        %1907 = vmatprep.subr.mxu0 0.0
        %1908 = vmatpush1.msra.mxu0 0.0
        %1909 = vmatprep.subr.mxu0 0.0
        %1910 = vmatpush1.msra.mxu0 0.0
        %1911 = vmatprep.subr.mxu0 0.0
        %1912 = vmatpush1.msra.mxu0 0.0
        %1913 = vmatprep.subr.mxu0 0.0
        %1914 = vmatpush1.msra.mxu0 0.0
        %1915 = vmatprep.subr.mxu0 0.0
        %1916 = vmatpush1.msra.mxu0 0.0
        %1917 = vmatprep.subr.mxu0 0.0
        %1918 = vmatpush1.msra.mxu0 0.0
        %1919 = vmatprep.subr.mxu0 0.0
        %1920 = vmatpush1.msra.mxu0 0.0
        %1921 = vmatprep.subr.mxu0 0.0
        %1922 = vmatpush1.msra.mxu0 0.0
        %1923 = vmatprep.subr.mxu0 0.0
        %1924 = vmatpush1.msra.mxu0 0.0
        %1925 = vmatprep.subr.mxu0 0.0
        %1926 = vmatpush1.msra.mxu0 0.0
        %1927 = vmatprep.subr.mxu0 0.0
        %1928 = vmatpush1.msra.mxu0 0.0
        %1929 = vmatprep.subr.mxu0 0.0
        %1930 = vmatpush1.msra.mxu0 0.0
        %1931 = vmatprep.subr.mxu0 0.0
        %1932 = vmatpush1.msra.mxu0 0.0
        %1933 = vmatprep.subr.mxu0 0.0
        %1934 = vmatpush1.msra.mxu0 0.0
        %1935 = vmatprep.subr.mxu0 0.0
        %1936 = vmatpush1.msra.mxu0 0.0
        %1937 = vmatprep.subr.mxu0 0.0
        %1938 = vmatpush1.msra.mxu0 0.0
        %1939 = vmatprep.mubr.f32.mxu0 0.0
        %1940 = vmatmul.mubr.f32.gmra.mrb[0].mxu0 %v1873
        %v1941 = vpop.f32.mrb[0].mxu0
        %v1942 = vadd.f32 0.0, %v1941
        %v1943 = vpop.f32.mrb[0].mxu0
        %1944 = vdwg.mxu0
        %v1946 = vsel %vm1301, %v1942, 0
        %1948 = vmatprep.subr.mxu0 0.0
        %1949 = vmatpush1.msra.mxu0 %v1296
        %1950 = vmatprep.subr.mxu0 0.0
        %1951 = vmatpush1.msra.mxu0 0.0
        %1952 = vmatprep.subr.mxu0 0.0
        %1953 = vmatpush1.msra.mxu0 0.0
        %1954 = vmatprep.subr.mxu0 0.0
        %1955 = vmatpush1.msra.mxu0 0.0
        %1956 = vmatprep.subr.mxu0 0.0
        %1957 = vmatpush1.msra.mxu0 0.0
        %1958 = vmatprep.subr.mxu0 0.0
        %1959 = vmatpush1.msra.mxu0 0.0
        %1960 = vmatprep.subr.mxu0 0.0
        %1961 = vmatpush1.msra.mxu0 0.0
        %1962 = vmatprep.subr.mxu0 0.0
        %1963 = vmatpush1.msra.mxu0 0.0
        %1964 = vmatprep.subr.mxu0 0.0
        %1965 = vmatpush1.msra.mxu0 0.0
        %1966 = vmatprep.subr.mxu0 0.0
        %1967 = vmatpush1.msra.mxu0 0.0
        %1968 = vmatprep.subr.mxu0 0.0
        %1969 = vmatpush1.msra.mxu0 0.0
        %1970 = vmatprep.subr.mxu0 0.0
        %1971 = vmatpush1.msra.mxu0 0.0
        %1972 = vmatprep.subr.mxu0 0.0
        %1973 = vmatpush1.msra.mxu0 0.0
        %1974 = vmatprep.subr.mxu0 0.0
        %1975 = vmatpush1.msra.mxu0 0.0
        %1976 = vmatprep.subr.mxu0 0.0
        %1977 = vmatpush1.msra.mxu0 0.0
        %1978 = vmatprep.subr.mxu0 0.0
        %1979 = vmatpush1.msra.mxu0 0.0
        %1980 = vmatprep.subr.mxu0 0.0
        %1981 = vmatpush1.msra.mxu0 0.0
        %1982 = vmatprep.subr.mxu0 0.0
        %1983 = vmatpush1.msra.mxu0 0.0
        %1984 = vmatprep.subr.mxu0 0.0
        %1985 = vmatpush1.msra.mxu0 0.0
        %1986 = vmatprep.subr.mxu0 0.0
        %1987 = vmatpush1.msra.mxu0 0.0
        %1988 = vmatprep.subr.mxu0 0.0
        %1989 = vmatpush1.msra.mxu0 0.0
        %1990 = vmatprep.subr.mxu0 0.0
        %1991 = vmatpush1.msra.mxu0 0.0
        %1992 = vmatprep.subr.mxu0 0.0
        %1993 = vmatpush1.msra.mxu0 0.0
        %1994 = vmatprep.subr.mxu0 0.0
        %1995 = vmatpush1.msra.mxu0 0.0
        %1996 = vmatprep.subr.mxu0 0.0
        %1997 = vmatpush1.msra.mxu0 0.0
        %1998 = vmatprep.subr.mxu0 0.0
        %1999 = vmatpush1.msra.mxu0 0.0
        %2000 = vmatprep.subr.mxu0 0.0
        %2001 = vmatpush1.msra.mxu0 0.0
        %2002 = vmatprep.subr.mxu0 0.0
        %2003 = vmatpush1.msra.mxu0 0.0
        %2004 = vmatprep.subr.mxu0 0.0
        %2005 = vmatpush1.msra.mxu0 0.0
        %2006 = vmatprep.subr.mxu0 0.0
        %2007 = vmatpush1.msra.mxu0 0.0
        %2008 = vmatprep.subr.mxu0 0.0
        %2009 = vmatpush1.msra.mxu0 0.0
        %2010 = vmatprep.subr.mxu0 0.0
        %2011 = vmatpush1.msra.mxu0 0.0
        %2012 = vmatprep.mubr.f32.mxu0 0.0
        %2013 = vmatmul.mubr.f32.gmra.mrb[0].mxu0 %v1946
        %v2014 = vpop.f32.mrb[0].mxu0
        %v2015 = vadd.f32 0.0, %v2014
        %v2016 = vpop.f32.mrb[0].mxu0
        %2017 = vdwg.mxu0
        %v2018 = vadd.f32 %v1775, %v2015
        %2019 = vrot.lane.b32.xlu0 %v1290, 104
        %v2020 = vpop.permute.xlu0 %2019
        %2021 = vrot.lane.b32.xlu0 %v1290, 72
        %v2022 = vpop.permute.xlu0 %2021
        %v2023 = vsel %vm1301, %v2020, 0
        %v2025 = vsel %vm1301, %v2022, 0
        %2027 = vmatprep.subr.mxu0 0.0
        %2028 = vmatpush1.xpose.msra.mxu0 %v2025
        %2029 = vmatprep.subr.mxu0 0.0
        %2030 = vmatpush1.xpose.msra.mxu0 0.0
        %2031 = vmatprep.subr.mxu0 0.0
        %2032 = vmatpush1.xpose.msra.mxu0 0.0
        %2033 = vmatprep.subr.mxu0 0.0
        %2034 = vmatpush1.xpose.msra.mxu0 0.0
        %2035 = vmatprep.subr.mxu0 0.0
        %2036 = vmatpush1.xpose.msra.mxu0 0.0
        %2037 = vmatprep.subr.mxu0 0.0
        %2038 = vmatpush1.xpose.msra.mxu0 0.0
        %2039 = vmatprep.subr.mxu0 0.0
        %2040 = vmatpush1.xpose.msra.mxu0 0.0
        %2041 = vmatprep.subr.mxu0 0.0
        %2042 = vmatpush1.xpose.msra.mxu0 0.0
        %2043 = vmatprep.subr.mxu0 0.0
        %2044 = vmatpush1.xpose.msra.mxu0 0.0
        %2045 = vmatprep.subr.mxu0 0.0
        %2046 = vmatpush1.xpose.msra.mxu0 0.0
        %2047 = vmatprep.subr.mxu0 0.0
        %2048 = vmatpush1.xpose.msra.mxu0 0.0
        %2049 = vmatprep.subr.mxu0 0.0
        %2050 = vmatpush1.xpose.msra.mxu0 0.0
        %2051 = vmatprep.subr.mxu0 0.0
        %2052 = vmatpush1.xpose.msra.mxu0 0.0
        %2053 = vmatprep.subr.mxu0 0.0
        %2054 = vmatpush1.xpose.msra.mxu0 0.0
        %2055 = vmatprep.subr.mxu0 0.0
        %2056 = vmatpush1.xpose.msra.mxu0 0.0
        %2057 = vmatprep.subr.mxu0 0.0
        %2058 = vmatpush1.xpose.msra.mxu0 0.0
        %2059 = vmatprep.subr.mxu0 0.0
        %2060 = vmatpush1.xpose.msra.mxu0 0.0
        %2061 = vmatprep.subr.mxu0 0.0
        %2062 = vmatpush1.xpose.msra.mxu0 0.0
        %2063 = vmatprep.subr.mxu0 0.0
        %2064 = vmatpush1.xpose.msra.mxu0 0.0
        %2065 = vmatprep.subr.mxu0 0.0
        %2066 = vmatpush1.xpose.msra.mxu0 0.0
        %2067 = vmatprep.subr.mxu0 0.0
        %2068 = vmatpush1.xpose.msra.mxu0 0.0
        %2069 = vmatprep.subr.mxu0 0.0
        %2070 = vmatpush1.xpose.msra.mxu0 0.0
        %2071 = vmatprep.subr.mxu0 0.0
        %2072 = vmatpush1.xpose.msra.mxu0 0.0
        %2073 = vmatprep.subr.mxu0 0.0
        %2074 = vmatpush1.xpose.msra.mxu0 0.0
        %2075 = vmatprep.subr.mxu0 0.0
        %2076 = vmatpush1.xpose.msra.mxu0 0.0
        %2077 = vmatprep.subr.mxu0 0.0
        %2078 = vmatpush1.xpose.msra.mxu0 0.0
        %2079 = vmatprep.subr.mxu0 0.0
        %2080 = vmatpush1.xpose.msra.mxu0 0.0
        %2081 = vmatprep.subr.mxu0 0.0
        %2082 = vmatpush1.xpose.msra.mxu0 0.0
        %2083 = vmatprep.subr.mxu0 0.0
        %2084 = vmatpush1.xpose.msra.mxu0 0.0
        %2085 = vmatprep.subr.mxu0 0.0
        %2086 = vmatpush1.xpose.msra.mxu0 0.0
        %2087 = vmatprep.subr.mxu0 0.0
        %2088 = vmatpush1.xpose.msra.mxu0 0.0
        %2089 = vmatprep.subr.mxu0 0.0
        %2090 = vmatpush1.xpose.msra.mxu0 0.0
        %2091 = vmatprep.mubr.f32.mxu0 0.0
        %2092 = vmatmul.mubr.f32.gmra.mrb[0].mxu0 %v2023
        %v2093 = vpop.f32.mrb[0].mxu0
        %v2094 = vadd.f32 0.0, %v2093
        %v2095 = vpop.f32.mrb[0].mxu0
        %2096 = vdwg.mxu0
        %v2097 = vmul.f32 %v2094, 0.35355338
        %v2098 = vadd.f32 %v2097, %v1293
        %v2099 = vsel %vm1301, %v2098, -inf
        %2100 = vmax.xlane.f32.xlu0 %v2099
        %v2101 = vpop.xlane.xlu0 %2100
        %v2102 = vsub.f32 %v2098, %v2101
        %v2103 = vmul.f32 %v2102, 1.442695
        %v2104 = vpow.pop %v2103
        %v2105 = vsel %vm1301, %v2104, 0.0
        %2106 = vadd.xlane.f32.xlu0 %v2105
        %v2107 = vpop.xlane.xlu0 %2106
        %v2108 = vrcp.pop %v2107
        %v2109 = vmul.f32 %v2104, %v2108
        %2110 = vrot.lane.b32.xlu0 %v1290, 40
        %v2111 = vpop.permute.xlu0 %2110
        %v2114 = vsel %vm1301, %v2109, 0
        %2116 = vmatprep.subr.mxu0 0.0
        %2117 = vmatpush1.msra.mxu0 %v2111
        %2118 = vmatprep.subr.mxu0 0.0
        %2119 = vmatpush1.msra.mxu0 0.0
        %2120 = vmatprep.subr.mxu0 0.0
        %2121 = vmatpush1.msra.mxu0 0.0
        %2122 = vmatprep.subr.mxu0 0.0
        %2123 = vmatpush1.msra.mxu0 0.0
        %2124 = vmatprep.subr.mxu0 0.0
        %2125 = vmatpush1.msra.mxu0 0.0
        %2126 = vmatprep.subr.mxu0 0.0
        %2127 = vmatpush1.msra.mxu0 0.0
        %2128 = vmatprep.subr.mxu0 0.0
        %2129 = vmatpush1.msra.mxu0 0.0
        %2130 = vmatprep.subr.mxu0 0.0
        %2131 = vmatpush1.msra.mxu0 0.0
        %2132 = vmatprep.subr.mxu0 0.0
        %2133 = vmatpush1.msra.mxu0 0.0
        %2134 = vmatprep.subr.mxu0 0.0
        %2135 = vmatpush1.msra.mxu0 0.0
        %2136 = vmatprep.subr.mxu0 0.0
        %2137 = vmatpush1.msra.mxu0 0.0
        %2138 = vmatprep.subr.mxu0 0.0
        %2139 = vmatpush1.msra.mxu0 0.0
        %2140 = vmatprep.subr.mxu0 0.0
        %2141 = vmatpush1.msra.mxu0 0.0
        %2142 = vmatprep.subr.mxu0 0.0
        %2143 = vmatpush1.msra.mxu0 0.0
        %2144 = vmatprep.subr.mxu0 0.0
        %2145 = vmatpush1.msra.mxu0 0.0
        %2146 = vmatprep.subr.mxu0 0.0
        %2147 = vmatpush1.msra.mxu0 0.0
        %2148 = vmatprep.subr.mxu0 0.0
        %2149 = vmatpush1.msra.mxu0 0.0
        %2150 = vmatprep.subr.mxu0 0.0
        %2151 = vmatpush1.msra.mxu0 0.0
        %2152 = vmatprep.subr.mxu0 0.0
        %2153 = vmatpush1.msra.mxu0 0.0
        %2154 = vmatprep.subr.mxu0 0.0
        %2155 = vmatpush1.msra.mxu0 0.0
        %2156 = vmatprep.subr.mxu0 0.0
        %2157 = vmatpush1.msra.mxu0 0.0
        %2158 = vmatprep.subr.mxu0 0.0
        %2159 = vmatpush1.msra.mxu0 0.0
        %2160 = vmatprep.subr.mxu0 0.0
        %2161 = vmatpush1.msra.mxu0 0.0
        %2162 = vmatprep.subr.mxu0 0.0
        %2163 = vmatpush1.msra.mxu0 0.0
        %2164 = vmatprep.subr.mxu0 0.0
        %2165 = vmatpush1.msra.mxu0 0.0
        %2166 = vmatprep.subr.mxu0 0.0
        %2167 = vmatpush1.msra.mxu0 0.0
        %2168 = vmatprep.subr.mxu0 0.0
        %2169 = vmatpush1.msra.mxu0 0.0
        %2170 = vmatprep.subr.mxu0 0.0
        %2171 = vmatpush1.msra.mxu0 0.0
        %2172 = vmatprep.subr.mxu0 0.0
        %2173 = vmatpush1.msra.mxu0 0.0
        %2174 = vmatprep.subr.mxu0 0.0
        %2175 = vmatpush1.msra.mxu0 0.0
        %2176 = vmatprep.subr.mxu0 0.0
        %2177 = vmatpush1.msra.mxu0 0.0
        %2178 = vmatprep.subr.mxu0 0.0
        %2179 = vmatpush1.msra.mxu0 0.0
        %2180 = vmatprep.mubr.f32.mxu0 0.0
        %2181 = vmatmul.mubr.f32.gmra.mrb[0].mxu0 %v2114
        %v2182 = vpop.f32.mrb[0].mxu0
        %v2183 = vadd.f32 0.0, %v2182
        %v2184 = vpop.f32.mrb[0].mxu0
        %2185 = vdwg.mxu0
        %v2187 = vsel %vm1301, %v2183, 0
        %2189 = vmatprep.subr.mxu0 0.0
        %2190 = vmatpush1.msra.mxu0 %v1297
        %2191 = vmatprep.subr.mxu0 0.0
        %2192 = vmatpush1.msra.mxu0 0.0
        %2193 = vmatprep.subr.mxu0 0.0
        %2194 = vmatpush1.msra.mxu0 0.0
        %2195 = vmatprep.subr.mxu0 0.0
        %2196 = vmatpush1.msra.mxu0 0.0
        %2197 = vmatprep.subr.mxu0 0.0
        %2198 = vmatpush1.msra.mxu0 0.0
        %2199 = vmatprep.subr.mxu0 0.0
        %2200 = vmatpush1.msra.mxu0 0.0
        %2201 = vmatprep.subr.mxu0 0.0
        %2202 = vmatpush1.msra.mxu0 0.0
        %2203 = vmatprep.subr.mxu0 0.0
        %2204 = vmatpush1.msra.mxu0 0.0
        %2205 = vmatprep.subr.mxu0 0.0
        %2206 = vmatpush1.msra.mxu0 0.0
        %2207 = vmatprep.subr.mxu0 0.0
        %2208 = vmatpush1.msra.mxu0 0.0
        %2209 = vmatprep.subr.mxu0 0.0
        %2210 = vmatpush1.msra.mxu0 0.0
        %2211 = vmatprep.subr.mxu0 0.0
        %2212 = vmatpush1.msra.mxu0 0.0
        %2213 = vmatprep.subr.mxu0 0.0
        %2214 = vmatpush1.msra.mxu0 0.0
        %2215 = vmatprep.subr.mxu0 0.0
        %2216 = vmatpush1.msra.mxu0 0.0
        %2217 = vmatprep.subr.mxu0 0.0
        %2218 = vmatpush1.msra.mxu0 0.0
        %2219 = vmatprep.subr.mxu0 0.0
        %2220 = vmatpush1.msra.mxu0 0.0
        %2221 = vmatprep.subr.mxu0 0.0
        %2222 = vmatpush1.msra.mxu0 0.0
        %2223 = vmatprep.subr.mxu0 0.0
        %2224 = vmatpush1.msra.mxu0 0.0
        %2225 = vmatprep.subr.mxu0 0.0
        %2226 = vmatpush1.msra.mxu0 0.0
        %2227 = vmatprep.subr.mxu0 0.0
        %2228 = vmatpush1.msra.mxu0 0.0
        %2229 = vmatprep.subr.mxu0 0.0
        %2230 = vmatpush1.msra.mxu0 0.0
        %2231 = vmatprep.subr.mxu0 0.0
        %2232 = vmatpush1.msra.mxu0 0.0
        %2233 = vmatprep.subr.mxu0 0.0
        %2234 = vmatpush1.msra.mxu0 0.0
        %2235 = vmatprep.subr.mxu0 0.0
        %2236 = vmatpush1.msra.mxu0 0.0
        %2237 = vmatprep.subr.mxu0 0.0
        %2238 = vmatpush1.msra.mxu0 0.0
        %2239 = vmatprep.subr.mxu0 0.0
        %2240 = vmatpush1.msra.mxu0 0.0
        %2241 = vmatprep.subr.mxu0 0.0
        %2242 = vmatpush1.msra.mxu0 0.0
        %2243 = vmatprep.subr.mxu0 0.0
        %2244 = vmatpush1.msra.mxu0 0.0
        %2245 = vmatprep.subr.mxu0 0.0
        %2246 = vmatpush1.msra.mxu0 0.0
        %2247 = vmatprep.subr.mxu0 0.0
        %2248 = vmatpush1.msra.mxu0 0.0
        %2249 = vmatprep.subr.mxu0 0.0
        %2250 = vmatpush1.msra.mxu0 0.0
        %2251 = vmatprep.subr.mxu0 0.0
        %2252 = vmatpush1.msra.mxu0 0.0
        %2253 = vmatprep.mubr.f32.mxu0 0.0
        %2254 = vmatmul.mubr.f32.gmra.mrb[0].mxu0 %v2187
        %v2255 = vpop.f32.mrb[0].mxu0
        %v2256 = vadd.f32 0.0, %v2255
        %v2257 = vpop.f32.mrb[0].mxu0
        %2258 = vdwg.mxu0
        %v2259 = vadd.f32 %v2018, %v2256
        %v2260 = vld [vmem:[%s1154] sm:$0x1]
        %v2262 = vlaneseq
        %v2263 = vshrl.u32 %v2262, 7
        %v2264 = vsub.s32 0, %v2263
        %v2265 = vrot.slane %v2260, %v2264
        %v2267 = vadd.f32 %v2259, %v2265
        %v2268 = vadd.f32 %v1205, %v2267
        %v2269 = vld [vmem:[%s1182] sm:$0x1]
        %v2270 = vld [vmem:[%s1185] sm:$0x1]
        %v2271 = vsel %vm1219, %v2268, 0.0
        %2272 = vadd.xlane.f32.xlu0 %v2271
        %v2273 = vpop.xlane.xlu0 %2272
        %v2274 = vrcp.pop 32.0
        %v2275 = vmul.f32 %v2273, %v2274
        %v2276 = vsub.f32 %v2268, %v2275
        %v2277 = vmul.f32 %v2276, %v2276
        %v2278 = vsel %vm1219, %v2277, 0.0
        %2279 = vadd.xlane.f32.xlu0 %v2278
        %v2280 = vpop.xlane.xlu0 %2279
        %v2281 = vmul.f32 %v2280, %v2274
        %v2282 = vadd.f32 %v2281, 1e-05
        %v2283 = vrsqrt.pop %v2282
        %v2284 = vmul.f32 %v2276, %v2283
        %v2286 = vlaneseq
        %v2287 = vshrl.u32 %v2286, 7
        %v2288 = vsub.s32 0, %v2287
        %v2289 = vrot.slane %v2269, %v2288
        %v2291 = vmul.f32 %v2284, %v2289
        %v2293 = vlaneseq
        %v2294 = vshrl.u32 %v2293, 7
        %v2295 = vsub.s32 0, %v2294
        %v2296 = vrot.slane %v2270, %v2295
        %v2298 = vadd.f32 %v2291, %v2296
        %v2299 = vld [vmem:[%s1159] sm:$0xff]
        %v2300 = vld [vmem:[%s1159 + $0x8] sm:$0xff]
        %v2301 = vld [vmem:[%s1159 + $0x10] sm:$0xff]
        %v2302 = vld [vmem:[%s1159 + $0x18] sm:$0xff]
        %v2303 = vld [vmem:[%s1162] sm:$0x1]
        %v2305 = vlaneseq
        %v2306 = vshrl.u32 %v2305, 7
        %v2307 = vsub.s32 0, %v2306
        %v2308 = vrot.slane %v2303, %v2307
        %v2311 = vsel %vm1219, %v2298, 0
        %2313 = vmatprep.subr.mxu0 0.0
        %2314 = vmatpush1.msra.mxu0 %v2299
        %2315 = vmatprep.subr.mxu0 0.0
        %2316 = vmatpush1.msra.mxu0 %v2300
        %2317 = vmatprep.subr.mxu0 0.0
        %2318 = vmatpush1.msra.mxu0 %v2301
        %2319 = vmatprep.subr.mxu0 0.0
        %2320 = vmatpush1.msra.mxu0 %v2302
        %2321 = vmatprep.subr.mxu0 0.0
        %2322 = vmatpush1.msra.mxu0 0.0
        %2323 = vmatprep.subr.mxu0 0.0
        %2324 = vmatpush1.msra.mxu0 0.0
        %2325 = vmatprep.subr.mxu0 0.0
        %2326 = vmatpush1.msra.mxu0 0.0
        %2327 = vmatprep.subr.mxu0 0.0
        %2328 = vmatpush1.msra.mxu0 0.0
        %2329 = vmatprep.subr.mxu0 0.0
        %2330 = vmatpush1.msra.mxu0 0.0
        %2331 = vmatprep.subr.mxu0 0.0
        %2332 = vmatpush1.msra.mxu0 0.0
        %2333 = vmatprep.subr.mxu0 0.0
        %2334 = vmatpush1.msra.mxu0 0.0
        %2335 = vmatprep.subr.mxu0 0.0
        %2336 = vmatpush1.msra.mxu0 0.0
        %2337 = vmatprep.subr.mxu0 0.0
        %2338 = vmatpush1.msra.mxu0 0.0
        %2339 = vmatprep.subr.mxu0 0.0
        %2340 = vmatpush1.msra.mxu0 0.0
        %2341 = vmatprep.subr.mxu0 0.0
        %2342 = vmatpush1.msra.mxu0 0.0
        %2343 = vmatprep.subr.mxu0 0.0
        %2344 = vmatpush1.msra.mxu0 0.0
        %2345 = vmatprep.subr.mxu0 0.0
        %2346 = vmatpush1.msra.mxu0 0.0
        %2347 = vmatprep.subr.mxu0 0.0
        %2348 = vmatpush1.msra.mxu0 0.0
        %2349 = vmatprep.subr.mxu0 0.0
        %2350 = vmatpush1.msra.mxu0 0.0
        %2351 = vmatprep.subr.mxu0 0.0
        %2352 = vmatpush1.msra.mxu0 0.0
        %2353 = vmatprep.subr.mxu0 0.0
        %2354 = vmatpush1.msra.mxu0 0.0
        %2355 = vmatprep.subr.mxu0 0.0
        %2356 = vmatpush1.msra.mxu0 0.0
        %2357 = vmatprep.subr.mxu0 0.0
        %2358 = vmatpush1.msra.mxu0 0.0
        %2359 = vmatprep.subr.mxu0 0.0
        %2360 = vmatpush1.msra.mxu0 0.0
        %2361 = vmatprep.subr.mxu0 0.0
        %2362 = vmatpush1.msra.mxu0 0.0
        %2363 = vmatprep.subr.mxu0 0.0
        %2364 = vmatpush1.msra.mxu0 0.0
        %2365 = vmatprep.subr.mxu0 0.0
        %2366 = vmatpush1.msra.mxu0 0.0
        %2367 = vmatprep.subr.mxu0 0.0
        %2368 = vmatpush1.msra.mxu0 0.0
        %2369 = vmatprep.subr.mxu0 0.0
        %2370 = vmatpush1.msra.mxu0 0.0
        %2371 = vmatprep.subr.mxu0 0.0
        %2372 = vmatpush1.msra.mxu0 0.0
        %2373 = vmatprep.subr.mxu0 0.0
        %2374 = vmatpush1.msra.mxu0 0.0
        %2375 = vmatprep.subr.mxu0 0.0
        %2376 = vmatpush1.msra.mxu0 0.0
        %2377 = vmatprep.mubr.f32.mxu0 0.0
        %2378 = vmatmul.mubr.f32.gmra.mrb[0].mxu0 %v2311
        %v2379 = vpop.f32.mrb[0].mxu0
        %v2380 = vadd.f32 %v2308, %v2379
        %v2381 = vpop.f32.mrb[0].mxu0
        %2382 = vdwg.mxu0
        %v2383 = vld [vmem:[%s965] sm:$0xff]
        %v2384 = vld [vmem:[%s965 + $0x8] sm:$0xff]
        %v2385 = vld [vmem:[%s965 + $0x10] sm:$0xff]
        %v2386 = vld [vmem:[%s965 + $0x18] sm:$0xff]
        %v2387 = vld [vmem:[%s1165] sm:$0x1]
        %v2389 = vlaneseq
        %v2390 = vshrl.u32 %v2389, 7
        %v2391 = vsub.s32 0, %v2390
        %v2392 = vrot.slane %v2387, %v2391
        %v2395 = vsel %vm1219, %v1206, 0
        %v2398 = vsel %vm1219, %v1207, 0
        %2400 = vmatprep.subr.mxu0 0.0
        %2401 = vmatpush1.msra.mxu0 %v2383
        %2402 = vmatprep.subr.mxu0 0.0
        %2403 = vmatpush1.msra.mxu0 %v2384
        %2404 = vmatprep.subr.mxu0 0.0
        %2405 = vmatpush1.msra.mxu0 %v2385
        %2406 = vmatprep.subr.mxu0 0.0
        %2407 = vmatpush1.msra.mxu0 %v2386
        %2408 = vmatprep.subr.mxu0 0.0
        %2409 = vmatpush1.msra.mxu0 0.0
        %2410 = vmatprep.subr.mxu0 0.0
        %2411 = vmatpush1.msra.mxu0 0.0
        %2412 = vmatprep.subr.mxu0 0.0
        %2413 = vmatpush1.msra.mxu0 0.0
        %2414 = vmatprep.subr.mxu0 0.0
        %2415 = vmatpush1.msra.mxu0 0.0
        %2416 = vmatprep.subr.mxu0 0.0
        %2417 = vmatpush1.msra.mxu0 0.0
        %2418 = vmatprep.subr.mxu0 0.0
        %2419 = vmatpush1.msra.mxu0 0.0
        %2420 = vmatprep.subr.mxu0 0.0
        %2421 = vmatpush1.msra.mxu0 0.0
        %2422 = vmatprep.subr.mxu0 0.0
        %2423 = vmatpush1.msra.mxu0 0.0
        %2424 = vmatprep.subr.mxu0 0.0
        %2425 = vmatpush1.msra.mxu0 0.0
        %2426 = vmatprep.subr.mxu0 0.0
        %2427 = vmatpush1.msra.mxu0 0.0
        %2428 = vmatprep.subr.mxu0 0.0
        %2429 = vmatpush1.msra.mxu0 0.0
        %2430 = vmatprep.subr.mxu0 0.0
        %2431 = vmatpush1.msra.mxu0 0.0
        %2432 = vmatprep.subr.mxu0 0.0
        %2433 = vmatpush1.msra.mxu0 0.0
        %2434 = vmatprep.subr.mxu0 0.0
        %2435 = vmatpush1.msra.mxu0 0.0
        %2436 = vmatprep.subr.mxu0 0.0
        %2437 = vmatpush1.msra.mxu0 0.0
        %2438 = vmatprep.subr.mxu0 0.0
        %2439 = vmatpush1.msra.mxu0 0.0
        %2440 = vmatprep.subr.mxu0 0.0
        %2441 = vmatpush1.msra.mxu0 0.0
        %2442 = vmatprep.subr.mxu0 0.0
        %2443 = vmatpush1.msra.mxu0 0.0
        %2444 = vmatprep.subr.mxu0 0.0
        %2445 = vmatpush1.msra.mxu0 0.0
        %2446 = vmatprep.subr.mxu0 0.0
        %2447 = vmatpush1.msra.mxu0 0.0
        %2448 = vmatprep.subr.mxu0 0.0
        %2449 = vmatpush1.msra.mxu0 0.0
        %2450 = vmatprep.subr.mxu0 0.0
        %2451 = vmatpush1.msra.mxu0 0.0
        %2452 = vmatprep.subr.mxu0 0.0
        %2453 = vmatpush1.msra.mxu0 0.0
        %2454 = vmatprep.subr.mxu0 0.0
        %2455 = vmatpush1.msra.mxu0 0.0
        %2456 = vmatprep.subr.mxu0 0.0
        %2457 = vmatpush1.msra.mxu0 0.0
        %2458 = vmatprep.subr.mxu0 0.0
        %2459 = vmatpush1.msra.mxu0 0.0
        %2460 = vmatprep.subr.mxu0 0.0
        %2461 = vmatpush1.msra.mxu0 0.0
        %2462 = vmatprep.subr.mxu0 0.0
        %2463 = vmatpush1.msra.mxu0 0.0
        %2464 = vmatprep.mubr.f32.mxu0 0.0
        %2465 = vmatmul.mubr.f32.gmra.mrb[0].mxu0 %v2395
        %v2466 = vpop.f32.mrb[0].mxu0
        %v2467 = vadd.f32 %v2392, %v2466
        %v2468 = vpop.f32.mrb[0].mxu0
        %2469 = vmatprep.mubr.f32.mxu0 0.0
        %2470 = vmatmul.mubr.f32.gmra.mrb[0].mxu0 %v2398
        %v2471 = vpop.f32.mrb[0].mxu0
        %v2472 = vadd.f32 %v2392, %v2471
        %v2473 = vpop.f32.mrb[0].mxu0
        %2474 = vdwg.mxu0
        %v2475 = vld [vmem:[%s3] sm:$0xff]
        %v2476 = vld [vmem:[%s974] sm:$0xff]
        %v2477 = vld [vmem:[%s974 + $0x8] sm:$0xff]
        %v2478 = vld [vmem:[%s974 + $0x10] sm:$0xff]
        %v2479 = vld [vmem:[%s974 + $0x18] sm:$0xff]
        %v2481 = vsel %vm1301, %v2380, 0
        %v2484 = vsel %vm1301, %v2467, 0
        %v2487 = vsel %vm1301, %v2472, 0
        %2489 = vmatprep.subr.mxu0 0.0
        %2490 = vmatpush1.xpose.msra.mxu0 %v2484
        %2491 = vmatprep.subr.mxu0 0.0
        %2492 = vmatpush1.xpose.msra.mxu0 %v2487
        %2493 = vmatprep.subr.mxu0 0.0
        %2494 = vmatpush1.xpose.msra.mxu0 0.0
        %2495 = vmatprep.subr.mxu0 0.0
        %2496 = vmatpush1.xpose.msra.mxu0 0.0
        %2497 = vmatprep.subr.mxu0 0.0
        %2498 = vmatpush1.xpose.msra.mxu0 0.0
        %2499 = vmatprep.subr.mxu0 0.0
        %2500 = vmatpush1.xpose.msra.mxu0 0.0
        %2501 = vmatprep.subr.mxu0 0.0
        %2502 = vmatpush1.xpose.msra.mxu0 0.0
        %2503 = vmatprep.subr.mxu0 0.0
        %2504 = vmatpush1.xpose.msra.mxu0 0.0
        %2505 = vmatprep.subr.mxu0 0.0
        %2506 = vmatpush1.xpose.msra.mxu0 0.0
        %2507 = vmatprep.subr.mxu0 0.0
        %2508 = vmatpush1.xpose.msra.mxu0 0.0
        %2509 = vmatprep.subr.mxu0 0.0
        %2510 = vmatpush1.xpose.msra.mxu0 0.0
        %2511 = vmatprep.subr.mxu0 0.0
        %2512 = vmatpush1.xpose.msra.mxu0 0.0
        %2513 = vmatprep.subr.mxu0 0.0
        %2514 = vmatpush1.xpose.msra.mxu0 0.0
        %2515 = vmatprep.subr.mxu0 0.0
        %2516 = vmatpush1.xpose.msra.mxu0 0.0
        %2517 = vmatprep.subr.mxu0 0.0
        %2518 = vmatpush1.xpose.msra.mxu0 0.0
        %2519 = vmatprep.subr.mxu0 0.0
        %2520 = vmatpush1.xpose.msra.mxu0 0.0
        %2521 = vmatprep.subr.mxu0 0.0
        %2522 = vmatpush1.xpose.msra.mxu0 0.0
        %2523 = vmatprep.subr.mxu0 0.0
        %2524 = vmatpush1.xpose.msra.mxu0 0.0
        %2525 = vmatprep.subr.mxu0 0.0
        %2526 = vmatpush1.xpose.msra.mxu0 0.0
        %2527 = vmatprep.subr.mxu0 0.0
        %2528 = vmatpush1.xpose.msra.mxu0 0.0
        %2529 = vmatprep.subr.mxu0 0.0
        %2530 = vmatpush1.xpose.msra.mxu0 0.0
        %2531 = vmatprep.subr.mxu0 0.0
        %2532 = vmatpush1.xpose.msra.mxu0 0.0
        %2533 = vmatprep.subr.mxu0 0.0
        %2534 = vmatpush1.xpose.msra.mxu0 0.0
        %2535 = vmatprep.subr.mxu0 0.0
        %2536 = vmatpush1.xpose.msra.mxu0 0.0
        %2537 = vmatprep.subr.mxu0 0.0
        %2538 = vmatpush1.xpose.msra.mxu0 0.0
        %2539 = vmatprep.subr.mxu0 0.0
        %2540 = vmatpush1.xpose.msra.mxu0 0.0
        %2541 = vmatprep.subr.mxu0 0.0
        %2542 = vmatpush1.xpose.msra.mxu0 0.0
        %2543 = vmatprep.subr.mxu0 0.0
        %2544 = vmatpush1.xpose.msra.mxu0 0.0
        %2545 = vmatprep.subr.mxu0 0.0
        %2546 = vmatpush1.xpose.msra.mxu0 0.0
        %2547 = vmatprep.subr.mxu0 0.0
        %2548 = vmatpush1.xpose.msra.mxu0 0.0
        %2549 = vmatprep.subr.mxu0 0.0
        %2550 = vmatpush1.xpose.msra.mxu0 0.0
        %2551 = vmatprep.subr.mxu0 0.0
        %2552 = vmatpush1.xpose.msra.mxu0 0.0
        %2553 = vmatprep.mubr.f32.mxu0 0.0
        %2554 = vmatmul.mubr.f32.gmra.mrb[0].mxu0 %v2481
        %v2555 = vpop.f32.mrb[0].mxu0
        %v2556 = vadd.f32 0.0, %v2555
        %v2557 = vpop.f32.mrb[0].mxu0
        %2558 = vdwg.mxu0
        %v2559 = vmul.f32 %v2556, 0.35355338
        %v2560 = vadd.f32 %v2559, %v2475
        %vm2561 = vcmask 80896
        %v2562 = vsel %vm2561, %v2560, -inf
        %2563 = vmax.xlane.f32.xlu0 %v2562
        %v2564 = vpop.xlane.xlu0 %2563
        %v2565 = vsub.f32 %v2560, %v2564
        %v2566 = vmul.f32 %v2565, 1.442695
        %v2567 = vpow.pop %v2566
        %v2568 = vsel %vm2561, %v2567, 0.0
        %2569 = vadd.xlane.f32.xlu0 %v2568
        %v2570 = vpop.xlane.xlu0 %2569
        %v2571 = vrcp.pop %v2570
        %v2572 = vmul.f32 %v2567, %v2571
        %2573 = vrot.lane.b32.xlu0 %v2467, 96
        %v2574 = vpop.permute.xlu0 %2573
        %2575 = vrot.lane.b32.xlu0 %v2472, 96
        %v2576 = vpop.permute.xlu0 %2575
        %v2579 = vsel %vm2561, %v2572, 0
        %vm2581 = vcmask 1041408
        %v2582 = vsel %vm2581, %v2576, 0
        %2584 = vmatprep.subr.mxu0 0.0
        %2585 = vmatpush1.msra.mxu0 %v2574
        %2586 = vmatprep.subr.mxu0 0.0
        %2587 = vmatpush1.msra.mxu0 %v2582
        %2588 = vmatprep.subr.mxu0 0.0
        %2589 = vmatpush1.msra.mxu0 0.0
        %2590 = vmatprep.subr.mxu0 0.0
        %2591 = vmatpush1.msra.mxu0 0.0
        %2592 = vmatprep.subr.mxu0 0.0
        %2593 = vmatpush1.msra.mxu0 0.0
        %2594 = vmatprep.subr.mxu0 0.0
        %2595 = vmatpush1.msra.mxu0 0.0
        %2596 = vmatprep.subr.mxu0 0.0
        %2597 = vmatpush1.msra.mxu0 0.0
        %2598 = vmatprep.subr.mxu0 0.0
        %2599 = vmatpush1.msra.mxu0 0.0
        %2600 = vmatprep.subr.mxu0 0.0
        %2601 = vmatpush1.msra.mxu0 0.0
        %2602 = vmatprep.subr.mxu0 0.0
        %2603 = vmatpush1.msra.mxu0 0.0
        %2604 = vmatprep.subr.mxu0 0.0
        %2605 = vmatpush1.msra.mxu0 0.0
        %2606 = vmatprep.subr.mxu0 0.0
        %2607 = vmatpush1.msra.mxu0 0.0
        %2608 = vmatprep.subr.mxu0 0.0
        %2609 = vmatpush1.msra.mxu0 0.0
        %2610 = vmatprep.subr.mxu0 0.0
        %2611 = vmatpush1.msra.mxu0 0.0
        %2612 = vmatprep.subr.mxu0 0.0
        %2613 = vmatpush1.msra.mxu0 0.0
        %2614 = vmatprep.subr.mxu0 0.0
        %2615 = vmatpush1.msra.mxu0 0.0
        %2616 = vmatprep.subr.mxu0 0.0
        %2617 = vmatpush1.msra.mxu0 0.0
        %2618 = vmatprep.subr.mxu0 0.0
        %2619 = vmatpush1.msra.mxu0 0.0
        %2620 = vmatprep.subr.mxu0 0.0
        %2621 = vmatpush1.msra.mxu0 0.0
        %2622 = vmatprep.subr.mxu0 0.0
        %2623 = vmatpush1.msra.mxu0 0.0
        %2624 = vmatprep.subr.mxu0 0.0
        %2625 = vmatpush1.msra.mxu0 0.0
        %2626 = vmatprep.subr.mxu0 0.0
        %2627 = vmatpush1.msra.mxu0 0.0
        %2628 = vmatprep.subr.mxu0 0.0
        %2629 = vmatpush1.msra.mxu0 0.0
        %2630 = vmatprep.subr.mxu0 0.0
        %2631 = vmatpush1.msra.mxu0 0.0
        %2632 = vmatprep.subr.mxu0 0.0
        %2633 = vmatpush1.msra.mxu0 0.0
        %2634 = vmatprep.subr.mxu0 0.0
        %2635 = vmatpush1.msra.mxu0 0.0
        %2636 = vmatprep.subr.mxu0 0.0
        %2637 = vmatpush1.msra.mxu0 0.0
        %2638 = vmatprep.subr.mxu0 0.0
        %2639 = vmatpush1.msra.mxu0 0.0
        %2640 = vmatprep.subr.mxu0 0.0
        %2641 = vmatpush1.msra.mxu0 0.0
        %2642 = vmatprep.subr.mxu0 0.0
        %2643 = vmatpush1.msra.mxu0 0.0
        %2644 = vmatprep.subr.mxu0 0.0
        %2645 = vmatpush1.msra.mxu0 0.0
        %2646 = vmatprep.subr.mxu0 0.0
        %2647 = vmatpush1.msra.mxu0 0.0
        %2648 = vmatprep.mubr.f32.mxu0 0.0
        %2649 = vmatmul.mubr.f32.gmra.mrb[0].mxu0 %v2579
        %v2650 = vpop.f32.mrb[0].mxu0
        %v2651 = vadd.f32 0.0, %v2650
        %v2652 = vpop.f32.mrb[0].mxu0
        %2653 = vdwg.mxu0
        %2654 = vrot.lane.b32.xlu0 %v2380, 120
        %v2655 = vpop.permute.xlu0 %2654
        %2656 = vrot.lane.b32.xlu0 %v2467, 120
        %v2657 = vpop.permute.xlu0 %2656
        %2658 = vrot.lane.b32.xlu0 %v2472, 120
        %v2659 = vpop.permute.xlu0 %2658
        %v2660 = vsel %vm1301, %v2655, 0
        %v2662 = vsel %vm1301, %v2657, 0
        %v2664 = vsel %vm1301, %v2659, 0
        %2666 = vmatprep.subr.mxu0 0.0
        %2667 = vmatpush1.xpose.msra.mxu0 %v2662
        %2668 = vmatprep.subr.mxu0 0.0
        %2669 = vmatpush1.xpose.msra.mxu0 %v2664
        %2670 = vmatprep.subr.mxu0 0.0
        %2671 = vmatpush1.xpose.msra.mxu0 0.0
        %2672 = vmatprep.subr.mxu0 0.0
        %2673 = vmatpush1.xpose.msra.mxu0 0.0
        %2674 = vmatprep.subr.mxu0 0.0
        %2675 = vmatpush1.xpose.msra.mxu0 0.0
        %2676 = vmatprep.subr.mxu0 0.0
        %2677 = vmatpush1.xpose.msra.mxu0 0.0
        %2678 = vmatprep.subr.mxu0 0.0
        %2679 = vmatpush1.xpose.msra.mxu0 0.0
        %2680 = vmatprep.subr.mxu0 0.0
        %2681 = vmatpush1.xpose.msra.mxu0 0.0
        %2682 = vmatprep.subr.mxu0 0.0
        %2683 = vmatpush1.xpose.msra.mxu0 0.0
        %2684 = vmatprep.subr.mxu0 0.0
        %2685 = vmatpush1.xpose.msra.mxu0 0.0
        %2686 = vmatprep.subr.mxu0 0.0
        %2687 = vmatpush1.xpose.msra.mxu0 0.0
        %2688 = vmatprep.subr.mxu0 0.0
        %2689 = vmatpush1.xpose.msra.mxu0 0.0
        %2690 = vmatprep.subr.mxu0 0.0
        %2691 = vmatpush1.xpose.msra.mxu0 0.0
        %2692 = vmatprep.subr.mxu0 0.0
        %2693 = vmatpush1.xpose.msra.mxu0 0.0
        %2694 = vmatprep.subr.mxu0 0.0
        %2695 = vmatpush1.xpose.msra.mxu0 0.0
        %2696 = vmatprep.subr.mxu0 0.0
        %2697 = vmatpush1.xpose.msra.mxu0 0.0
        %2698 = vmatprep.subr.mxu0 0.0
        %2699 = vmatpush1.xpose.msra.mxu0 0.0
        %2700 = vmatprep.subr.mxu0 0.0
        %2701 = vmatpush1.xpose.msra.mxu0 0.0
        %2702 = vmatprep.subr.mxu0 0.0
        %2703 = vmatpush1.xpose.msra.mxu0 0.0
        %2704 = vmatprep.subr.mxu0 0.0
        %2705 = vmatpush1.xpose.msra.mxu0 0.0
        %2706 = vmatprep.subr.mxu0 0.0
        %2707 = vmatpush1.xpose.msra.mxu0 0.0
        %2708 = vmatprep.subr.mxu0 0.0
        %2709 = vmatpush1.xpose.msra.mxu0 0.0
        %2710 = vmatprep.subr.mxu0 0.0
        %2711 = vmatpush1.xpose.msra.mxu0 0.0
        %2712 = vmatprep.subr.mxu0 0.0
        %2713 = vmatpush1.xpose.msra.mxu0 0.0
        %2714 = vmatprep.subr.mxu0 0.0
        %2715 = vmatpush1.xpose.msra.mxu0 0.0
        %2716 = vmatprep.subr.mxu0 0.0
        %2717 = vmatpush1.xpose.msra.mxu0 0.0
        %2718 = vmatprep.subr.mxu0 0.0
        %2719 = vmatpush1.xpose.msra.mxu0 0.0
        %2720 = vmatprep.subr.mxu0 0.0
        %2721 = vmatpush1.xpose.msra.mxu0 0.0
        %2722 = vmatprep.subr.mxu0 0.0
        %2723 = vmatpush1.xpose.msra.mxu0 0.0
        %2724 = vmatprep.subr.mxu0 0.0
        %2725 = vmatpush1.xpose.msra.mxu0 0.0
        %2726 = vmatprep.subr.mxu0 0.0
        %2727 = vmatpush1.xpose.msra.mxu0 0.0
        %2728 = vmatprep.subr.mxu0 0.0
        %2729 = vmatpush1.xpose.msra.mxu0 0.0
        %2730 = vmatprep.mubr.f32.mxu0 0.0
        %2731 = vmatmul.mubr.f32.gmra.mrb[0].mxu0 %v2660
        %v2732 = vpop.f32.mrb[0].mxu0
        %v2733 = vadd.f32 0.0, %v2732
        %v2734 = vpop.f32.mrb[0].mxu0
        %2735 = vdwg.mxu0
        %v2736 = vmul.f32 %v2733, 0.35355338
        %v2737 = vadd.f32 %v2736, %v2475
        %v2738 = vsel %vm2561, %v2737, -inf
        %2739 = vmax.xlane.f32.xlu0 %v2738
        %v2740 = vpop.xlane.xlu0 %2739
        %v2741 = vsub.f32 %v2737, %v2740
        %v2742 = vmul.f32 %v2741, 1.442695
        %v2743 = vpow.pop %v2742
        %v2744 = vsel %vm2561, %v2743, 0.0
        %2745 = vadd.xlane.f32.xlu0 %v2744
        %v2746 = vpop.xlane.xlu0 %2745
        %v2747 = vrcp.pop %v2746
        %v2748 = vmul.f32 %v2743, %v2747
        %2749 = vrot.lane.b32.xlu0 %v2467, 88
        %v2750 = vpop.permute.xlu0 %2749
        %2751 = vrot.lane.b32.xlu0 %v2472, 88
        %v2752 = vpop.permute.xlu0 %2751
        %v2755 = vsel %vm2561, %v2748, 0
        %v2757 = vsel %vm2581, %v2752, 0
        %2759 = vmatprep.subr.mxu0 0.0
        %2760 = vmatpush1.msra.mxu0 %v2750
        %2761 = vmatprep.subr.mxu0 0.0
        %2762 = vmatpush1.msra.mxu0 %v2757
        %2763 = vmatprep.subr.mxu0 0.0
        %2764 = vmatpush1.msra.mxu0 0.0
        %2765 = vmatprep.subr.mxu0 0.0
        %2766 = vmatpush1.msra.mxu0 0.0
        %2767 = vmatprep.subr.mxu0 0.0
        %2768 = vmatpush1.msra.mxu0 0.0
        %2769 = vmatprep.subr.mxu0 0.0
        %2770 = vmatpush1.msra.mxu0 0.0
        %2771 = vmatprep.subr.mxu0 0.0
        %2772 = vmatpush1.msra.mxu0 0.0
        %2773 = vmatprep.subr.mxu0 0.0
        %2774 = vmatpush1.msra.mxu0 0.0
        %2775 = vmatprep.subr.mxu0 0.0
        %2776 = vmatpush1.msra.mxu0 0.0
        %2777 = vmatprep.subr.mxu0 0.0
        %2778 = vmatpush1.msra.mxu0 0.0
        %2779 = vmatprep.subr.mxu0 0.0
        %2780 = vmatpush1.msra.mxu0 0.0
        %2781 = vmatprep.subr.mxu0 0.0
        %2782 = vmatpush1.msra.mxu0 0.0
        %2783 = vmatprep.subr.mxu0 0.0
        %2784 = vmatpush1.msra.mxu0 0.0
        %2785 = vmatprep.subr.mxu0 0.0
        %2786 = vmatpush1.msra.mxu0 0.0
        %2787 = vmatprep.subr.mxu0 0.0
        %2788 = vmatpush1.msra.mxu0 0.0
        %2789 = vmatprep.subr.mxu0 0.0
        %2790 = vmatpush1.msra.mxu0 0.0
        %2791 = vmatprep.subr.mxu0 0.0
        %2792 = vmatpush1.msra.mxu0 0.0
        %2793 = vmatprep.subr.mxu0 0.0
        %2794 = vmatpush1.msra.mxu0 0.0
        %2795 = vmatprep.subr.mxu0 0.0
        %2796 = vmatpush1.msra.mxu0 0.0
        %2797 = vmatprep.subr.mxu0 0.0
        %2798 = vmatpush1.msra.mxu0 0.0
        %2799 = vmatprep.subr.mxu0 0.0
        %2800 = vmatpush1.msra.mxu0 0.0
        %2801 = vmatprep.subr.mxu0 0.0
        %2802 = vmatpush1.msra.mxu0 0.0
        %2803 = vmatprep.subr.mxu0 0.0
        %2804 = vmatpush1.msra.mxu0 0.0
        %2805 = vmatprep.subr.mxu0 0.0
        %2806 = vmatpush1.msra.mxu0 0.0
        %2807 = vmatprep.subr.mxu0 0.0
        %2808 = vmatpush1.msra.mxu0 0.0
        %2809 = vmatprep.subr.mxu0 0.0
        %2810 = vmatpush1.msra.mxu0 0.0
        %2811 = vmatprep.subr.mxu0 0.0
        %2812 = vmatpush1.msra.mxu0 0.0
        %2813 = vmatprep.subr.mxu0 0.0
        %2814 = vmatpush1.msra.mxu0 0.0
        %2815 = vmatprep.subr.mxu0 0.0
        %2816 = vmatpush1.msra.mxu0 0.0
        %2817 = vmatprep.subr.mxu0 0.0
        %2818 = vmatpush1.msra.mxu0 0.0
        %2819 = vmatprep.subr.mxu0 0.0
        %2820 = vmatpush1.msra.mxu0 0.0
        %2821 = vmatprep.subr.mxu0 0.0
        %2822 = vmatpush1.msra.mxu0 0.0
        %2823 = vmatprep.mubr.f32.mxu0 0.0
        %2824 = vmatmul.mubr.f32.gmra.mrb[0].mxu0 %v2755
        %v2825 = vpop.f32.mrb[0].mxu0
        %v2826 = vadd.f32 0.0, %v2825
        %v2827 = vpop.f32.mrb[0].mxu0
        %2828 = vdwg.mxu0
        %v2830 = vsel %vm1301, %v2826, 0
        %2832 = vmatprep.subr.mxu0 0.0
        %2833 = vmatpush1.msra.mxu0 %v2477
        %2834 = vmatprep.subr.mxu0 0.0
        %2835 = vmatpush1.msra.mxu0 0.0
        %2836 = vmatprep.subr.mxu0 0.0
        %2837 = vmatpush1.msra.mxu0 0.0
        %2838 = vmatprep.subr.mxu0 0.0
        %2839 = vmatpush1.msra.mxu0 0.0
        %2840 = vmatprep.subr.mxu0 0.0
        %2841 = vmatpush1.msra.mxu0 0.0
        %2842 = vmatprep.subr.mxu0 0.0
        %2843 = vmatpush1.msra.mxu0 0.0
        %2844 = vmatprep.subr.mxu0 0.0
        %2845 = vmatpush1.msra.mxu0 0.0
        %2846 = vmatprep.subr.mxu0 0.0
        %2847 = vmatpush1.msra.mxu0 0.0
        %2848 = vmatprep.subr.mxu0 0.0
        %2849 = vmatpush1.msra.mxu0 0.0
        %2850 = vmatprep.subr.mxu0 0.0
        %2851 = vmatpush1.msra.mxu0 0.0
        %2852 = vmatprep.subr.mxu0 0.0
        %2853 = vmatpush1.msra.mxu0 0.0
        %2854 = vmatprep.subr.mxu0 0.0
        %2855 = vmatpush1.msra.mxu0 0.0
        %2856 = vmatprep.subr.mxu0 0.0
        %2857 = vmatpush1.msra.mxu0 0.0
        %2858 = vmatprep.subr.mxu0 0.0
        %2859 = vmatpush1.msra.mxu0 0.0
        %2860 = vmatprep.subr.mxu0 0.0
        %2861 = vmatpush1.msra.mxu0 0.0
        %2862 = vmatprep.subr.mxu0 0.0
        %2863 = vmatpush1.msra.mxu0 0.0
        %2864 = vmatprep.subr.mxu0 0.0
        %2865 = vmatpush1.msra.mxu0 0.0
        %2866 = vmatprep.subr.mxu0 0.0
        %2867 = vmatpush1.msra.mxu0 0.0
        %2868 = vmatprep.subr.mxu0 0.0
        %2869 = vmatpush1.msra.mxu0 0.0
        %2870 = vmatprep.subr.mxu0 0.0
        %2871 = vmatpush1.msra.mxu0 0.0
        %2872 = vmatprep.subr.mxu0 0.0
        %2873 = vmatpush1.msra.mxu0 0.0
        %2874 = vmatprep.subr.mxu0 0.0
        %2875 = vmatpush1.msra.mxu0 0.0
        %2876 = vmatprep.subr.mxu0 0.0
        %2877 = vmatpush1.msra.mxu0 0.0
        %2878 = vmatprep.subr.mxu0 0.0
        %2879 = vmatpush1.msra.mxu0 0.0
        %2880 = vmatprep.subr.mxu0 0.0
        %2881 = vmatpush1.msra.mxu0 0.0
        %2882 = vmatprep.subr.mxu0 0.0
        %2883 = vmatpush1.msra.mxu0 0.0
        %2884 = vmatprep.subr.mxu0 0.0
        %2885 = vmatpush1.msra.mxu0 0.0
        %2886 = vmatprep.subr.mxu0 0.0
        %2887 = vmatpush1.msra.mxu0 0.0
        %2888 = vmatprep.subr.mxu0 0.0
        %2889 = vmatpush1.msra.mxu0 0.0
        %2890 = vmatprep.subr.mxu0 0.0
        %2891 = vmatpush1.msra.mxu0 0.0
        %2892 = vmatprep.subr.mxu0 0.0
        %2893 = vmatpush1.msra.mxu0 0.0
        %2894 = vmatprep.subr.mxu0 0.0
        %2895 = vmatpush1.msra.mxu0 0.0
        %2896 = vmatprep.mubr.f32.mxu0 0.0
        %2897 = vmatmul.mubr.f32.gmra.mrb[0].mxu0 %v2830
        %v2898 = vpop.f32.mrb[0].mxu0
        %v2899 = vadd.f32 0.0, %v2898
        %v2900 = vpop.f32.mrb[0].mxu0
        %2901 = vdwg.mxu0
        %v2903 = vsel %vm1301, %v2651, 0
        %2905 = vmatprep.subr.mxu0 0.0
        %2906 = vmatpush1.msra.mxu0 %v2476
        %2907 = vmatprep.subr.mxu0 0.0
        %2908 = vmatpush1.msra.mxu0 0.0
        %2909 = vmatprep.subr.mxu0 0.0
        %2910 = vmatpush1.msra.mxu0 0.0
        %2911 = vmatprep.subr.mxu0 0.0
        %2912 = vmatpush1.msra.mxu0 0.0
        %2913 = vmatprep.subr.mxu0 0.0
        %2914 = vmatpush1.msra.mxu0 0.0
        %2915 = vmatprep.subr.mxu0 0.0
        %2916 = vmatpush1.msra.mxu0 0.0
        %2917 = vmatprep.subr.mxu0 0.0
        %2918 = vmatpush1.msra.mxu0 0.0
        %2919 = vmatprep.subr.mxu0 0.0
        %2920 = vmatpush1.msra.mxu0 0.0
        %2921 = vmatprep.subr.mxu0 0.0
        %2922 = vmatpush1.msra.mxu0 0.0
        %2923 = vmatprep.subr.mxu0 0.0
        %2924 = vmatpush1.msra.mxu0 0.0
        %2925 = vmatprep.subr.mxu0 0.0
        %2926 = vmatpush1.msra.mxu0 0.0
        %2927 = vmatprep.subr.mxu0 0.0
        %2928 = vmatpush1.msra.mxu0 0.0
        %2929 = vmatprep.subr.mxu0 0.0
        %2930 = vmatpush1.msra.mxu0 0.0
        %2931 = vmatprep.subr.mxu0 0.0
        %2932 = vmatpush1.msra.mxu0 0.0
        %2933 = vmatprep.subr.mxu0 0.0
        %2934 = vmatpush1.msra.mxu0 0.0
        %2935 = vmatprep.subr.mxu0 0.0
        %2936 = vmatpush1.msra.mxu0 0.0
        %2937 = vmatprep.subr.mxu0 0.0
        %2938 = vmatpush1.msra.mxu0 0.0
        %2939 = vmatprep.subr.mxu0 0.0
        %2940 = vmatpush1.msra.mxu0 0.0
        %2941 = vmatprep.subr.mxu0 0.0
        %2942 = vmatpush1.msra.mxu0 0.0
        %2943 = vmatprep.subr.mxu0 0.0
        %2944 = vmatpush1.msra.mxu0 0.0
        %2945 = vmatprep.subr.mxu0 0.0
        %2946 = vmatpush1.msra.mxu0 0.0
        %2947 = vmatprep.subr.mxu0 0.0
        %2948 = vmatpush1.msra.mxu0 0.0
        %2949 = vmatprep.subr.mxu0 0.0
        %2950 = vmatpush1.msra.mxu0 0.0
        %2951 = vmatprep.subr.mxu0 0.0
        %2952 = vmatpush1.msra.mxu0 0.0
        %2953 = vmatprep.subr.mxu0 0.0
        %2954 = vmatpush1.msra.mxu0 0.0
        %2955 = vmatprep.subr.mxu0 0.0
        %2956 = vmatpush1.msra.mxu0 0.0
        %2957 = vmatprep.subr.mxu0 0.0
        %2958 = vmatpush1.msra.mxu0 0.0
        %2959 = vmatprep.subr.mxu0 0.0
        %2960 = vmatpush1.msra.mxu0 0.0
        %2961 = vmatprep.subr.mxu0 0.0
        %2962 = vmatpush1.msra.mxu0 0.0
        %2963 = vmatprep.subr.mxu0 0.0
        %2964 = vmatpush1.msra.mxu0 0.0
        %2965 = vmatprep.subr.mxu0 0.0
        %2966 = vmatpush1.msra.mxu0 0.0
        %2967 = vmatprep.subr.mxu0 0.0
        %2968 = vmatpush1.msra.mxu0 0.0
        %2969 = vmatprep.mubr.f32.mxu0 0.0
        %2970 = vmatmul.mubr.f32.gmra.mrb[0].mxu0 %v2903
        %v2971 = vpop.f32.mrb[0].mxu0
        %v2972 = vadd.f32 %v2899, %v2971
        %v2973 = vpop.f32.mrb[0].mxu0
        %2974 = vdwg.mxu0
        %2975 = vrot.lane.b32.xlu0 %v2380, 112
        %v2976 = vpop.permute.xlu0 %2975
        %2977 = vrot.lane.b32.xlu0 %v2467, 112
        %v2978 = vpop.permute.xlu0 %2977
        %2979 = vrot.lane.b32.xlu0 %v2472, 112
        %v2980 = vpop.permute.xlu0 %2979
        %v2981 = vsel %vm1301, %v2976, 0
        %v2983 = vsel %vm1301, %v2978, 0
        %v2985 = vsel %vm1301, %v2980, 0
        %2987 = vmatprep.subr.mxu0 0.0
        %2988 = vmatpush1.xpose.msra.mxu0 %v2983
        %2989 = vmatprep.subr.mxu0 0.0
        %2990 = vmatpush1.xpose.msra.mxu0 %v2985
        %2991 = vmatprep.subr.mxu0 0.0
        %2992 = vmatpush1.xpose.msra.mxu0 0.0
        %2993 = vmatprep.subr.mxu0 0.0
        %2994 = vmatpush1.xpose.msra.mxu0 0.0
        %2995 = vmatprep.subr.mxu0 0.0
        %2996 = vmatpush1.xpose.msra.mxu0 0.0
        %2997 = vmatprep.subr.mxu0 0.0
        %2998 = vmatpush1.xpose.msra.mxu0 0.0
        %2999 = vmatprep.subr.mxu0 0.0
        %3000 = vmatpush1.xpose.msra.mxu0 0.0
        %3001 = vmatprep.subr.mxu0 0.0
        %3002 = vmatpush1.xpose.msra.mxu0 0.0
        %3003 = vmatprep.subr.mxu0 0.0
        %3004 = vmatpush1.xpose.msra.mxu0 0.0
        %3005 = vmatprep.subr.mxu0 0.0
        %3006 = vmatpush1.xpose.msra.mxu0 0.0
        %3007 = vmatprep.subr.mxu0 0.0
        %3008 = vmatpush1.xpose.msra.mxu0 0.0
        %3009 = vmatprep.subr.mxu0 0.0
        %3010 = vmatpush1.xpose.msra.mxu0 0.0
        %3011 = vmatprep.subr.mxu0 0.0
        %3012 = vmatpush1.xpose.msra.mxu0 0.0
        %3013 = vmatprep.subr.mxu0 0.0
        %3014 = vmatpush1.xpose.msra.mxu0 0.0
        %3015 = vmatprep.subr.mxu0 0.0
        %3016 = vmatpush1.xpose.msra.mxu0 0.0
        %3017 = vmatprep.subr.mxu0 0.0
        %3018 = vmatpush1.xpose.msra.mxu0 0.0
        %3019 = vmatprep.subr.mxu0 0.0
        %3020 = vmatpush1.xpose.msra.mxu0 0.0
        %3021 = vmatprep.subr.mxu0 0.0
        %3022 = vmatpush1.xpose.msra.mxu0 0.0
        %3023 = vmatprep.subr.mxu0 0.0
        %3024 = vmatpush1.xpose.msra.mxu0 0.0
        %3025 = vmatprep.subr.mxu0 0.0
        %3026 = vmatpush1.xpose.msra.mxu0 0.0
        %3027 = vmatprep.subr.mxu0 0.0
        %3028 = vmatpush1.xpose.msra.mxu0 0.0
        %3029 = vmatprep.subr.mxu0 0.0
        %3030 = vmatpush1.xpose.msra.mxu0 0.0
        %3031 = vmatprep.subr.mxu0 0.0
        %3032 = vmatpush1.xpose.msra.mxu0 0.0
        %3033 = vmatprep.subr.mxu0 0.0
        %3034 = vmatpush1.xpose.msra.mxu0 0.0
        %3035 = vmatprep.subr.mxu0 0.0
        %3036 = vmatpush1.xpose.msra.mxu0 0.0
        %3037 = vmatprep.subr.mxu0 0.0
        %3038 = vmatpush1.xpose.msra.mxu0 0.0
        %3039 = vmatprep.subr.mxu0 0.0
        %3040 = vmatpush1.xpose.msra.mxu0 0.0
        %3041 = vmatprep.subr.mxu0 0.0
        %3042 = vmatpush1.xpose.msra.mxu0 0.0
        %3043 = vmatprep.subr.mxu0 0.0
        %3044 = vmatpush1.xpose.msra.mxu0 0.0
        %3045 = vmatprep.subr.mxu0 0.0
        %3046 = vmatpush1.xpose.msra.mxu0 0.0
        %3047 = vmatprep.subr.mxu0 0.0
        %3048 = vmatpush1.xpose.msra.mxu0 0.0
        %3049 = vmatprep.subr.mxu0 0.0
        %3050 = vmatpush1.xpose.msra.mxu0 0.0
        %3051 = vmatprep.mubr.f32.mxu0 0.0
        %3052 = vmatmul.mubr.f32.gmra.mrb[0].mxu0 %v2981
        %v3053 = vpop.f32.mrb[0].mxu0
        %v3054 = vadd.f32 0.0, %v3053
        %v3055 = vpop.f32.mrb[0].mxu0
        %3056 = vdwg.mxu0
        %v3057 = vmul.f32 %v3054, 0.35355338
        %v3058 = vadd.f32 %v3057, %v2475
        %v3059 = vsel %vm2561, %v3058, -inf
        %3060 = vmax.xlane.f32.xlu0 %v3059
        %v3061 = vpop.xlane.xlu0 %3060
        %v3062 = vsub.f32 %v3058, %v3061
        %v3063 = vmul.f32 %v3062, 1.442695
        %v3064 = vpow.pop %v3063
        %v3065 = vsel %vm2561, %v3064, 0.0
        %3066 = vadd.xlane.f32.xlu0 %v3065
        %v3067 = vpop.xlane.xlu0 %3066
        %v3068 = vrcp.pop %v3067
        %v3069 = vmul.f32 %v3064, %v3068
        %3070 = vrot.lane.b32.xlu0 %v2467, 80
        %v3071 = vpop.permute.xlu0 %3070
        %3072 = vrot.lane.b32.xlu0 %v2472, 80
        %v3073 = vpop.permute.xlu0 %3072
        %v3076 = vsel %vm2561, %v3069, 0
        %v3078 = vsel %vm2581, %v3073, 0
        %3080 = vmatprep.subr.mxu0 0.0
        %3081 = vmatpush1.msra.mxu0 %v3071
        %3082 = vmatprep.subr.mxu0 0.0
        %3083 = vmatpush1.msra.mxu0 %v3078
        %3084 = vmatprep.subr.mxu0 0.0
        %3085 = vmatpush1.msra.mxu0 0.0
        %3086 = vmatprep.subr.mxu0 0.0
        %3087 = vmatpush1.msra.mxu0 0.0
        %3088 = vmatprep.subr.mxu0 0.0
        %3089 = vmatpush1.msra.mxu0 0.0
        %3090 = vmatprep.subr.mxu0 0.0
        %3091 = vmatpush1.msra.mxu0 0.0
        %3092 = vmatprep.subr.mxu0 0.0
        %3093 = vmatpush1.msra.mxu0 0.0
        %3094 = vmatprep.subr.mxu0 0.0
        %3095 = vmatpush1.msra.mxu0 0.0
        %3096 = vmatprep.subr.mxu0 0.0
        %3097 = vmatpush1.msra.mxu0 0.0
        %3098 = vmatprep.subr.mxu0 0.0
        %3099 = vmatpush1.msra.mxu0 0.0
        %3100 = vmatprep.subr.mxu0 0.0
        %3101 = vmatpush1.msra.mxu0 0.0
        %3102 = vmatprep.subr.mxu0 0.0
        %3103 = vmatpush1.msra.mxu0 0.0
        %3104 = vmatprep.subr.mxu0 0.0
        %3105 = vmatpush1.msra.mxu0 0.0
        %3106 = vmatprep.subr.mxu0 0.0
        %3107 = vmatpush1.msra.mxu0 0.0
        %3108 = vmatprep.subr.mxu0 0.0
        %3109 = vmatpush1.msra.mxu0 0.0
        %3110 = vmatprep.subr.mxu0 0.0
        %3111 = vmatpush1.msra.mxu0 0.0
        %3112 = vmatprep.subr.mxu0 0.0
        %3113 = vmatpush1.msra.mxu0 0.0
        %3114 = vmatprep.subr.mxu0 0.0
        %3115 = vmatpush1.msra.mxu0 0.0
        %3116 = vmatprep.subr.mxu0 0.0
        %3117 = vmatpush1.msra.mxu0 0.0
        %3118 = vmatprep.subr.mxu0 0.0
        %3119 = vmatpush1.msra.mxu0 0.0
        %3120 = vmatprep.subr.mxu0 0.0
        %3121 = vmatpush1.msra.mxu0 0.0
        %3122 = vmatprep.subr.mxu0 0.0
        %3123 = vmatpush1.msra.mxu0 0.0
        %3124 = vmatprep.subr.mxu0 0.0
        %3125 = vmatpush1.msra.mxu0 0.0
        %3126 = vmatprep.subr.mxu0 0.0
        %3127 = vmatpush1.msra.mxu0 0.0
        %3128 = vmatprep.subr.mxu0 0.0
        %3129 = vmatpush1.msra.mxu0 0.0
        %3130 = vmatprep.subr.mxu0 0.0
        %3131 = vmatpush1.msra.mxu0 0.0
        %3132 = vmatprep.subr.mxu0 0.0
        %3133 = vmatpush1.msra.mxu0 0.0
        %3134 = vmatprep.subr.mxu0 0.0
        %3135 = vmatpush1.msra.mxu0 0.0
        %3136 = vmatprep.subr.mxu0 0.0
        %3137 = vmatpush1.msra.mxu0 0.0
        %3138 = vmatprep.subr.mxu0 0.0
        %3139 = vmatpush1.msra.mxu0 0.0
        %3140 = vmatprep.subr.mxu0 0.0
        %3141 = vmatpush1.msra.mxu0 0.0
        %3142 = vmatprep.subr.mxu0 0.0
        %3143 = vmatpush1.msra.mxu0 0.0
        %3144 = vmatprep.mubr.f32.mxu0 0.0
        %3145 = vmatmul.mubr.f32.gmra.mrb[0].mxu0 %v3076
        %v3146 = vpop.f32.mrb[0].mxu0
        %v3147 = vadd.f32 0.0, %v3146
        %v3148 = vpop.f32.mrb[0].mxu0
        %3149 = vdwg.mxu0
        %v3151 = vsel %vm1301, %v3147, 0
        %3153 = vmatprep.subr.mxu0 0.0
        %3154 = vmatpush1.msra.mxu0 %v2478
        %3155 = vmatprep.subr.mxu0 0.0
        %3156 = vmatpush1.msra.mxu0 0.0
        %3157 = vmatprep.subr.mxu0 0.0
        %3158 = vmatpush1.msra.mxu0 0.0
        %3159 = vmatprep.subr.mxu0 0.0
        %3160 = vmatpush1.msra.mxu0 0.0
        %3161 = vmatprep.subr.mxu0 0.0
        %3162 = vmatpush1.msra.mxu0 0.0
        %3163 = vmatprep.subr.mxu0 0.0
        %3164 = vmatpush1.msra.mxu0 0.0
        %3165 = vmatprep.subr.mxu0 0.0
        %3166 = vmatpush1.msra.mxu0 0.0
        %3167 = vmatprep.subr.mxu0 0.0
        %3168 = vmatpush1.msra.mxu0 0.0
        %3169 = vmatprep.subr.mxu0 0.0
        %3170 = vmatpush1.msra.mxu0 0.0
        %3171 = vmatprep.subr.mxu0 0.0
        %3172 = vmatpush1.msra.mxu0 0.0
        %3173 = vmatprep.subr.mxu0 0.0
        %3174 = vmatpush1.msra.mxu0 0.0
        %3175 = vmatprep.subr.mxu0 0.0
        %3176 = vmatpush1.msra.mxu0 0.0
        %3177 = vmatprep.subr.mxu0 0.0
        %3178 = vmatpush1.msra.mxu0 0.0
        %3179 = vmatprep.subr.mxu0 0.0
        %3180 = vmatpush1.msra.mxu0 0.0
        %3181 = vmatprep.subr.mxu0 0.0
        %3182 = vmatpush1.msra.mxu0 0.0
        %3183 = vmatprep.subr.mxu0 0.0
        %3184 = vmatpush1.msra.mxu0 0.0
        %3185 = vmatprep.subr.mxu0 0.0
        %3186 = vmatpush1.msra.mxu0 0.0
        %3187 = vmatprep.subr.mxu0 0.0
        %3188 = vmatpush1.msra.mxu0 0.0
        %3189 = vmatprep.subr.mxu0 0.0
        %3190 = vmatpush1.msra.mxu0 0.0
        %3191 = vmatprep.subr.mxu0 0.0
        %3192 = vmatpush1.msra.mxu0 0.0
        %3193 = vmatprep.subr.mxu0 0.0
        %3194 = vmatpush1.msra.mxu0 0.0
        %3195 = vmatprep.subr.mxu0 0.0
        %3196 = vmatpush1.msra.mxu0 0.0
        %3197 = vmatprep.subr.mxu0 0.0
        %3198 = vmatpush1.msra.mxu0 0.0
        %3199 = vmatprep.subr.mxu0 0.0
        %3200 = vmatpush1.msra.mxu0 0.0
        %3201 = vmatprep.subr.mxu0 0.0
        %3202 = vmatpush1.msra.mxu0 0.0
        %3203 = vmatprep.subr.mxu0 0.0
        %3204 = vmatpush1.msra.mxu0 0.0
        %3205 = vmatprep.subr.mxu0 0.0
        %3206 = vmatpush1.msra.mxu0 0.0
        %3207 = vmatprep.subr.mxu0 0.0
        %3208 = vmatpush1.msra.mxu0 0.0
        %3209 = vmatprep.subr.mxu0 0.0
        %3210 = vmatpush1.msra.mxu0 0.0
        %3211 = vmatprep.subr.mxu0 0.0
        %3212 = vmatpush1.msra.mxu0 0.0
        %3213 = vmatprep.subr.mxu0 0.0
        %3214 = vmatpush1.msra.mxu0 0.0
        %3215 = vmatprep.subr.mxu0 0.0
        %3216 = vmatpush1.msra.mxu0 0.0
        %3217 = vmatprep.mubr.f32.mxu0 0.0
        %3218 = vmatmul.mubr.f32.gmra.mrb[0].mxu0 %v3151
        %v3219 = vpop.f32.mrb[0].mxu0
        %v3220 = vadd.f32 0.0, %v3219
        %v3221 = vpop.f32.mrb[0].mxu0
        %3222 = vdwg.mxu0
        %v3223 = vadd.f32 %v2972, %v3220
        %3224 = vrot.lane.b32.xlu0 %v2380, 104
        %v3225 = vpop.permute.xlu0 %3224
        %3226 = vrot.lane.b32.xlu0 %v2467, 104
        %v3227 = vpop.permute.xlu0 %3226
        %3228 = vrot.lane.b32.xlu0 %v2472, 104
        %v3229 = vpop.permute.xlu0 %3228
        %v3230 = vsel %vm1301, %v3225, 0
        %v3232 = vsel %vm1301, %v3227, 0
        %v3234 = vsel %vm1301, %v3229, 0
        %3236 = vmatprep.subr.mxu0 0.0
        %3237 = vmatpush1.xpose.msra.mxu0 %v3232
        %3238 = vmatprep.subr.mxu0 0.0
        %3239 = vmatpush1.xpose.msra.mxu0 %v3234
        %3240 = vmatprep.subr.mxu0 0.0
        %3241 = vmatpush1.xpose.msra.mxu0 0.0
        %3242 = vmatprep.subr.mxu0 0.0
        %3243 = vmatpush1.xpose.msra.mxu0 0.0
        %3244 = vmatprep.subr.mxu0 0.0
        %3245 = vmatpush1.xpose.msra.mxu0 0.0
        %3246 = vmatprep.subr.mxu0 0.0
        %3247 = vmatpush1.xpose.msra.mxu0 0.0
        %3248 = vmatprep.subr.mxu0 0.0
        %3249 = vmatpush1.xpose.msra.mxu0 0.0
        %3250 = vmatprep.subr.mxu0 0.0
        %3251 = vmatpush1.xpose.msra.mxu0 0.0
        %3252 = vmatprep.subr.mxu0 0.0
        %3253 = vmatpush1.xpose.msra.mxu0 0.0
        %3254 = vmatprep.subr.mxu0 0.0
        %3255 = vmatpush1.xpose.msra.mxu0 0.0
        %3256 = vmatprep.subr.mxu0 0.0
        %3257 = vmatpush1.xpose.msra.mxu0 0.0
        %3258 = vmatprep.subr.mxu0 0.0
        %3259 = vmatpush1.xpose.msra.mxu0 0.0
        %3260 = vmatprep.subr.mxu0 0.0
        %3261 = vmatpush1.xpose.msra.mxu0 0.0
        %3262 = vmatprep.subr.mxu0 0.0
        %3263 = vmatpush1.xpose.msra.mxu0 0.0
        %3264 = vmatprep.subr.mxu0 0.0
        %3265 = vmatpush1.xpose.msra.mxu0 0.0
        %3266 = vmatprep.subr.mxu0 0.0
        %3267 = vmatpush1.xpose.msra.mxu0 0.0
        %3268 = vmatprep.subr.mxu0 0.0
        %3269 = vmatpush1.xpose.msra.mxu0 0.0
        %3270 = vmatprep.subr.mxu0 0.0
        %3271 = vmatpush1.xpose.msra.mxu0 0.0
        %3272 = vmatprep.subr.mxu0 0.0
        %3273 = vmatpush1.xpose.msra.mxu0 0.0
        %3274 = vmatprep.subr.mxu0 0.0
        %3275 = vmatpush1.xpose.msra.mxu0 0.0
        %3276 = vmatprep.subr.mxu0 0.0
        %3277 = vmatpush1.xpose.msra.mxu0 0.0
        %3278 = vmatprep.subr.mxu0 0.0
        %3279 = vmatpush1.xpose.msra.mxu0 0.0
        %3280 = vmatprep.subr.mxu0 0.0
        %3281 = vmatpush1.xpose.msra.mxu0 0.0
        %3282 = vmatprep.subr.mxu0 0.0
        %3283 = vmatpush1.xpose.msra.mxu0 0.0
        %3284 = vmatprep.subr.mxu0 0.0
        %3285 = vmatpush1.xpose.msra.mxu0 0.0
        %3286 = vmatprep.subr.mxu0 0.0
        %3287 = vmatpush1.xpose.msra.mxu0 0.0
        %3288 = vmatprep.subr.mxu0 0.0
        %3289 = vmatpush1.xpose.msra.mxu0 0.0
        %3290 = vmatprep.subr.mxu0 0.0
        %3291 = vmatpush1.xpose.msra.mxu0 0.0
        %3292 = vmatprep.subr.mxu0 0.0
        %3293 = vmatpush1.xpose.msra.mxu0 0.0
        %3294 = vmatprep.subr.mxu0 0.0
        %3295 = vmatpush1.xpose.msra.mxu0 0.0
        %3296 = vmatprep.subr.mxu0 0.0
        %3297 = vmatpush1.xpose.msra.mxu0 0.0
        %3298 = vmatprep.subr.mxu0 0.0
        %3299 = vmatpush1.xpose.msra.mxu0 0.0
        %3300 = vmatprep.mubr.f32.mxu0 0.0
        %3301 = vmatmul.mubr.f32.gmra.mrb[0].mxu0 %v3230
        %v3302 = vpop.f32.mrb[0].mxu0
        %v3303 = vadd.f32 0.0, %v3302
        %v3304 = vpop.f32.mrb[0].mxu0
        %3305 = vdwg.mxu0
        %v3306 = vmul.f32 %v3303, 0.35355338
        %v3307 = vadd.f32 %v3306, %v2475
        %v3308 = vsel %vm2561, %v3307, -inf
        %3309 = vmax.xlane.f32.xlu0 %v3308
        %v3310 = vpop.xlane.xlu0 %3309
        %v3311 = vsub.f32 %v3307, %v3310
        %v3312 = vmul.f32 %v3311, 1.442695
        %v3313 = vpow.pop %v3312
        %v3314 = vsel %vm2561, %v3313, 0.0
        %3315 = vadd.xlane.f32.xlu0 %v3314
        %v3316 = vpop.xlane.xlu0 %3315
        %v3317 = vrcp.pop %v3316
        %v3318 = vmul.f32 %v3313, %v3317
        %3319 = vrot.lane.b32.xlu0 %v2467, 72
        %v3320 = vpop.permute.xlu0 %3319
        %3321 = vrot.lane.b32.xlu0 %v2472, 72
        %v3322 = vpop.permute.xlu0 %3321
        %v3325 = vsel %vm2561, %v3318, 0
        %v3327 = vsel %vm2581, %v3322, 0
        %3329 = vmatprep.subr.mxu0 0.0
        %3330 = vmatpush1.msra.mxu0 %v3320
        %3331 = vmatprep.subr.mxu0 0.0
        %3332 = vmatpush1.msra.mxu0 %v3327
        %3333 = vmatprep.subr.mxu0 0.0
        %3334 = vmatpush1.msra.mxu0 0.0
        %3335 = vmatprep.subr.mxu0 0.0
        %3336 = vmatpush1.msra.mxu0 0.0
        %3337 = vmatprep.subr.mxu0 0.0
        %3338 = vmatpush1.msra.mxu0 0.0
        %3339 = vmatprep.subr.mxu0 0.0
        %3340 = vmatpush1.msra.mxu0 0.0
        %3341 = vmatprep.subr.mxu0 0.0
        %3342 = vmatpush1.msra.mxu0 0.0
        %3343 = vmatprep.subr.mxu0 0.0
        %3344 = vmatpush1.msra.mxu0 0.0
        %3345 = vmatprep.subr.mxu0 0.0
        %3346 = vmatpush1.msra.mxu0 0.0
        %3347 = vmatprep.subr.mxu0 0.0
        %3348 = vmatpush1.msra.mxu0 0.0
        %3349 = vmatprep.subr.mxu0 0.0
        %3350 = vmatpush1.msra.mxu0 0.0
        %3351 = vmatprep.subr.mxu0 0.0
        %3352 = vmatpush1.msra.mxu0 0.0
        %3353 = vmatprep.subr.mxu0 0.0
        %3354 = vmatpush1.msra.mxu0 0.0
        %3355 = vmatprep.subr.mxu0 0.0
        %3356 = vmatpush1.msra.mxu0 0.0
        %3357 = vmatprep.subr.mxu0 0.0
        %3358 = vmatpush1.msra.mxu0 0.0
        %3359 = vmatprep.subr.mxu0 0.0
        %3360 = vmatpush1.msra.mxu0 0.0
        %3361 = vmatprep.subr.mxu0 0.0
        %3362 = vmatpush1.msra.mxu0 0.0
        %3363 = vmatprep.subr.mxu0 0.0
        %3364 = vmatpush1.msra.mxu0 0.0
        %3365 = vmatprep.subr.mxu0 0.0
        %3366 = vmatpush1.msra.mxu0 0.0
        %3367 = vmatprep.subr.mxu0 0.0
        %3368 = vmatpush1.msra.mxu0 0.0
        %3369 = vmatprep.subr.mxu0 0.0
        %3370 = vmatpush1.msra.mxu0 0.0
        %3371 = vmatprep.subr.mxu0 0.0
        %3372 = vmatpush1.msra.mxu0 0.0
        %3373 = vmatprep.subr.mxu0 0.0
        %3374 = vmatpush1.msra.mxu0 0.0
        %3375 = vmatprep.subr.mxu0 0.0
        %3376 = vmatpush1.msra.mxu0 0.0
        %3377 = vmatprep.subr.mxu0 0.0
        %3378 = vmatpush1.msra.mxu0 0.0
        %3379 = vmatprep.subr.mxu0 0.0
        %3380 = vmatpush1.msra.mxu0 0.0
        %3381 = vmatprep.subr.mxu0 0.0
        %3382 = vmatpush1.msra.mxu0 0.0
        %3383 = vmatprep.subr.mxu0 0.0
        %3384 = vmatpush1.msra.mxu0 0.0
        %3385 = vmatprep.subr.mxu0 0.0
        %3386 = vmatpush1.msra.mxu0 0.0
        %3387 = vmatprep.subr.mxu0 0.0
        %3388 = vmatpush1.msra.mxu0 0.0
        %3389 = vmatprep.subr.mxu0 0.0
        %3390 = vmatpush1.msra.mxu0 0.0
        %3391 = vmatprep.subr.mxu0 0.0
        %3392 = vmatpush1.msra.mxu0 0.0
        %3393 = vmatprep.mubr.f32.mxu0 0.0
        %3394 = vmatmul.mubr.f32.gmra.mrb[0].mxu0 %v3325
        %v3395 = vpop.f32.mrb[0].mxu0
        %v3396 = vadd.f32 0.0, %v3395
        %v3397 = vpop.f32.mrb[0].mxu0
        %3398 = vdwg.mxu0
        %v3400 = vsel %vm1301, %v3396, 0
        %3402 = vmatprep.subr.mxu0 0.0
        %3403 = vmatpush1.msra.mxu0 %v2479
        %3404 = vmatprep.subr.mxu0 0.0
        %3405 = vmatpush1.msra.mxu0 0.0
        %3406 = vmatprep.subr.mxu0 0.0
        %3407 = vmatpush1.msra.mxu0 0.0
        %3408 = vmatprep.subr.mxu0 0.0
        %3409 = vmatpush1.msra.mxu0 0.0
        %3410 = vmatprep.subr.mxu0 0.0
        %3411 = vmatpush1.msra.mxu0 0.0
        %3412 = vmatprep.subr.mxu0 0.0
        %3413 = vmatpush1.msra.mxu0 0.0
        %3414 = vmatprep.subr.mxu0 0.0
        %3415 = vmatpush1.msra.mxu0 0.0
        %3416 = vmatprep.subr.mxu0 0.0
        %3417 = vmatpush1.msra.mxu0 0.0
        %3418 = vmatprep.subr.mxu0 0.0
        %3419 = vmatpush1.msra.mxu0 0.0
        %3420 = vmatprep.subr.mxu0 0.0
        %3421 = vmatpush1.msra.mxu0 0.0
        %3422 = vmatprep.subr.mxu0 0.0
        %3423 = vmatpush1.msra.mxu0 0.0
        %3424 = vmatprep.subr.mxu0 0.0
        %3425 = vmatpush1.msra.mxu0 0.0
        %3426 = vmatprep.subr.mxu0 0.0
        %3427 = vmatpush1.msra.mxu0 0.0
        %3428 = vmatprep.subr.mxu0 0.0
        %3429 = vmatpush1.msra.mxu0 0.0
        %3430 = vmatprep.subr.mxu0 0.0
        %3431 = vmatpush1.msra.mxu0 0.0
        %3432 = vmatprep.subr.mxu0 0.0
        %3433 = vmatpush1.msra.mxu0 0.0
        %3434 = vmatprep.subr.mxu0 0.0
        %3435 = vmatpush1.msra.mxu0 0.0
        %3436 = vmatprep.subr.mxu0 0.0
        %3437 = vmatpush1.msra.mxu0 0.0
        %3438 = vmatprep.subr.mxu0 0.0
        %3439 = vmatpush1.msra.mxu0 0.0
        %3440 = vmatprep.subr.mxu0 0.0
        %3441 = vmatpush1.msra.mxu0 0.0
        %3442 = vmatprep.subr.mxu0 0.0
        %3443 = vmatpush1.msra.mxu0 0.0
        %3444 = vmatprep.subr.mxu0 0.0
        %3445 = vmatpush1.msra.mxu0 0.0
        %3446 = vmatprep.subr.mxu0 0.0
        %3447 = vmatpush1.msra.mxu0 0.0
        %3448 = vmatprep.subr.mxu0 0.0
        %3449 = vmatpush1.msra.mxu0 0.0
        %3450 = vmatprep.subr.mxu0 0.0
        %3451 = vmatpush1.msra.mxu0 0.0
        %3452 = vmatprep.subr.mxu0 0.0
        %3453 = vmatpush1.msra.mxu0 0.0
        %3454 = vmatprep.subr.mxu0 0.0
        %3455 = vmatpush1.msra.mxu0 0.0
        %3456 = vmatprep.subr.mxu0 0.0
        %3457 = vmatpush1.msra.mxu0 0.0
        %3458 = vmatprep.subr.mxu0 0.0
        %3459 = vmatpush1.msra.mxu0 0.0
        %3460 = vmatprep.subr.mxu0 0.0
        %3461 = vmatpush1.msra.mxu0 0.0
        %3462 = vmatprep.subr.mxu0 0.0
        %3463 = vmatpush1.msra.mxu0 0.0
        %3464 = vmatprep.subr.mxu0 0.0
        %3465 = vmatpush1.msra.mxu0 0.0
        %3466 = vmatprep.mubr.f32.mxu0 0.0
        %3467 = vmatmul.mubr.f32.gmra.mrb[0].mxu0 %v3400
        %v3468 = vpop.f32.mrb[0].mxu0
        %v3469 = vadd.f32 0.0, %v3468
        %v3470 = vpop.f32.mrb[0].mxu0
        %3471 = vdwg.mxu0
        %v3472 = vadd.f32 %v3223, %v3469
        %v3473 = vld [vmem:[%s1168] sm:$0x1]
        %v3475 = vlaneseq
        %v3476 = vshrl.u32 %v3475, 7
        %v3477 = vsub.s32 0, %v3476
        %v3478 = vrot.slane %v3473, %v3477
        %v3480 = vadd.f32 %v3472, %v3478
        %v3481 = vadd.f32 %v2298, %v3480
        %v3482 = vld [vmem:[%s1188] sm:$0x1]
        %v3483 = vld [vmem:[%s1191] sm:$0x1]
        %v3484 = vsel %vm1219, %v3481, 0.0
        %3485 = vadd.xlane.f32.xlu0 %v3484
        %v3486 = vpop.xlane.xlu0 %3485
        %v3487 = vmul.f32 %v3486, %v2274
        %v3488 = vsub.f32 %v3481, %v3487
        %v3489 = vmul.f32 %v3488, %v3488
        %v3490 = vsel %vm1219, %v3489, 0.0
        %3491 = vadd.xlane.f32.xlu0 %v3490
        %v3492 = vpop.xlane.xlu0 %3491
        %v3493 = vmul.f32 %v3492, %v2274
        %v3494 = vadd.f32 %v3493, 1e-05
        %v3495 = vrsqrt.pop %v3494
        %v3496 = vmul.f32 %v3488, %v3495
        %v3498 = vlaneseq
        %v3499 = vshrl.u32 %v3498, 7
        %v3500 = vsub.s32 0, %v3499
        %v3501 = vrot.slane %v3482, %v3500
        %v3503 = vmul.f32 %v3496, %v3501
        %v3505 = vlaneseq
        %v3506 = vshrl.u32 %v3505, 7
        %v3507 = vsub.s32 0, %v3506
        %v3508 = vrot.slane %v3483, %v3507
        %v3510 = vadd.f32 %v3503, %v3508
        %v3511 = vld [vmem:[%s983] sm:$0xff]
        %v3512 = vld [vmem:[%s983 + $0x8] sm:$0xff]
        %v3513 = vld [vmem:[%s983 + $0x10] sm:$0xff]
        %v3514 = vld [vmem:[%s983 + $0x18] sm:$0xff]
        %v3515 = vld [vmem:[%s1171] sm:$0x1]
        %v3517 = vlaneseq
        %v3518 = vshrl.u32 %v3517, 7
        %v3519 = vsub.s32 0, %v3518
        %v3520 = vrot.slane %v3515, %v3519
        %v3523 = vsel %vm1219, %v3510, 0
        %3525 = vmatprep.subr.mxu0 0.0
        %3526 = vmatpush1.msra.mxu0 %v3511
        %3527 = vmatprep.subr.mxu0 0.0
        %3528 = vmatpush1.msra.mxu0 %v3512
        %3529 = vmatprep.subr.mxu0 0.0
        %3530 = vmatpush1.msra.mxu0 %v3513
        %3531 = vmatprep.subr.mxu0 0.0
        %3532 = vmatpush1.msra.mxu0 %v3514
        %3533 = vmatprep.subr.mxu0 0.0
        %3534 = vmatpush1.msra.mxu0 0.0
        %3535 = vmatprep.subr.mxu0 0.0
        %3536 = vmatpush1.msra.mxu0 0.0
        %3537 = vmatprep.subr.mxu0 0.0
        %3538 = vmatpush1.msra.mxu0 0.0
        %3539 = vmatprep.subr.mxu0 0.0
        %3540 = vmatpush1.msra.mxu0 0.0
        %3541 = vmatprep.subr.mxu0 0.0
        %3542 = vmatpush1.msra.mxu0 0.0
        %3543 = vmatprep.subr.mxu0 0.0
        %3544 = vmatpush1.msra.mxu0 0.0
        %3545 = vmatprep.subr.mxu0 0.0
        %3546 = vmatpush1.msra.mxu0 0.0
        %3547 = vmatprep.subr.mxu0 0.0
        %3548 = vmatpush1.msra.mxu0 0.0
        %3549 = vmatprep.subr.mxu0 0.0
        %3550 = vmatpush1.msra.mxu0 0.0
        %3551 = vmatprep.subr.mxu0 0.0
        %3552 = vmatpush1.msra.mxu0 0.0
        %3553 = vmatprep.subr.mxu0 0.0
        %3554 = vmatpush1.msra.mxu0 0.0
        %3555 = vmatprep.subr.mxu0 0.0
        %3556 = vmatpush1.msra.mxu0 0.0
        %3557 = vmatprep.subr.mxu0 0.0
        %3558 = vmatpush1.msra.mxu0 0.0
        %3559 = vmatprep.subr.mxu0 0.0
        %3560 = vmatpush1.msra.mxu0 0.0
        %3561 = vmatprep.subr.mxu0 0.0
        %3562 = vmatpush1.msra.mxu0 0.0
        %3563 = vmatprep.subr.mxu0 0.0
        %3564 = vmatpush1.msra.mxu0 0.0
        %3565 = vmatprep.subr.mxu0 0.0
        %3566 = vmatpush1.msra.mxu0 0.0
        %3567 = vmatprep.subr.mxu0 0.0
        %3568 = vmatpush1.msra.mxu0 0.0
        %3569 = vmatprep.subr.mxu0 0.0
        %3570 = vmatpush1.msra.mxu0 0.0
        %3571 = vmatprep.subr.mxu0 0.0
        %3572 = vmatpush1.msra.mxu0 0.0
        %3573 = vmatprep.subr.mxu0 0.0
        %3574 = vmatpush1.msra.mxu0 0.0
        %3575 = vmatprep.subr.mxu0 0.0
        %3576 = vmatpush1.msra.mxu0 0.0
        %3577 = vmatprep.subr.mxu0 0.0
        %3578 = vmatpush1.msra.mxu0 0.0
        %3579 = vmatprep.subr.mxu0 0.0
        %3580 = vmatpush1.msra.mxu0 0.0
        %3581 = vmatprep.subr.mxu0 0.0
        %3582 = vmatpush1.msra.mxu0 0.0
        %3583 = vmatprep.subr.mxu0 0.0
        %3584 = vmatpush1.msra.mxu0 0.0
        %3585 = vmatprep.subr.mxu0 0.0
        %3586 = vmatpush1.msra.mxu0 0.0
        %3587 = vmatprep.subr.mxu0 0.0
        %3588 = vmatpush1.msra.mxu0 0.0
        %3589 = vmatprep.mubr.f32.mxu0 0.0
        %3590 = vmatmul.mubr.f32.gmra.mrb[0].mxu0 %v3523
        %v3591 = vpop.f32.mrb[0].mxu0
        %v3592 = vadd.f32 %v3520, %v3591
        %v3593 = vpop.f32.mrb[0].mxu0
        %3594 = vdwg.mxu0
        %v3595 = vmax.f32 %v3592, 0.0
        %v3596 = vld [vmem:[%s1176] sm:$0xff]
        %v3597 = vld [vmem:[%s1176 + $0x8] sm:$0xff]
        %v3598 = vld [vmem:[%s1176 + $0x10] sm:$0xff]
        %v3599 = vld [vmem:[%s1176 + $0x18] sm:$0xff]
        %v3600 = vld [vmem:[%s1176 + $0x20] sm:$0xff]
        %v3601 = vld [vmem:[%s1176 + $0x28] sm:$0xff]
        %v3602 = vld [vmem:[%s1176 + $0x30] sm:$0xff]
        %v3603 = vld [vmem:[%s1176 + $0x38] sm:$0xff]
        %v3604 = vld [vmem:[%s1179] sm:$0x1]
        %v3606 = vlaneseq
        %v3607 = vshrl.u32 %v3606, 7
        %v3608 = vsub.s32 0, %v3607
        %v3609 = vrot.slane %v3604, %v3608
        %vm3611 = vcmask 523264
        %v3613 = vsel %vm3611, %v3595, 0
        %3615 = vmatprep.subr.mxu0 0.0
        %3616 = vmatpush1.msra.mxu0 %v3596
        %3617 = vmatprep.subr.mxu0 0.0
        %3618 = vmatpush1.msra.mxu0 %v3597
        %3619 = vmatprep.subr.mxu0 0.0
        %3620 = vmatpush1.msra.mxu0 %v3598
        %3621 = vmatprep.subr.mxu0 0.0
        %3622 = vmatpush1.msra.mxu0 %v3599
        %3623 = vmatprep.subr.mxu0 0.0
        %3624 = vmatpush1.msra.mxu0 %v3600
        %3625 = vmatprep.subr.mxu0 0.0
        %3626 = vmatpush1.msra.mxu0 %v3601
        %3627 = vmatprep.subr.mxu0 0.0
        %3628 = vmatpush1.msra.mxu0 %v3602
        %3629 = vmatprep.subr.mxu0 0.0
        %3630 = vmatpush1.msra.mxu0 %v3603
        %3631 = vmatprep.subr.mxu0 0.0
        %3632 = vmatpush1.msra.mxu0 0.0
        %3633 = vmatprep.subr.mxu0 0.0
        %3634 = vmatpush1.msra.mxu0 0.0
        %3635 = vmatprep.subr.mxu0 0.0
        %3636 = vmatpush1.msra.mxu0 0.0
        %3637 = vmatprep.subr.mxu0 0.0
        %3638 = vmatpush1.msra.mxu0 0.0
        %3639 = vmatprep.subr.mxu0 0.0
        %3640 = vmatpush1.msra.mxu0 0.0
        %3641 = vmatprep.subr.mxu0 0.0
        %3642 = vmatpush1.msra.mxu0 0.0
        %3643 = vmatprep.subr.mxu0 0.0
        %3644 = vmatpush1.msra.mxu0 0.0
        %3645 = vmatprep.subr.mxu0 0.0
        %3646 = vmatpush1.msra.mxu0 0.0
        %3647 = vmatprep.subr.mxu0 0.0
        %3648 = vmatpush1.msra.mxu0 0.0
        %3649 = vmatprep.subr.mxu0 0.0
        %3650 = vmatpush1.msra.mxu0 0.0
        %3651 = vmatprep.subr.mxu0 0.0
        %3652 = vmatpush1.msra.mxu0 0.0
        %3653 = vmatprep.subr.mxu0 0.0
        %3654 = vmatpush1.msra.mxu0 0.0
        %3655 = vmatprep.subr.mxu0 0.0
        %3656 = vmatpush1.msra.mxu0 0.0
        %3657 = vmatprep.subr.mxu0 0.0
        %3658 = vmatpush1.msra.mxu0 0.0
        %3659 = vmatprep.subr.mxu0 0.0
        %3660 = vmatpush1.msra.mxu0 0.0
        %3661 = vmatprep.subr.mxu0 0.0
        %3662 = vmatpush1.msra.mxu0 0.0
        %3663 = vmatprep.subr.mxu0 0.0
        %3664 = vmatpush1.msra.mxu0 0.0
        %3665 = vmatprep.subr.mxu0 0.0
        %3666 = vmatpush1.msra.mxu0 0.0
        %3667 = vmatprep.subr.mxu0 0.0
        %3668 = vmatpush1.msra.mxu0 0.0
        %3669 = vmatprep.subr.mxu0 0.0
        %3670 = vmatpush1.msra.mxu0 0.0
        %3671 = vmatprep.subr.mxu0 0.0
        %3672 = vmatpush1.msra.mxu0 0.0
        %3673 = vmatprep.subr.mxu0 0.0
        %3674 = vmatpush1.msra.mxu0 0.0
        %3675 = vmatprep.subr.mxu0 0.0
        %3676 = vmatpush1.msra.mxu0 0.0
        %3677 = vmatprep.subr.mxu0 0.0
        %3678 = vmatpush1.msra.mxu0 0.0
        %3679 = vmatprep.mubr.f32.mxu0 0.0
        %3680 = vmatmul.mubr.f32.gmra.mrb[0].mxu0 %v3613
        %v3681 = vpop.f32.mrb[0].mxu0
        %v3682 = vadd.f32 %v3609, %v3681
        %v3683 = vpop.f32.mrb[0].mxu0
        %3684 = vdwg.mxu0
        %v3685 = vadd.f32 %v3510, %v3682
        %v3686 = vld [vmem:[%s1194] sm:$0x1]
        %v3687 = vld [vmem:[%s1197] sm:$0x1]
        %v3688 = vsel %vm1219, %v3685, 0.0
        %3689 = vadd.xlane.f32.xlu0 %v3688
        %v3690 = vpop.xlane.xlu0 %3689
        %v3691 = vmul.f32 %v3690, %v2274
        %v3692 = vsub.f32 %v3685, %v3691
        %v3693 = vmul.f32 %v3692, %v3692
        %v3694 = vsel %vm1219, %v3693, 0.0
        %3695 = vadd.xlane.f32.xlu0 %v3694
        %v3696 = vpop.xlane.xlu0 %3695
        %v3697 = vmul.f32 %v3696, %v2274
        %v3698 = vadd.f32 %v3697, 1e-05
        %v3699 = vrsqrt.pop %v3698
        %v3700 = vmul.f32 %v3692, %v3699
        %v3702 = vlaneseq
        %v3703 = vshrl.u32 %v3702, 7
        %v3704 = vsub.s32 0, %v3703
        %v3705 = vrot.slane %v3686, %v3704
        %v3707 = vmul.f32 %v3700, %v3705
        %v3709 = vlaneseq
        %v3710 = vshrl.u32 %v3709, 7
        %v3711 = vsub.s32 0, %v3710
        %v3712 = vrot.slane %v3687, %v3711
        %v3714 = vadd.f32 %v3707, %v3712
        %3715 = vst.msk [vmem:[#allocation2] sm:$0xff] %vm1219, %v3714
        %p3716 = scmp.eq.s32.totalorder %s51, 1
        // Predicated region
        $region141: #{tpu_custom_call.1} parent=123 // pred_check
          %p3717 = pneg %p3716
        $region142: #{tpu_custom_call.1} parent=123 // pred_check_branch
          %3719 = sbr.rel (%p3717) target = $region144
        $region143: #{tpu_custom_call.1} parent=123 // pred_region
          %v3720 = vld [vmem:[%s24] sm:$0x1]
          %v3721 = vld [vmem:[%s25] sm:$0x1]
          %v3722 = vsel %vm1219, %v3714, 0.0
          %3723 = vadd.xlane.f32.xlu0 %v3722
          %v3724 = vpop.xlane.xlu0 %3723
          %v3725 = vmul.f32 %v3724, %v2274
          %v3726 = vsub.f32 %v3714, %v3725
          %v3727 = vmul.f32 %v3726, %v3726
          %v3728 = vsel %vm1219, %v3727, 0.0
          %3729 = vadd.xlane.f32.xlu0 %v3728
          %v3730 = vpop.xlane.xlu0 %3729
          %v3731 = vmul.f32 %v3730, %v2274
          %v3732 = vadd.f32 %v3731, 1e-05
          %v3733 = vrsqrt.pop %v3732
          %v3734 = vmul.f32 %v3726, %v3733
          %v3736 = vlaneseq
          %v3737 = vshrl.u32 %v3736, 7
          %v3738 = vsub.s32 0, %v3737
          %v3739 = vrot.slane %v3720, %v3738
          %v3741 = vmul.f32 %v3734, %v3739
          %v3743 = vlaneseq
          %v3744 = vshrl.u32 %v3743, 7
          %v3745 = vsub.s32 0, %v3744
          %v3746 = vrot.slane %v3721, %v3745
          %v3748 = vadd.f32 %v3741, %v3746
          %3749 = vst.msk [vmem:[%s1129] sm:$0xff] %vm1219, %v3748
        $region144: #{tpu_custom_call.1} parent=123 // pred_fallthru
          _
        %s3750 = sand.u32 %s722, 1
        %s3751 = scalar_lea.sflag [#allocation5], %s3750
        %s3752 = sand.u32 %s722, 1
        %s3753 = smul.addr %s3752, 8
        %s3754 = scalar_lea.vmem [#allocation9], %s3753
        // Predicated region
        $region145: #{tpu_custom_call.1} parent=123 // pred_check
          %p3755 = pneg %p732
        $region146: #{tpu_custom_call.1} parent=123 // pred_check_branch
          %3757 = sbr.rel (%p3755) target = $region148
        $region147: #{tpu_custom_call.1} parent=123 // pred_region
          %s3759 = ssub.s32 128, 128
          %3760 = vsyncadd %s3751, %s3759
          %s3761 = smul.addr %s50, 128
          %s3762 = scalar_lea.hbm %s26, %s3761
          %s3764 = sshll.u32 %s3754, 4
          %s3765 = int_to_ptr.vmem [resolvable:$true] %s3764
          %3767 = dma.vmem_to_hbm [thread:$0]  %s3765, 128, %s3762, %s3751
        $region148: #{tpu_custom_call.1} parent=123 // pred_fallthru
          _
      $region124: #{tpu_custom_call.1} parent=5 // pred_fallthru
        _
      %p3768 = scmp.le.s32.totalorder 2, %s41
      // Predicated region
      $region149: #{tpu_custom_call.1} parent=5 // pred_check
        %p3769 = pneg %p3768
      $region150: #{tpu_custom_call.1} parent=5 // pred_check_branch
        %3771 = sbr.rel (%p3769) target = $region152
      $region151: #{tpu_custom_call.1} parent=5 // pred_region
        %s3772 = ssub.s32 %s41, 2
        // Predicated region
        $region153: #{tpu_custom_call.1} parent=151 // pred_check
          %p3773 = pneg %p738
        $region154: #{tpu_custom_call.1} parent=151 // pred_check_branch
          %3775 = sbr.rel (%p3773) target = $region156
        $region155: #{tpu_custom_call.1} parent=151 // pred_region
          %s3776 = sand.u32 %s723, 1
          %s3777 = scalar_lea.sflag [#allocation5], %s3776
          %s3778 = sand.u32 %s723, 1
          %s3779 = smul.addr %s3778, 8
          %s3780 = scalar_lea.vmem [#allocation9], %s3779
          %3781 = dma.done %s3777, 128
        $region156: #{tpu_custom_call.1} parent=151 // pred_fallthru
          _
      $region152: #{tpu_custom_call.1} parent=5 // pred_fallthru
        _
    $region6: #{tpu_custom_call.1} parent=1 // loop_footer
      %s45 = sadd.s32 1, %s41
    $region7: #{tpu_custom_call.1} parent=1 // loop_footer_branch
      %40 = sbr.rel target = $region3
    $region8: #{tpu_custom_call.1} parent=1 // loop_exit
      _
    %3782 = vsyncpa [#allocation4], 1
    %s3783 = scalar_lea.sflag [#allocation4], 1
    %3784 = vsyncpa %s3783, 1
    %3785 = vsyncpa [#allocation7], 1
    %s3786 = scalar_lea.sflag [#allocation7], 1
    %3787 = vsyncpa %s3786, 1
    %3788 = vsyncpa [#allocation5], 1
    %s3789 = scalar_lea.sflag [#allocation5], 1
    %3790 = vsyncpa %s3789, 1

</llo_original>
